<compile_context>
chip_gen: v5e
topology: v5e:2x2
jax: 0.10.0
libtpu: 0.0.40
codegen_flags: <defaults>
</compile_context>

<pallas_src>
import functools
import math

import jax
import jax.numpy as jnp
from jax.experimental import pallas as pl
from jax.experimental.pallas import tpu as pltpu

MATMUL_DTYPE = jnp.bfloat16          # MXU operand dtype; accumulation stays f32
_INV_SQRT2 = 1.0 / math.sqrt(2.0)

_VMEM_BUDGET = 40 * 1024 * 1024      # pipelined-buffer budget (fits v7x's 64 MiB)
_VMEM_HEADROOM = 8 * 1024 * 1024     # compiler scratch / semaphores / slack
_VMEM_LIMIT_CAP = 56 * 1024 * 1024   # never request more scoped VMEM than this


# ----------------------------------------------------------------------------
# Resource policy helpers
# ----------------------------------------------------------------------------

def _probe_kernel(x_ref, o_ref):
    o_ref[...] = x_ref[...]


@functools.lru_cache(maxsize=None)
def _single_buffer_ok():
    """True iff pl.BlockSpec(..., pipeline_mode=pl.Buffered(1)) lowers & runs here."""
    try:
        spec = pl.BlockSpec((8, 128), lambda i: (0, 0), pipeline_mode=pl.Buffered(1))
        fn = pl.pallas_call(
            _probe_kernel,
            out_shape=jax.ShapeDtypeStruct((8, 128), jnp.float32),
            grid=(1,),
            in_specs=[spec],
            out_specs=pl.BlockSpec((8, 128), lambda i: (0, 0)),
        )
        jax.block_until_ready(fn(jnp.zeros((8, 128), jnp.float32)))
        return True
    except Exception:  # any failure -> fall back to default double buffering
        return False


def _const_spec(shape):
    """BlockSpec for a grid-invariant operand (weights / biases / LN params)."""
    ndim = len(shape)
    index_map = lambda *_: (0,) * ndim
    if _single_buffer_ok():
        return pl.BlockSpec(shape, index_map, pipeline_mode=pl.Buffered(1))
    return pl.BlockSpec(shape, index_map)


def _choose_tile_and_vmem(n, per_row_bytes, fixed_bytes, *, target=512, min_grid=4):
    """Pick a row tile that is:
       * <= `target` rows (512-row tiles measured ~85% of HBM roofline),
       * sublane-aligned (multiple of 8) unless the array is tiny,
       * large enough grid (>= min_grid steps) so a 2-TC part can shard the
         'parallel' row axis,
       * small enough that fixed (weight) VMEM + tile-proportional buffers fit
         the budget (v7x has only 64 MiB physical VMEM).
       Returns (tile, vmem_limit_bytes)."""
    if n <= 8:
        t = n
    else:
        t = min(target, n)
        if n >= 8 * min_grid:
            t = min(t, pl.cdiv(n, min_grid))
        t = max(8, (t // 8) * 8)
        while t > 8 and fixed_bytes + t * per_row_bytes > _VMEM_BUDGET:
            t = max(8, ((t // 2) // 8) * 8)
    limit = int(min(_VMEM_LIMIT_CAP, fixed_bytes + t * per_row_bytes + _VMEM_HEADROOM))
    return t, limit


def _softshrink(v, lam):
    # 2 VPU ops instead of nested selects.
    return v - jnp.clip(v, -lam, lam)


# ----------------------------------------------------------------------------
# Pallas kernels
# ----------------------------------------------------------------------------

def layernorm_kernel(x_ref, g_ref, b_ref, o_ref, *, eps):
    x = x_ref[...]                                            # (tile, C) f32
    mu = jnp.mean(x, axis=-1, keepdims=True)
    var = jnp.mean((x - mu) ** 2, axis=-1, keepdims=True)
    o_ref[...] = (x - mu) * jax.lax.rsqrt(var + eps) * g_ref[...] + b_ref[...]


def afno_spectral_kernel(zr_ref, zi_ref, w1r_ref, w1i_ref, b1_ref, w2_ref, b2_ref,
                         or_ref, oi_ref, *, lam, c):
    # Complex per-block MLP packed as real matmuls with all blocks block-diagonal:
    #   h = [o1r | o1i] = relu( zr @ [W1r|W1i] + zi @ [-W1i|W1r] + [b1r|b1i] )
    #   y = [o2r | o2i] = h @ [[W2r, W2i], [-W2i, W2r]] + [b2r|b2i]
    zr = zr_ref[...]                                          # (tile, C) bf16
    zi = zi_ref[...]
    h = (jnp.dot(zr, w1r_ref[...], preferred_element_type=jnp.float32)
         + jnp.dot(zi, w1i_ref[...], preferred_element_type=jnp.float32)
         + b1_ref[...])
    h = jnp.maximum(h, 0.0)                                   # ReLU
    y = (jnp.dot(h.astype(MATMUL_DTYPE), w2_ref[...],
                 preferred_element_type=jnp.float32) + b2_ref[...])
    y = _softshrink(y, lam)
    or_ref[...] = y[:, :c]
    oi_ref[...] = y[:, c:]


def combine_mlp_kernel(f_ref, n1_ref, res_ref, g1_ref, g2_ref, lg_ref, lb_ref,
                       w1_ref, b1_ref, w2_ref, b2_ref, o_ref, *, eps):
    # x1 = gamma1 * (filter_out + norm1_out) + residual   (AFNO2D res_mult=1 adds
    # its own input back; that "+ n1" is folded here so x1 never hits HBM.)
    x1 = g1_ref[...] * (f_ref[...] + n1_ref[...]) + res_ref[...]
    # norm2: per-pixel LayerNorm over channels
    mu = jnp.mean(x1, axis=-1, keepdims=True)
    var = jnp.mean((x1 - mu) ** 2, axis=-1, keepdims=True)
    n2 = (x1 - mu) * jax.lax.rsqrt(var + eps) * lg_ref[...] + lb_ref[...]
    # 1x1-conv MLP == per-pixel linear
    h = jnp.dot(n2.astype(MATMUL_DTYPE), w1_ref[...],
                preferred_element_type=jnp.float32) + b1_ref[...]
    # Exact (erf) GELU == torch.nn.GELU().  TODO(synk): if bundle shows this kernel
    # VALU-bound, switch to tanh-approx GELU (EUP slot) at a small numerics delta.
    h = 0.5 * h * (1.0 + jax.lax.erf(h * _INV_SQRT2))
    y = jnp.dot(h.astype(MATMUL_DTYPE), w2_ref[...],
                preferred_element_type=jnp.float32) + b2_ref[...]
    o_ref[...] = g2_ref[...] * y + x1


# ----------------------------------------------------------------------------
# pallas_call wrappers (explicit tile + VMEM policy per kernel)
# ----------------------------------------------------------------------------

def layernorm(x, g, b, *, eps=1e-5):
    n, c = x.shape
    per_row = c * 4 * 2 + c * 4 * 2 + c * 4 * 2        # in x2, out x2, temps
    fixed = 2 * c * 4 * 2
    tile, vmem_limit = _choose_tile_and_vmem(n, per_row, fixed)
    row = pl.BlockSpec((tile, c), lambda i: (i, 0))
    vec = _const_spec((1, c))
    return pl.pallas_call(
        functools.partial(layernorm_kernel, eps=eps),
        out_shape=jax.ShapeDtypeStruct((n, c), jnp.float32),
        grid=(pl.cdiv(n, tile),),
        in_specs=[row, vec, vec],
        out_specs=row,
        compiler_params=pltpu.CompilerParams(
            dimension_semantics=("parallel",), vmem_limit_bytes=vmem_limit),
    )(x, g, b)


def afno_spectral_mix(zr, zi, w1_zr, w1_zi, b1, w2, b2, *, lam):
    n, c = zr.shape
    h2 = w1_zr.shape[1]                                  # 2 * block_hidden * nb
    wbuf = 1 if _single_buffer_ok() else 2
    per_row = (2 * c * 2 * 2                             # zr, zi bf16 tiles x2 bufs
               + 2 * c * 4 * 2                           # out_r, out_i f32 x2 bufs
               + h2 * (4 + 2)                            # h f32 + bf16 recast
               + 2 * c * 4 * 2)                          # y f32 + real/imag splits
    fixed = ((w1_zr.size + w1_zi.size + w2.size) * 2
             + (b1.size + b2.size) * 4) * wbuf
    tile, vmem_limit = _choose_tile_and_vmem(n, per_row, fixed)
    row = pl.BlockSpec((tile, c), lambda i: (i, 0))
    return pl.pallas_call(
        functools.partial(afno_spectral_kernel, lam=lam, c=c),
        out_shape=(jax.ShapeDtypeStruct((n, c), jnp.float32),
                   jax.ShapeDtypeStruct((n, c), jnp.float32)),
        grid=(pl.cdiv(n, tile),),
        in_specs=[row, row,
                  _const_spec((c, h2)), _const_spec((c, h2)), _const_spec((1, h2)),
                  _const_spec((h2, 2 * c)), _const_spec((1, 2 * c))],
        out_specs=(row, row),
        compiler_params=pltpu.CompilerParams(
            dimension_semantics=("parallel",), vmem_limit_bytes=vmem_limit),
    )(zr, zi, w1_zr, w1_zi, b1, w2, b2)


def combine_ln_mlp(f, n1, res, g1, g2, lg, lb, w1, b1, w2, b2, *, eps=1e-5):
    n, c = f.shape
    hid = w1.shape[1]
    wbuf = 1 if _single_buffer_ok() else 2
    per_row = (3 * c * 4 * 2                             # f, n1, res f32 x2 bufs
               + c * 4 * 2                               # output x2 bufs
               + 3 * c * 4 + c * 2                       # x1, n2, y temps + n2 bf16
               + hid * (4 + 2))                          # h f32 + bf16 recast
    fixed = ((w1.size + w2.size) * 2
             + (b1.size + b2.size + g1.size + g2.size + lg.size + lb.size) * 4) * wbuf
    tile, vmem_limit = _choose_tile_and_vmem(n, per_row, fixed)
    row = pl.BlockSpec((tile, c), lambda i: (i, 0))
    vec_c = _const_spec((1, c))
    vec_h = _const_spec((1, hid))
    return pl.pallas_call(
        functools.partial(combine_mlp_kernel, eps=eps),
        out_shape=jax.ShapeDtypeStruct((n, c), jnp.float32),
        grid=(pl.cdiv(n, tile),),
        in_specs=[row, row, row, vec_c, vec_c, vec_c, vec_c,
                  _const_spec((c, hid)), vec_h,
                  _const_spec((hid, c)), vec_c],
        out_specs=row,
        compiler_params=pltpu.CompilerParams(
            dimension_semantics=("parallel",), vmem_limit_bytes=vmem_limit),
    )(f, n1, res, g1, g2, lg, lb, w1, b1, w2, b2)


# ----------------------------------------------------------------------------
# One-time parameter preparation (hoisted out of the forward pass)
# ----------------------------------------------------------------------------

def _block_diag(w):
    """(nb, a, b) per-block weights -> (nb*a, nb*b) block-diagonal matrix."""
    nb, a, b = w.shape
    eye = jnp.eye(nb, dtype=w.dtype)
    return (eye[:, None, :, None] * w[:, :, None, :]).reshape(nb * a, nb * b)


def prepare_params(params):
    """Pack the complex per-block spectral weights into block-diagonal real
    matrices with a global [Re | Im] column/row layout and pre-cast all MXU
    operands to bf16.  Run once; the forward pass only consumes the results."""
    w1r = _block_diag(params["w1r"])                      # (C,  Ch)
    w1i = _block_diag(params["w1i"])
    w2r = _block_diag(params["w2r"])                      # (Ch, C)
    w2i = _block_diag(params["w2i"])
    sp_w1_zr = jnp.concatenate([w1r, w1i], axis=1).astype(MATMUL_DTYPE)    # acts on Re(z)
    sp_w1_zi = jnp.concatenate([-w1i, w1r], axis=1).astype(MATMUL_DTYPE)   # acts on Im(z)
    sp_w2 = jnp.concatenate(
        [jnp.concatenate([w2r, w2i], axis=1),
         jnp.concatenate([-w2i, w2r], axis=1)], axis=0).astype(MATMUL_DTYPE)
    sp_b1 = jnp.concatenate([params["b1r"].reshape(-1),
                             params["b1i"].reshape(-1)]).reshape(1, -1)
    sp_b2 = jnp.concatenate([params["b2r"].reshape(-1),
                             params["b2i"].reshape(-1)]).reshape(1, -1)
    prepped = dict(params)
    prepped.update(
        sp_w1_zr=sp_w1_zr, sp_w1_zi=sp_w1_zi, sp_b1=sp_b1, sp_w2=sp_w2, sp_b2=sp_b2,
        fc1_w_bf16=params["fc1_w"].astype(MATMUL_DTYPE),
        fc2_w_bf16=params["fc2_w"].astype(MATMUL_DTYPE))
    return prepped


# ----------------------------------------------------------------------------
# Full AFNOBlock2D forward
# ----------------------------------------------------------------------------

def afno_block_2d(x_nchw, params, *, sparsity_threshold=0.01, eps=1e-5):
    """AFNOBlock2D forward (layer_scale branch), NCHW in / NCHW out."""
    if "sp_w1_zr" not in params:                 # allow raw params (eager fallback)
        params = prepare_params(params)

    B, C, H, W = x_nchw.shape
    Wf = W // 2 + 1

    x = jnp.transpose(x_nchw, (0, 2, 3, 1)).astype(jnp.float32)   # (B,H,W,C)
    residual = x.reshape(-1, C)

    # norm1 (per-pixel LayerNorm over channels)
    n1 = layernorm(residual, params["ln1_g"], params["ln1_b"], eps=eps)

    # --- AFNO2D spectral filter -----------------------------------------
    # TODO(synk): rfftn/irfftn have no Pallas primitive; they stay as XLA ops.
    xh = jnp.fft.rfftn(n1.reshape(B, H, W, C), axes=(1, 2), norm="ortho")
    # Real / imag as two separate lane-dense (N, C) bf16 slabs: no per-block
    # interleave concat and no post-kernel slice/recombine HBM passes.
    zr = jnp.real(xh).reshape(-1, C).astype(MATMUL_DTYPE)
    zi = jnp.imag(xh).reshape(-1, C).astype(MATMUL_DTYPE)

    out_r, out_i = afno_spectral_mix(
        zr, zi, params["sp_w1_zr"], params["sp_w1_zi"], params["sp_b1"],
        params["sp_w2"], params["sp_b2"], lam=sparsity_threshold)

    f = jnp.fft.irfftn((out_r + 1j * out_i).reshape(B, H, Wf, C),
                       s=(H, W), axes=(1, 2), norm="ortho").reshape(-1, C)
    # (AFNO2D with res_mult=1 returns filter_output + its input; that "+ n1" is
    #  folded into the fused combine kernel below.)

    # fused: x1 = gamma1*(f + n1) + residual ; out = gamma2*MLP(LN2(x1)) + x1
    out = combine_ln_mlp(f, n1, residual,
                         params["gamma1"], params["gamma2"],
                         params["ln2_g"], params["ln2_b"],
                         params["fc1_w_bf16"], params["fc1_b"],
                         params["fc2_w_bf16"], params["fc2_b"],
                         eps=eps)

    return jnp.transpose(out.reshape(B, H, W, C), (0, 3, 1, 2))   # NCHW


# ----------------------------------------------------------------------------
# Pure-JAX reference (same documented assumptions) for correctness checking
# ----------------------------------------------------------------------------

def afno_block_2d_reference(x_nchw, params, *, num_blocks=8,
                            sparsity_threshold=0.01, eps=1e-5):
    B, C, H, W = x_nchw.shape
    bs = C // num_blocks
    x = jnp.transpose(x_nchw, (0, 2, 3, 1)).astype(jnp.float32)

    def ln(v, g, b):
        mu = jnp.mean(v, -1, keepdims=True)
        var = jnp.mean((v - mu) ** 2, -1, keepdims=True)
        return (v - mu) * jax.lax.rsqrt(var + eps) * g.reshape(-1) + b.reshape(-1)

    n1 = ln(x, params["ln1_g"], params["ln1_b"])
    xh = jnp.fft.rfftn(n1, axes=(1, 2), norm="ortho").reshape(
        B, H, W // 2 + 1, num_blocks, bs)
    xr, xi = jnp.real(xh), jnp.imag(xh)
    o1r = jax.nn.relu(jnp.einsum("...bi,bio->...bo", xr, params["w1r"])
                      - jnp.einsum("...bi,bio->...bo", xi, params["w1i"])
                      + params["b1r"])
    o1i = jax.nn.relu(jnp.einsum("...bi,bio->...bo", xi, params["w1r"])
                      + jnp.einsum("...bi,bio->...bo", xr, params["w1i"])
                      + params["b1i"])
    o2r = (jnp.einsum("...bi,bio->...bo", o1r, params["w2r"])
           - jnp.einsum("...bi,bio->...bo", o1i, params["w2i"]) + params["b2r"])
    o2i = (jnp.einsum("...bi,bio->...bo", o1i, params["w2r"])
           + jnp.einsum("...bi,bio->...bo", o1r, params["w2i"]) + params["b2i"])
    sr = o2r - jnp.clip(o2r, -sparsity_threshold, sparsity_threshold)
    si = o2i - jnp.clip(o2i, -sparsity_threshold, sparsity_threshold)
    fil = jnp.fft.irfftn((sr + 1j * si).reshape(B, H, W // 2 + 1, C),
                         s=(H, W), axes=(1, 2), norm="ortho")
    x1 = params["gamma1"].reshape(-1) * (fil + n1) + x
    n2 = ln(x1, params["ln2_g"], params["ln2_b"])
    h = n2 @ params["fc1_w"] + params["fc1_b"].reshape(-1)
    h = 0.5 * h * (1.0 + jax.lax.erf(h * _INV_SQRT2))
    y = h @ params["fc2_w"] + params["fc2_b"].reshape(-1)
    out = params["gamma2"].reshape(-1) * y + x1
    return jnp.transpose(out, (0, 3, 1, 2))


# ----------------------------------------------------------------------------
# Deterministic parameter init (shapes follow the PyTorch __init__)
# ----------------------------------------------------------------------------

def init_params(key, dim, num_blocks=8, hidden_size_factor=1, mlp_ratio=4.0,
                layer_scale=0.1):
    bs = dim // num_blocks
    h = bs * hidden_size_factor
    hidden = int(dim * mlp_ratio)
    ks = jax.random.split(key, 6)
    scale = 0.02

    w1 = scale * jax.random.normal(ks[0], (2, num_blocks, bs, h), jnp.float32)
    b1 = scale * jax.random.normal(ks[1], (2, num_blocks, h), jnp.float32)
    w2 = scale * jax.random.normal(ks[2], (2, num_blocks, h, bs), jnp.float32)
    b2 = scale * jax.random.normal(ks[3], (2, num_blocks, bs), jnp.float32)

    # xavier_uniform for the 1x1 convs (fan_in/out == channel counts for k=1)
    lim1 = math.sqrt(6.0 / (dim + hidden))
    lim2 = math.sqrt(6.0 / (hidden + dim))
    fc1_w = jax.random.uniform(ks[4], (dim, hidden), jnp.float32, -lim1, lim1)
    fc2_w = jax.random.uniform(ks[5], (hidden, dim), jnp.float32, -lim2, lim2)

    return dict(
        ln1_g=jnp.ones((1, dim), jnp.float32), ln1_b=jnp.zeros((1, dim), jnp.float32),
        ln2_g=jnp.ones((1, dim), jnp.float32), ln2_b=jnp.zeros((1, dim), jnp.float32),
        gamma1=jnp.full((1, dim), layer_scale, jnp.float32),
        gamma2=jnp.full((1, dim), layer_scale, jnp.float32),
        w1r=w1[0], w1i=w1[1], b1r=b1[0], b1i=b1[1],
        w2r=w2[0], w2i=w2[1], b2r=b2[0], b2i=b2[1],
        fc1_w=fc1_w, fc1_b=jnp.zeros((1, hidden), jnp.float32),
        fc2_w=fc2_w, fc2_b=jnp.zeros((1, dim), jnp.float32),
    )


if __name__ == "__main__":
    key = jax.random.PRNGKey(0)
    k_x, k_p = jax.random.split(key)

    # Small test shapes (dim divisible by num_blocks=8).  NOTE: performance
    # conclusions require production dims with C (and 4C) multiples of 128.
    B, dim, H, W = 2, 16, 16, 16
    num_blocks = 8
    x = jax.random.normal(k_x, (B, dim, H, W), jnp.float32)
    params = init_params(k_p, dim, num_blocks=num_blocks, layer_scale=0.1)
    prepped = prepare_params(params)        # one-time weight packing (hoisted)

    fwd = jax.jit(functools.partial(afno_block_2d, sparsity_threshold=0.01))
    out = fwd(x, prepped)
    jax.block_until_ready(out)

    assert out.shape == (B, dim, H, W)
    assert bool(jnp.all(jnp.isfinite(out)))

    ref = jax.jit(functools.partial(
        afno_block_2d_reference, num_blocks=num_blocks,
        sparsity_threshold=0.01))(x, params)
    err = float(jnp.max(jnp.abs(out - ref)))
    assert err < 3e-2, f"max abs err vs reference: {err}"

    print("KERNEL_OK")
</pallas_src>

<mosaic_0001>
module attributes {stable_mosaic.version = 11 : i64} {
  func.func @layernorm_kernel(%arg0: i32, %arg1: memref<128x16xf32, #tpu.memory_space<vmem>>, %arg2: memref<1x16xf32, #tpu.memory_space<vmem>>, %arg3: memref<1x16xf32, #tpu.memory_space<vmem>>, %arg4: memref<128x16xf32, #tpu.memory_space<vmem>>) attributes {dimension_semantics = [#tpu.dimension_semantics<parallel>], iteration_bounds = array<i64: 4>, scalar_prefetch = 0 : i64, scratch_operands = 0 : i64, tpu.core_type = #tpu.core_type<tc>, window_params = [{transform_indices = @transform_0, window_bounds = array<i64: 128, 16>}, {pipeline_mode = #tpu.pipeline_mode<synchronous>, transform_indices = @transform_1, window_bounds = array<i64: 1, 16>}, {pipeline_mode = #tpu.pipeline_mode<synchronous>, transform_indices = @transform_2, window_bounds = array<i64: 1, 16>}, {transform_indices = @transform_3, window_bounds = array<i64: 128, 16>}]} {
    %c0 = arith.constant 0 : index
    %c0_0 = arith.constant 0 : index
    %0 = vector.load %arg1[%c0, %c0_0] : memref<128x16xf32, #tpu.memory_space<vmem>>, vector<128x16xf32>
    %cst = arith.constant dense<0.000000e+00> : vector<128xf32>
    %1 = vector.multi_reduction <add>, %0, %cst [1] : vector<128x16xf32> to vector<128xf32>
    %2 = vector.shape_cast %1 : vector<128xf32> to vector<128x1xf32>
    %cst_1 = arith.constant 1.600000e+01 : f32
    %3 = vector.broadcast %cst_1 : f32 to vector<128x1xf32>
    %4 = arith.divf %2, %3 : vector<128x1xf32>
    %5 = vector.broadcast %4 : vector<128x1xf32> to vector<128x16xf32>
    %6 = arith.subf %0, %5 : vector<128x16xf32>
    %7 = arith.mulf %6, %6 : vector<128x16xf32>
    %cst_2 = arith.constant dense<0.000000e+00> : vector<128xf32>
    %8 = vector.multi_reduction <add>, %7, %cst_2 [1] : vector<128x16xf32> to vector<128xf32>
    %9 = vector.shape_cast %8 : vector<128xf32> to vector<128x1xf32>
    %cst_3 = arith.constant 1.600000e+01 : f32
    %10 = vector.broadcast %cst_3 : f32 to vector<128x1xf32>
    %11 = arith.divf %9, %10 : vector<128x1xf32>
    %12 = vector.broadcast %4 : vector<128x1xf32> to vector<128x16xf32>
    %13 = arith.subf %0, %12 : vector<128x16xf32>
    %cst_4 = arith.constant 9.99999974E-6 : f32
    %14 = vector.broadcast %cst_4 : f32 to vector<128x1xf32>
    %15 = arith.addf %11, %14 : vector<128x1xf32>
    %16 = math.rsqrt %15 : vector<128x1xf32>
    %17 = vector.broadcast %16 : vector<128x1xf32> to vector<128x16xf32>
    %18 = arith.mulf %13, %17 : vector<128x16xf32>
    %c0_5 = arith.constant 0 : index
    %c0_6 = arith.constant 0 : index
    %19 = vector.load %arg2[%c0_5, %c0_6] : memref<1x16xf32, #tpu.memory_space<vmem>>, vector<1x16xf32>
    %20 = vector.broadcast %19 : vector<1x16xf32> to vector<128x16xf32>
    %21 = arith.mulf %18, %20 : vector<128x16xf32>
    %c0_7 = arith.constant 0 : index
    %c0_8 = arith.constant 0 : index
    %22 = vector.load %arg3[%c0_7, %c0_8] : memref<1x16xf32, #tpu.memory_space<vmem>>, vector<1x16xf32>
    %23 = vector.broadcast %22 : vector<1x16xf32> to vector<128x16xf32>
    %24 = arith.addf %21, %23 : vector<128x16xf32>
    %c0_9 = arith.constant 0 : index
    %c0_10 = arith.constant 0 : index
    %25 = vector.load %arg4[%c0_9, %c0_10] : memref<128x16xf32, #tpu.memory_space<vmem>>, vector<128x16xf32>
    tpu.vector_store %arg4[%c0_9, %c0_10], %24 {strides = array<i32>} : memref<128x16xf32, #tpu.memory_space<vmem>>, vector<128x16xf32>,
    return
  }
  func.func @transform_0(%arg0: i32) -> (i32, i32) {
    %c0_i32 = arith.constant 0 : i32
    %c0_i32_0 = arith.constant 0 : i32
    return %arg0, %c0_i32 : i32, i32
  }
  func.func @transform_1(%arg0: i32) -> (i32, i32) {
    %c0_i32 = arith.constant 0 : i32
    %c0_i32_0 = arith.constant 0 : i32
    %c0_i32_1 = arith.constant 0 : i32
    return %c0_i32, %c0_i32_0 : i32, i32
  }
  func.func @transform_2(%arg0: i32) -> (i32, i32) {
    %c0_i32 = arith.constant 0 : i32
    %c0_i32_0 = arith.constant 0 : i32
    %c0_i32_1 = arith.constant 0 : i32
    return %c0_i32, %c0_i32_0 : i32, i32
  }
  func.func @transform_3(%arg0: i32) -> (i32, i32) {
    %c0_i32 = arith.constant 0 : i32
    %c0_i32_0 = arith.constant 0 : i32
    return %arg0, %c0_i32 : i32, i32
  }
}

module attributes {stable_mosaic.version = 11 : i64} {
  func.func @afno_spectral_kernel(%arg0: i32, %arg1: memref<72x16xbf16, #tpu.memory_space<vmem>>, %arg2: memref<72x16xbf16, #tpu.memory_space<vmem>>, %arg3: memref<16x32xbf16, #tpu.memory_space<vmem>>, %arg4: memref<16x32xbf16, #tpu.memory_space<vmem>>, %arg5: memref<1x32xf32, #tpu.memory_space<vmem>>, %arg6: memref<32x32xbf16, #tpu.memory_space<vmem>>, %arg7: memref<1x32xf32, #tpu.memory_space<vmem>>, %arg8: memref<72x16xf32, #tpu.memory_space<vmem>>, %arg9: memref<72x16xf32, #tpu.memory_space<vmem>>) attributes {dimension_semantics = [#tpu.dimension_semantics<parallel>], iteration_bounds = array<i64: 4>, scalar_prefetch = 0 : i64, scratch_operands = 0 : i64, tpu.core_type = #tpu.core_type<tc>, window_params = [{transform_indices = @transform_0, window_bounds = array<i64: 72, 16>}, {transform_indices = @transform_1, window_bounds = array<i64: 72, 16>}, {pipeline_mode = #tpu.pipeline_mode<synchronous>, transform_indices = @transform_2, window_bounds = array<i64: 16, 32>}, {pipeline_mode = #tpu.pipeline_mode<synchronous>, transform_indices = @transform_3, window_bounds = array<i64: 16, 32>}, {pipeline_mode = #tpu.pipeline_mode<synchronous>, transform_indices = @transform_4, window_bounds = array<i64: 1, 32>}, {pipeline_mode = #tpu.pipeline_mode<synchronous>, transform_indices = @transform_5, window_bounds = array<i64: 32, 32>}, {pipeline_mode = #tpu.pipeline_mode<synchronous>, transform_indices = @transform_6, window_bounds = array<i64: 1, 32>}, {transform_indices = @transform_7, window_bounds = array<i64: 72, 16>}, {transform_indices = @transform_8, window_bounds = array<i64: 72, 16>}]} {
    %c0 = arith.constant 0 : index
    %c0_0 = arith.constant 0 : index
    %0 = vector.load %arg1[%c0, %c0_0] : memref<72x16xbf16, #tpu.memory_space<vmem>>, vector<72x16xbf16>
    %c0_1 = arith.constant 0 : index
    %c0_2 = arith.constant 0 : index
    %1 = vector.load %arg2[%c0_1, %c0_2] : memref<72x16xbf16, #tpu.memory_space<vmem>>, vector<72x16xbf16>
    %c0_3 = arith.constant 0 : index
    %c0_4 = arith.constant 0 : index
    %2 = vector.load %arg3[%c0_3, %c0_4] : memref<16x32xbf16, #tpu.memory_space<vmem>>, vector<16x32xbf16>
    %cst = arith.constant dense<0.000000e+00> : vector<72x32xf32>
    %3 = tpu.matmul %0, %2, %cst {dimension_numbers = #tpu.dot_dimension_numbers<[1], [0], [0], [1], [0, 0, 1, 1], [], []>} : vector<72x16xbf16>, vector<16x32xbf16>, vector<72x32xf32> -> vector<72x32xf32>
    %c0_5 = arith.constant 0 : index
    %c0_6 = arith.constant 0 : index
    %4 = vector.load %arg4[%c0_5, %c0_6] : memref<16x32xbf16, #tpu.memory_space<vmem>>, vector<16x32xbf16>
    %cst_7 = arith.constant dense<0.000000e+00> : vector<72x32xf32>
    %5 = tpu.matmul %1, %4, %cst_7 {dimension_numbers = #tpu.dot_dimension_numbers<[1], [0], [0], [1], [0, 0, 1, 1], [], []>} : vector<72x16xbf16>, vector<16x32xbf16>, vector<72x32xf32> -> vector<72x32xf32>
    %6 = arith.addf %3, %5 : vector<72x32xf32>
    %c0_8 = arith.constant 0 : index
    %c0_9 = arith.constant 0 : index
    %7 = vector.load %arg5[%c0_8, %c0_9] : memref<1x32xf32, #tpu.memory_space<vmem>>, vector<1x32xf32>
    %8 = vector.broadcast %7 : vector<1x32xf32> to vector<72x32xf32>
    %9 = arith.addf %6, %8 : vector<72x32xf32>
    %cst_10 = arith.constant 0.000000e+00 : f32
    %10 = vector.broadcast %cst_10 : f32 to vector<72x32xf32>
    %11 = arith.maximumf %9, %10 : vector<72x32xf32>
    %12 = arith.truncf %11 : vector<72x32xf32> to vector<72x32xbf16>
    %c0_11 = arith.constant 0 : index
    %c0_12 = arith.constant 0 : index
    %13 = vector.load %arg6[%c0_11, %c0_12] : memref<32x32xbf16, #tpu.memory_space<vmem>>, vector<32x32xbf16>
    %cst_13 = arith.constant dense<0.000000e+00> : vector<72x32xf32>
    %14 = tpu.matmul %12, %13, %cst_13 {dimension_numbers = #tpu.dot_dimension_numbers<[1], [0], [0], [1], [0, 0, 1, 1], [], []>} : vector<72x32xbf16>, vector<32x32xbf16>, vector<72x32xf32> -> vector<72x32xf32>
    %c0_14 = arith.constant 0 : index
    %c0_15 = arith.constant 0 : index
    %15 = vector.load %arg7[%c0_14, %c0_15] : memref<1x32xf32, #tpu.memory_space<vmem>>, vector<1x32xf32>
    %16 = vector.broadcast %15 : vector<1x32xf32> to vector<72x32xf32>
    %17 = arith.addf %14, %16 : vector<72x32xf32>
    %cst_16 = arith.constant -0.00999999977 : f32
    %cst_17 = arith.constant 0.00999999977 : f32
    %18 = vector.broadcast %cst_16 : f32 to vector<72x32xf32>
    %19 = arith.maximumf %18, %17 : vector<72x32xf32>
    %20 = vector.broadcast %cst_17 : f32 to vector<72x32xf32>
    %21 = arith.minimumf %20, %19 : vector<72x32xf32>
    %22 = arith.subf %17, %21 : vector<72x32xf32>
    %23 = vector.extract_strided_slice %22 {offsets = [0, 0], sizes = [72, 16], strides = [1, 1]} : vector<72x32xf32> to vector<72x16xf32>
    %c0_18 = arith.constant 0 : index
    %c0_19 = arith.constant 0 : index
    %24 = vector.load %arg8[%c0_18, %c0_19] : memref<72x16xf32, #tpu.memory_space<vmem>>, vector<72x16xf32>
    tpu.vector_store %arg8[%c0_18, %c0_19], %23 {strides = array<i32>} : memref<72x16xf32, #tpu.memory_space<vmem>>, vector<72x16xf32>,
    %25 = vector.extract_strided_slice %22 {offsets = [0, 16], sizes = [72, 16], strides = [1, 1]} : vector<72x32xf32> to vector<72x16xf32>
    %c0_20 = arith.constant 0 : index
    %c0_21 = arith.constant 0 : index
    %26 = vector.load %arg9[%c0_20, %c0_21] : memref<72x16xf32, #tpu.memory_space<vmem>>, vector<72x16xf32>
    tpu.vector_store %arg9[%c0_20, %c0_21], %25 {strides = array<i32>} : memref<72x16xf32, #tpu.memory_space<vmem>>, vector<72x16xf32>,
    return
  }
  func.func @transform_0(%arg0: i32) -> (i32, i32) {
    %c0_i32 = arith.constant 0 : i32
    %c0_i32_0 = arith.constant 0 : i32
    return %arg0, %c0_i32 : i32, i32
  }
  func.func @transform_1(%arg0: i32) -> (i32, i32) {
    %c0_i32 = arith.constant 0 : i32
    %c0_i32_0 = arith.constant 0 : i32
    return %arg0, %c0_i32 : i32, i32
  }
  func.func @transform_2(%arg0: i32) -> (i32, i32) {
    %c0_i32 = arith.constant 0 : i32
    %c0_i32_0 = arith.constant 0 : i32
    %c0_i32_1 = arith.constant 0 : i32
    return %c0_i32, %c0_i32_0 : i32, i32
  }
  func.func @transform_3(%arg0: i32) -> (i32, i32) {
    %c0_i32 = arith.constant 0 : i32
    %c0_i32_0 = arith.constant 0 : i32
    %c0_i32_1 = arith.constant 0 : i32
    return %c0_i32, %c0_i32_0 : i32, i32
  }
  func.func @transform_4(%arg0: i32) -> (i32, i32) {
    %c0_i32 = arith.constant 0 : i32
    %c0_i32_0 = arith.constant 0 : i32
    %c0_i32_1 = arith.constant 0 : i32
    return %c0_i32, %c0_i32_0 : i32, i32
  }
  func.func @transform_5(%arg0: i32) -> (i32, i32) {
    %c0_i32 = arith.constant 0 : i32
    %c0_i32_0 = arith.constant 0 : i32
    %c0_i32_1 = arith.constant 0 : i32
    return %c0_i32, %c0_i32_0 : i32, i32
  }
  func.func @transform_6(%arg0: i32) -> (i32, i32) {
    %c0_i32 = arith.constant 0 : i32
    %c0_i32_0 = arith.constant 0 : i32
    %c0_i32_1 = arith.constant 0 : i32
    return %c0_i32, %c0_i32_0 : i32, i32
  }
  func.func @transform_7(%arg0: i32) -> (i32, i32) {
    %c0_i32 = arith.constant 0 : i32
    %c0_i32_0 = arith.constant 0 : i32
    return %arg0, %c0_i32 : i32, i32
  }
  func.func @transform_8(%arg0: i32) -> (i32, i32) {
    %c0_i32 = arith.constant 0 : i32
    %c0_i32_0 = arith.constant 0 : i32
    return %arg0, %c0_i32 : i32, i32
  }
}

module attributes {stable_mosaic.version = 11 : i64} {
  func.func @combine_mlp_kernel(%arg0: i32, %arg1: memref<128x16xf32, #tpu.memory_space<vmem>>, %arg2: memref<128x16xf32, #tpu.memory_space<vmem>>, %arg3: memref<128x16xf32, #tpu.memory_space<vmem>>, %arg4: memref<1x16xf32, #tpu.memory_space<vmem>>, %arg5: memref<1x16xf32, #tpu.memory_space<vmem>>, %arg6: memref<1x16xf32, #tpu.memory_space<vmem>>, %arg7: memref<1x16xf32, #tpu.memory_space<vmem>>, %arg8: memref<16x64xbf16, #tpu.memory_space<vmem>>, %arg9: memref<1x64xf32, #tpu.memory_space<vmem>>, %arg10: memref<64x16xbf16, #tpu.memory_space<vmem>>, %arg11: memref<1x16xf32, #tpu.memory_space<vmem>>, %arg12: memref<128x16xf32, #tpu.memory_space<vmem>>) attributes {dimension_semantics = [#tpu.dimension_semantics<parallel>], iteration_bounds = array<i64: 4>, scalar_prefetch = 0 : i64, scratch_operands = 0 : i64, tpu.core_type = #tpu.core_type<tc>, window_params = [{transform_indices = @transform_0, window_bounds = array<i64: 128, 16>}, {transform_indices = @transform_1, window_bounds = array<i64: 128, 16>}, {transform_indices = @transform_2, window_bounds = array<i64: 128, 16>}, {pipeline_mode = #tpu.pipeline_mode<synchronous>, transform_indices = @transform_3, window_bounds = array<i64: 1, 16>}, {pipeline_mode = #tpu.pipeline_mode<synchronous>, transform_indices = @transform_4, window_bounds = array<i64: 1, 16>}, {pipeline_mode = #tpu.pipeline_mode<synchronous>, transform_indices = @transform_5, window_bounds = array<i64: 1, 16>}, {pipeline_mode = #tpu.pipeline_mode<synchronous>, transform_indices = @transform_6, window_bounds = array<i64: 1, 16>}, {pipeline_mode = #tpu.pipeline_mode<synchronous>, transform_indices = @transform_7, window_bounds = array<i64: 16, 64>}, {pipeline_mode = #tpu.pipeline_mode<synchronous>, transform_indices = @transform_8, window_bounds = array<i64: 1, 64>}, {pipeline_mode = #tpu.pipeline_mode<synchronous>, transform_indices = @transform_9, window_bounds = array<i64: 64, 16>}, {pipeline_mode = #tpu.pipeline_mode<synchronous>, transform_indices = @transform_10, window_bounds = array<i64: 1, 16>}, {transform_indices = @transform_11, window_bounds = array<i64: 128, 16>}]} {
    %c0 = arith.constant 0 : index
    %c0_0 = arith.constant 0 : index
    %0 = vector.load %arg4[%c0, %c0_0] : memref<1x16xf32, #tpu.memory_space<vmem>>, vector<1x16xf32>
    %c0_1 = arith.constant 0 : index
    %c0_2 = arith.constant 0 : index
    %1 = vector.load %arg1[%c0_1, %c0_2] : memref<128x16xf32, #tpu.memory_space<vmem>>, vector<128x16xf32>
    %c0_3 = arith.constant 0 : index
    %c0_4 = arith.constant 0 : index
    %2 = vector.load %arg2[%c0_3, %c0_4] : memref<128x16xf32, #tpu.memory_space<vmem>>, vector<128x16xf32>
    %3 = arith.addf %1, %2 : vector<128x16xf32>
    %4 = vector.broadcast %0 : vector<1x16xf32> to vector<128x16xf32>
    %5 = arith.mulf %4, %3 : vector<128x16xf32>
    %c0_5 = arith.constant 0 : index
    %c0_6 = arith.constant 0 : index
    %6 = vector.load %arg3[%c0_5, %c0_6] : memref<128x16xf32, #tpu.memory_space<vmem>>, vector<128x16xf32>
    %7 = arith.addf %5, %6 : vector<128x16xf32>
    %cst = arith.constant dense<0.000000e+00> : vector<128xf32>
    %8 = vector.multi_reduction <add>, %7, %cst [1] : vector<128x16xf32> to vector<128xf32>
    %9 = vector.shape_cast %8 : vector<128xf32> to vector<128x1xf32>
    %cst_7 = arith.constant 1.600000e+01 : f32
    %10 = vector.broadcast %cst_7 : f32 to vector<128x1xf32>
    %11 = arith.divf %9, %10 : vector<128x1xf32>
    %12 = vector.broadcast %11 : vector<128x1xf32> to vector<128x16xf32>
    %13 = arith.subf %7, %12 : vector<128x16xf32>
    %14 = arith.mulf %13, %13 : vector<128x16xf32>
    %cst_8 = arith.constant dense<0.000000e+00> : vector<128xf32>
    %15 = vector.multi_reduction <add>, %14, %cst_8 [1] : vector<128x16xf32> to vector<128xf32>
    %16 = vector.shape_cast %15 : vector<128xf32> to vector<128x1xf32>
    %cst_9 = arith.constant 1.600000e+01 : f32
    %17 = vector.broadcast %cst_9 : f32 to vector<128x1xf32>
    %18 = arith.divf %16, %17 : vector<128x1xf32>
    %19 = vector.broadcast %11 : vector<128x1xf32> to vector<128x16xf32>
    %20 = arith.subf %7, %19 : vector<128x16xf32>
    %cst_10 = arith.constant 9.99999974E-6 : f32
    %21 = vector.broadcast %cst_10 : f32 to vector<128x1xf32>
    %22 = arith.addf %18, %21 : vector<128x1xf32>
    %23 = math.rsqrt %22 : vector<128x1xf32>
    %24 = vector.broadcast %23 : vector<128x1xf32> to vector<128x16xf32>
    %25 = arith.mulf %20, %24 : vector<128x16xf32>
    %c0_11 = arith.constant 0 : index
    %c0_12 = arith.constant 0 : index
    %26 = vector.load %arg6[%c0_11, %c0_12] : memref<1x16xf32, #tpu.memory_space<vmem>>, vector<1x16xf32>
    %27 = vector.broadcast %26 : vector<1x16xf32> to vector<128x16xf32>
    %28 = arith.mulf %25, %27 : vector<128x16xf32>
    %c0_13 = arith.constant 0 : index
    %c0_14 = arith.constant 0 : index
    %29 = vector.load %arg7[%c0_13, %c0_14] : memref<1x16xf32, #tpu.memory_space<vmem>>, vector<1x16xf32>
    %30 = vector.broadcast %29 : vector<1x16xf32> to vector<128x16xf32>
    %31 = arith.addf %28, %30 : vector<128x16xf32>
    %32 = arith.truncf %31 : vector<128x16xf32> to vector<128x16xbf16>
    %c0_15 = arith.constant 0 : index
    %c0_16 = arith.constant 0 : index
    %33 = vector.load %arg8[%c0_15, %c0_16] : memref<16x64xbf16, #tpu.memory_space<vmem>>, vector<16x64xbf16>
    %cst_17 = arith.constant dense<0.000000e+00> : vector<128x64xf32>
    %34 = tpu.matmul %32, %33, %cst_17 {dimension_numbers = #tpu.dot_dimension_numbers<[1], [0], [0], [1], [0, 0, 1, 1], [], []>} : vector<128x16xbf16>, vector<16x64xbf16>, vector<128x64xf32> -> vector<128x64xf32>
    %c0_18 = arith.constant 0 : index
    %c0_19 = arith.constant 0 : index
    %35 = vector.load %arg9[%c0_18, %c0_19] : memref<1x64xf32, #tpu.memory_space<vmem>>, vector<1x64xf32>
    %36 = vector.broadcast %35 : vector<1x64xf32> to vector<128x64xf32>
    %37 = arith.addf %34, %36 : vector<128x64xf32>
    %cst_20 = arith.constant 5.000000e-01 : f32
    %38 = vector.broadcast %cst_20 : f32 to vector<128x64xf32>
    %39 = arith.mulf %38, %37 : vector<128x64xf32>
    %cst_21 = arith.constant 0.707106769 : f32
    %40 = vector.broadcast %cst_21 : f32 to vector<128x64xf32>
    %41 = arith.mulf %37, %40 : vector<128x64xf32>
    %42 = math.erf %41 : vector<128x64xf32>
    %cst_22 = arith.constant 1.000000e+00 : f32
    %43 = vector.broadcast %cst_22 : f32 to vector<128x64xf32>
    %44 = arith.addf %43, %42 : vector<128x64xf32>
    %45 = arith.mulf %39, %44 : vector<128x64xf32>
    %46 = arith.truncf %45 : vector<128x64xf32> to vector<128x64xbf16>
    %c0_23 = arith.constant 0 : index
    %c0_24 = arith.constant 0 : index
    %47 = vector.load %arg10[%c0_23, %c0_24] : memref<64x16xbf16, #tpu.memory_space<vmem>>, vector<64x16xbf16>
    %cst_25 = arith.constant dense<0.000000e+00> : vector<128x16xf32>
    %48 = tpu.matmul %46, %47, %cst_25 {dimension_numbers = #tpu.dot_dimension_numbers<[1], [0], [0], [1], [0, 0, 1, 1], [], []>} : vector<128x64xbf16>, vector<64x16xbf16>, vector<128x16xf32> -> vector<128x16xf32>
    %c0_26 = arith.constant 0 : index
    %c0_27 = arith.constant 0 : index
    %49 = vector.load %arg11[%c0_26, %c0_27] : memref<1x16xf32, #tpu.memory_space<vmem>>, vector<1x16xf32>
    %50 = vector.broadcast %49 : vector<1x16xf32> to vector<128x16xf32>
    %51 = arith.addf %48, %50 : vector<128x16xf32>
    %c0_28 = arith.constant 0 : index
    %c0_29 = arith.constant 0 : index
    %52 = vector.load %arg5[%c0_28, %c0_29] : memref<1x16xf32, #tpu.memory_space<vmem>>, vector<1x16xf32>
    %53 = vector.broadcast %52 : vector<1x16xf32> to vector<128x16xf32>
    %54 = arith.mulf %53, %51 : vector<128x16xf32>
    %55 = arith.addf %54, %7 : vector<128x16xf32>
    %c0_30 = arith.constant 0 : index
    %c0_31 = arith.constant 0 : index
    %56 = vector.load %arg12[%c0_30, %c0_31] : memref<128x16xf32, #tpu.memory_space<vmem>>, vector<128x16xf32>
    tpu.vector_store %arg12[%c0_30, %c0_31], %55 {strides = array<i32>} : memref<128x16xf32, #tpu.memory_space<vmem>>, vector<128x16xf32>,
    return
  }
  func.func @transform_0(%arg0: i32) -> (i32, i32) {
    %c0_i32 = arith.constant 0 : i32
    %c0_i32_0 = arith.constant 0 : i32
    return %arg0, %c0_i32 : i32, i32
  }
  func.func @transform_1(%arg0: i32) -> (i32, i32) {
    %c0_i32 = arith.constant 0 : i32
    %c0_i32_0 = arith.constant 0 : i32
    return %arg0, %c0_i32 : i32, i32
  }
  func.func @transform_2(%arg0: i32) -> (i32, i32) {
    %c0_i32 = arith.constant 0 : i32
    %c0_i32_0 = arith.constant 0 : i32
    return %arg0, %c0_i32 : i32, i32
  }
  func.func @transform_3(%arg0: i32) -> (i32, i32) {
    %c0_i32 = arith.constant 0 : i32
    %c0_i32_0 = arith.constant 0 : i32
    %c0_i32_1 = arith.constant 0 : i32
    return %c0_i32, %c0_i32_0 : i32, i32
  }
  func.func @transform_4(%arg0: i32) -> (i32, i32) {
    %c0_i32 = arith.constant 0 : i32
    %c0_i32_0 = arith.constant 0 : i32
    %c0_i32_1 = arith.constant 0 : i32
    return %c0_i32, %c0_i32_0 : i32, i32
  }
  func.func @transform_5(%arg0: i32) -> (i32, i32) {
    %c0_i32 = arith.constant 0 : i32
    %c0_i32_0 = arith.constant 0 : i32
    %c0_i32_1 = arith.constant 0 : i32
    return %c0_i32, %c0_i32_0 : i32, i32
  }
  func.func @transform_6(%arg0: i32) -> (i32, i32) {
    %c0_i32 = arith.constant 0 : i32
    %c0_i32_0 = arith.constant 0 : i32
    %c0_i32_1 = arith.constant 0 : i32
    return %c0_i32, %c0_i32_0 : i32, i32
  }
  func.func @transform_7(%arg0: i32) -> (i32, i32) {
    %c0_i32 = arith.constant 0 : i32
    %c0_i32_0 = arith.constant 0 : i32
    %c0_i32_1 = arith.constant 0 : i32
    return %c0_i32, %c0_i32_0 : i32, i32
  }
  func.func @transform_8(%arg0: i32) -> (i32, i32) {
    %c0_i32 = arith.constant 0 : i32
    %c0_i32_0 = arith.constant 0 : i32
    %c0_i32_1 = arith.constant 0 : i32
    return %c0_i32, %c0_i32_0 : i32, i32
  }
  func.func @transform_9(%arg0: i32) -> (i32, i32) {
    %c0_i32 = arith.constant 0 : i32
    %c0_i32_0 = arith.constant 0 : i32
    %c0_i32_1 = arith.constant 0 : i32
    return %c0_i32, %c0_i32_0 : i32, i32
  }
  func.func @transform_10(%arg0: i32) -> (i32, i32) {
    %c0_i32 = arith.constant 0 : i32
    %c0_i32_0 = arith.constant 0 : i32
    %c0_i32_1 = arith.constant 0 : i32
    return %c0_i32, %c0_i32_0 : i32, i32
  }
  func.func @transform_11(%arg0: i32) -> (i32, i32) {
    %c0_i32 = arith.constant 0 : i32
    %c0_i32_0 = arith.constant 0 : i32
    return %arg0, %c0_i32 : i32, i32
  }
}

</mosaic_0001>

<llo_original>
// kernel: afno_block_2d.3
$region0: #{afno_block_2d.3}
  #allocation0 [shape = 'u32[]', space=smem, size = 0x4, offset = 0x4, fixed_abs, tag = 'smem constant byte address 0x4 - core index']
  #allocation1 [shape = 'u32[72,128]{1,0:T(1,128)}', space=vmem, size = 0x9000, scoped, tag = 'internal scratch']
  %s0 = inlined_call_operand.vmem [shape: f32[512,16], index: 0, kind: input, shape index: {}]
  %s1 = inlined_call_operand.vmem [shape: f32[1,16], index: 1, kind: input, shape index: {}]
  %s2 = inlined_call_operand.vmem [shape: f32[1,16], index: 2, kind: input, shape index: {}]
  %s3 = inlined_call_operand.vmem [shape: f32[512,16], index: 3, kind: output, shape index: {}]
  %s4 = sld [smem:[#allocation0]]
  $region45: #{afno_block_2d.3} parent=0
    _
  %s6 = ssub.s32 1, %s4
  %s7 = scalar_select 0, %s6, %s4
  loop: start=0, step=1, limit=6
  $region2: #{afno_block_2d.3} parent=0 // loop_pre_header
    _
  $region3: #{afno_block_2d.3} parent=0 // loop_header
    %s9 = sphi 0, %s13
    %p10 = scmp.ge.s32.totalorder %s9, 6
    %s19 = sphi 0, %s21
    %s22 = sphi 0, %s19
    %s23 = sphi 0, %s22
    %s39 = sphi 0, %s23
    %s43 = sphi 0, %s43
    %s45 = sphi 0, %s43
    %s46 = sphi 0, %s45
    %s60 = sphi 0, %s46
    %s64 = sphi 0, %s64
    %s66 = sphi 0, %s64
    %s67 = sphi 0, %s66
    %s81 = sphi 0, %s67
    %s87 = sphi 0, %s89
    %s90 = sphi 0, %s87
    %s91 = sphi 0, %s90
    %s107 = sphi 0, %s91
  $region4: #{afno_block_2d.3} parent=0 // loop_header_branch
    %12 = sbr.rel (%p10) target = $region8
  $region5: #{afno_block_2d.3} parent=0 // loop_body
    %s14 = ssub.s32 %s9, 1
    %s15 = ssub.s32 %s9, 2
    %s16 = sadd.s32 %s9, 1
    %s17 = ssub.s32 %s9, %s16
    %p18 = scmp.eq.s32.totalorder %s17, 0
    %s20 = sadd.s32 %s19, 1
    %s21 = scalar_select %p18, %s19, %s20
    %p24 = pneg %p18
    %p25 = scmp.eq.s32.totalorder %s9, 3
    %p26 = por %p24, %p25
    %p27 = scmp.ne.s32.totalorder %s19, %s22
    %p28 = scmp.eq.s32.totalorder %s9, 0
    %p29 = por %p27, %p28
    %p30 = scmp.ne.s32.totalorder %s19, %s22
    %p31 = scmp.eq.s32.totalorder %s14, 3
    %p32 = por %p30, %p31
    %p33 = scmp.ne.s32.totalorder %s22, %s23
    %p34 = scmp.eq.s32.totalorder %s14, 0
    %p35 = por %p33, %p34
    %p36 = scmp.ne.s32.totalorder %s22, %s23
    %p37 = scmp.eq.s32.totalorder %s15, 3
    %p38 = por %p36, %p37
    %p40 = scmp.ne.s32.totalorder %s23, %s39
    %p41 = scmp.eq.s32.totalorder %s15, 0
    %p42 = por %p40, %p41
    %s44 = sadd.s32 %s43, 1
    %p47 = scmp.eq.s32.totalorder %s9, 3
    %p48 = scmp.ne.s32.totalorder %s43, %s45
    %p49 = scmp.eq.s32.totalorder %s9, 0
    %p50 = por %p48, %p49
    %p51 = scmp.ne.s32.totalorder %s43, %s45
    %p52 = scmp.eq.s32.totalorder %s14, 3
    %p53 = por %p51, %p52
    %p54 = scmp.ne.s32.totalorder %s45, %s46
    %p55 = scmp.eq.s32.totalorder %s14, 0
    %p56 = por %p54, %p55
    %p57 = scmp.ne.s32.totalorder %s45, %s46
    %p58 = scmp.eq.s32.totalorder %s15, 3
    %p59 = por %p57, %p58
    %p61 = scmp.ne.s32.totalorder %s46, %s60
    %p62 = scmp.eq.s32.totalorder %s15, 0
    %p63 = por %p61, %p62
    %s65 = sadd.s32 %s64, 1
    %p68 = scmp.eq.s32.totalorder %s9, 3
    %p69 = scmp.ne.s32.totalorder %s64, %s66
    %p70 = scmp.eq.s32.totalorder %s9, 0
    %p71 = por %p69, %p70
    %p72 = scmp.ne.s32.totalorder %s64, %s66
    %p73 = scmp.eq.s32.totalorder %s14, 3
    %p74 = por %p72, %p73
    %p75 = scmp.ne.s32.totalorder %s66, %s67
    %p76 = scmp.eq.s32.totalorder %s14, 0
    %p77 = por %p75, %p76
    %p78 = scmp.ne.s32.totalorder %s66, %s67
    %p79 = scmp.eq.s32.totalorder %s15, 3
    %p80 = por %p78, %p79
    %p82 = scmp.ne.s32.totalorder %s67, %s81
    %p83 = scmp.eq.s32.totalorder %s15, 0
    %p84 = por %p82, %p83
    %s85 = ssub.s32 %s9, %s16
    %p86 = scmp.eq.s32.totalorder %s85, 0
    %s88 = sadd.s32 %s87, 1
    %s89 = scalar_select %p86, %s87, %s88
    %p92 = pneg %p86
    %p93 = scmp.eq.s32.totalorder %s9, 3
    %p94 = por %p92, %p93
    %p95 = scmp.ne.s32.totalorder %s87, %s90
    %p96 = scmp.eq.s32.totalorder %s9, 0
    %p97 = por %p95, %p96
    %p98 = scmp.ne.s32.totalorder %s87, %s90
    %p99 = scmp.eq.s32.totalorder %s14, 3
    %p100 = por %p98, %p99
    %p101 = scmp.ne.s32.totalorder %s90, %s91
    %p102 = scmp.eq.s32.totalorder %s14, 0
    %p103 = por %p101, %p102
    %p104 = scmp.ne.s32.totalorder %s90, %s91
    %p105 = scmp.eq.s32.totalorder %s15, 3
    %p106 = por %p104, %p105
    %p108 = scmp.ne.s32.totalorder %s91, %s107
    %p109 = scmp.eq.s32.totalorder %s15, 0
    %p110 = por %p108, %p109
    %p111 = scmp.le.s32.totalorder 1, %s9
    %p112 = scmp.lt.s32.totalorder %s9, 5
    %p113 = pnand %p111, %p112
    %p114 = pneg %p113
    // Predicated region
    $region9: #{afno_block_2d.3} parent=5 // pred_check
      _
    $region10: #{afno_block_2d.3} parent=5 // pred_check_branch
      %116 = sbr.rel (%p113) target = $region12
    $region11: #{afno_block_2d.3} parent=5 // pred_region
      %s117 = ssub.s32 %s9, 1
      // Predicated region
      $region13: #{afno_block_2d.3} parent=11 // pred_check
        %p118 = pneg %p56
      $region14: #{afno_block_2d.3} parent=11 // pred_check_branch
        %120 = sbr.rel (%p118) target = $region16
      $region15: #{afno_block_2d.3} parent=11 // pred_region
        _
      $region16: #{afno_block_2d.3} parent=11 // pred_fallthru
        _
      // Predicated region
      $region17: #{afno_block_2d.3} parent=11 // pred_check
        %p121 = pneg %p77
      $region18: #{afno_block_2d.3} parent=11 // pred_check_branch
        %123 = sbr.rel (%p121) target = $region20
      $region19: #{afno_block_2d.3} parent=11 // pred_region
        _
      $region20: #{afno_block_2d.3} parent=11 // pred_fallthru
        _
    $region12: #{afno_block_2d.3} parent=5 // pred_fallthru
      _
    %p124 = scmp.lt.s32.totalorder %s9, 4
    // Predicated region
    $region21: #{afno_block_2d.3} parent=5 // pred_check
      %p125 = pneg %p124
    $region22: #{afno_block_2d.3} parent=5 // pred_check_branch
      %127 = sbr.rel (%p125) target = $region24
    $region23: #{afno_block_2d.3} parent=5 // pred_region
      // Predicated region
      $region25: #{afno_block_2d.3} parent=23 // pred_check
        %p128 = pneg %p29
      $region26: #{afno_block_2d.3} parent=23 // pred_check_branch
        %130 = sbr.rel (%p128) target = $region28
      $region27: #{afno_block_2d.3} parent=23 // pred_region
        %s131 = smul.u32 16, %s9
        %p132 = scmp.lt.s32.totalorder %s131, 63
        %s133 = scalar_select %p132, %s131, 63
        %s134 = smul.addr %s133, 8
        %s135 = scalar_lea.vmem %s0, %s134
        %s136 = smul.u32 16, %s9
      $region28: #{afno_block_2d.3} parent=23 // pred_fallthru
        _
    $region24: #{afno_block_2d.3} parent=5 // pred_fallthru
      _
    %p137 = scmp.le.s32.totalorder 1, %s9
    %p138 = scmp.lt.s32.totalorder %s9, 5
    %p139 = pnand %p137, %p138
    %p140 = pneg %p139
    // Predicated region
    $region29: #{afno_block_2d.3} parent=5 // pred_check
      _
    $region30: #{afno_block_2d.3} parent=5 // pred_check_branch
      %142 = sbr.rel (%p139) target = $region32
    $region31: #{afno_block_2d.3} parent=5 // pred_region
      %s143 = ssub.s32 %s9, 1
      %s144 = smul.u32 16, %s14
      %p145 = scmp.lt.s32.totalorder %s144, 63
      %s146 = scalar_select %p145, %s144, 63
      %s147 = smul.addr %s146, 8
      %s148 = scalar_lea.vmem %s0, %s147
      %p149 = pneg %p35
      %p150 = pneg %p32
      %p151 = pneg %p56
      %p152 = pneg %p53
      %p153 = pneg %p77
      %p154 = pneg %p74
      %p155 = pneg %p103
      %p156 = pneg %p100
      %s157 = smul.u32 16, %s14
      %p158 = scmp.lt.s32.totalorder %s157, 63
      %s159 = scalar_select %p158, %s157, 63
      %s160 = smul.addr %s159, 8
      %s161 = scalar_lea.vmem %s3, %s160
      %s162 = smul.u32 16, %s14
      %p163 = scmp.lt.s32.totalorder %s162, 63
      %s164 = scalar_select %p163, %s162, 63
      %s165 = smul.addr %s164, 8
      %s166 = scalar_lea.vmem %s0, %s165
      %s167 = smul.u32 16, %s14
      %s168 = smul.u32 16, %s14
      %p169 = scmp.lt.s32.totalorder %s168, 63
      %s170 = scalar_select %p169, %s168, 63
      %s171 = smul.addr %s170, 8
      %s172 = scalar_lea.vmem %s3, %s171
      %s173 = smul.u32 16, %s14
      %v174 = vld [vmem:[%s166] sm:$0xff]
      %v175 = vld [vmem:[%s166 + $0x8] sm:$0xff]
      %v176 = vld [vmem:[%s166 + $0x10] sm:$0xff]
      %v177 = vld [vmem:[%s166 + $0x18] sm:$0xff]
      %v178 = vld [vmem:[%s166 + $0x20] sm:$0xff]
      %v179 = vld [vmem:[%s166 + $0x28] sm:$0xff]
      %v180 = vld [vmem:[%s166 + $0x30] sm:$0xff]
      %v181 = vld [vmem:[%s166 + $0x38] sm:$0xff]
      %v182 = vld [vmem:[%s166 + $0x40] sm:$0xff]
      %v183 = vld [vmem:[%s166 + $0x48] sm:$0xff]
      %v184 = vld [vmem:[%s166 + $0x50] sm:$0xff]
      %v185 = vld [vmem:[%s166 + $0x58] sm:$0xff]
      %v186 = vld [vmem:[%s166 + $0x60] sm:$0xff]
      %v187 = vld [vmem:[%s166 + $0x68] sm:$0xff]
      %v188 = vld [vmem:[%s166 + $0x70] sm:$0xff]
      %v189 = vld [vmem:[%s166 + $0x78] sm:$0xff]
      %vm190 = vcmask 130048
      %v191 = vsel %vm190, %v174, 0.0
      %192 = vadd.xlane.f32.xlu0 %v191
      %v193 = vpop.xlane.xlu0 %192
      %v194 = vsel %vm190, %v175, 0.0
      %195 = vadd.xlane.f32.xlu0 %v194
      %v196 = vpop.xlane.xlu0 %195
      %v197 = vsel %vm190, %v176, 0.0
      %198 = vadd.xlane.f32.xlu0 %v197
      %v199 = vpop.xlane.xlu0 %198
      %v200 = vsel %vm190, %v177, 0.0
      %201 = vadd.xlane.f32.xlu0 %v200
      %v202 = vpop.xlane.xlu0 %201
      %v203 = vsel %vm190, %v178, 0.0
      %204 = vadd.xlane.f32.xlu0 %v203
      %v205 = vpop.xlane.xlu0 %204
      %v206 = vsel %vm190, %v179, 0.0
      %207 = vadd.xlane.f32.xlu0 %v206
      %v208 = vpop.xlane.xlu0 %207
      %v209 = vsel %vm190, %v180, 0.0
      %210 = vadd.xlane.f32.xlu0 %v209
      %v211 = vpop.xlane.xlu0 %210
      %v212 = vsel %vm190, %v181, 0.0
      %213 = vadd.xlane.f32.xlu0 %v212
      %v214 = vpop.xlane.xlu0 %213
      %v215 = vsel %vm190, %v182, 0.0
      %216 = vadd.xlane.f32.xlu0 %v215
      %v217 = vpop.xlane.xlu0 %216
      %v218 = vsel %vm190, %v183, 0.0
      %219 = vadd.xlane.f32.xlu0 %v218
      %v220 = vpop.xlane.xlu0 %219
      %v221 = vsel %vm190, %v184, 0.0
      %222 = vadd.xlane.f32.xlu0 %v221
      %v223 = vpop.xlane.xlu0 %222
      %v224 = vsel %vm190, %v185, 0.0
      %225 = vadd.xlane.f32.xlu0 %v224
      %v226 = vpop.xlane.xlu0 %225
      %v227 = vsel %vm190, %v186, 0.0
      %228 = vadd.xlane.f32.xlu0 %v227
      %v229 = vpop.xlane.xlu0 %228
      %v230 = vsel %vm190, %v187, 0.0
      %231 = vadd.xlane.f32.xlu0 %v230
      %v232 = vpop.xlane.xlu0 %231
      %v233 = vsel %vm190, %v188, 0.0
      %234 = vadd.xlane.f32.xlu0 %v233
      %v235 = vpop.xlane.xlu0 %234
      %v236 = vsel %vm190, %v189, 0.0
      %237 = vadd.xlane.f32.xlu0 %v236
      %v238 = vpop.xlane.xlu0 %237
      %v239 = vrcp.pop 16.0
      %v240 = vmul.f32 16.0, %v239
      %v241 = vsub.f32 1.0, %v240
      %v242 = vmul.f32 %v239, %v241
      %v243 = vadd.f32 %v239, %v242
      %vm244 = vweird.f32 %v239
      %v245 = vsel %vm244, %v239, %v243
      %v246 = vmul.f32 %v193, %v245
      %v247 = vmul.f32 %v196, %v245
      %v248 = vmul.f32 %v199, %v245
      %v249 = vmul.f32 %v202, %v245
      %v250 = vmul.f32 %v205, %v245
      %v251 = vmul.f32 %v208, %v245
      %v252 = vmul.f32 %v211, %v245
      %v253 = vmul.f32 %v214, %v245
      %v254 = vmul.f32 %v217, %v245
      %v255 = vmul.f32 %v220, %v245
      %v256 = vmul.f32 %v223, %v245
      %v257 = vmul.f32 %v226, %v245
      %v258 = vmul.f32 %v229, %v245
      %v259 = vmul.f32 %v232, %v245
      %v260 = vmul.f32 %v235, %v245
      %v261 = vmul.f32 %v238, %v245
      %v262 = vsub.f32 %v174, %v246
      %v263 = vsub.f32 %v175, %v247
      %v264 = vsub.f32 %v176, %v248
      %v265 = vsub.f32 %v177, %v249
      %v266 = vsub.f32 %v178, %v250
      %v267 = vsub.f32 %v179, %v251
      %v268 = vsub.f32 %v180, %v252
      %v269 = vsub.f32 %v181, %v253
      %v270 = vsub.f32 %v182, %v254
      %v271 = vsub.f32 %v183, %v255
      %v272 = vsub.f32 %v184, %v256
      %v273 = vsub.f32 %v185, %v257
      %v274 = vsub.f32 %v186, %v258
      %v275 = vsub.f32 %v187, %v259
      %v276 = vsub.f32 %v188, %v260
      %v277 = vsub.f32 %v189, %v261
      %v278 = vmul.f32 %v262, %v262
      %v279 = vmul.f32 %v263, %v263
      %v280 = vmul.f32 %v264, %v264
      %v281 = vmul.f32 %v265, %v265
      %v282 = vmul.f32 %v266, %v266
      %v283 = vmul.f32 %v267, %v267
      %v284 = vmul.f32 %v268, %v268
      %v285 = vmul.f32 %v269, %v269
      %v286 = vmul.f32 %v270, %v270
      %v287 = vmul.f32 %v271, %v271
      %v288 = vmul.f32 %v272, %v272
      %v289 = vmul.f32 %v273, %v273
      %v290 = vmul.f32 %v274, %v274
      %v291 = vmul.f32 %v275, %v275
      %v292 = vmul.f32 %v276, %v276
      %v293 = vmul.f32 %v277, %v277
      %v294 = vsel %vm190, %v278, 0.0
      %295 = vadd.xlane.f32.xlu0 %v294
      %v296 = vpop.xlane.xlu0 %295
      %v297 = vsel %vm190, %v279, 0.0
      %298 = vadd.xlane.f32.xlu0 %v297
      %v299 = vpop.xlane.xlu0 %298
      %v300 = vsel %vm190, %v280, 0.0
      %301 = vadd.xlane.f32.xlu0 %v300
      %v302 = vpop.xlane.xlu0 %301
      %v303 = vsel %vm190, %v281, 0.0
      %304 = vadd.xlane.f32.xlu0 %v303
      %v305 = vpop.xlane.xlu0 %304
      %v306 = vsel %vm190, %v282, 0.0
      %307 = vadd.xlane.f32.xlu0 %v306
      %v308 = vpop.xlane.xlu0 %307
      %v309 = vsel %vm190, %v283, 0.0
      %310 = vadd.xlane.f32.xlu0 %v309
      %v311 = vpop.xlane.xlu0 %310
      %v312 = vsel %vm190, %v284, 0.0
      %313 = vadd.xlane.f32.xlu0 %v312
      %v314 = vpop.xlane.xlu0 %313
      %v315 = vsel %vm190, %v285, 0.0
      %316 = vadd.xlane.f32.xlu0 %v315
      %v317 = vpop.xlane.xlu0 %316
      %v318 = vsel %vm190, %v286, 0.0
      %319 = vadd.xlane.f32.xlu0 %v318
      %v320 = vpop.xlane.xlu0 %319
      %v321 = vsel %vm190, %v287, 0.0
      %322 = vadd.xlane.f32.xlu0 %v321
      %v323 = vpop.xlane.xlu0 %322
      %v324 = vsel %vm190, %v288, 0.0
      %325 = vadd.xlane.f32.xlu0 %v324
      %v326 = vpop.xlane.xlu0 %325
      %v327 = vsel %vm190, %v289, 0.0
      %328 = vadd.xlane.f32.xlu0 %v327
      %v329 = vpop.xlane.xlu0 %328
      %v330 = vsel %vm190, %v290, 0.0
      %331 = vadd.xlane.f32.xlu0 %v330
      %v332 = vpop.xlane.xlu0 %331
      %v333 = vsel %vm190, %v291, 0.0
      %334 = vadd.xlane.f32.xlu0 %v333
      %v335 = vpop.xlane.xlu0 %334
      %v336 = vsel %vm190, %v292, 0.0
      %337 = vadd.xlane.f32.xlu0 %v336
      %v338 = vpop.xlane.xlu0 %337
      %v339 = vsel %vm190, %v293, 0.0
      %340 = vadd.xlane.f32.xlu0 %v339
      %v341 = vpop.xlane.xlu0 %340
      %v342 = vmul.f32 %v296, %v245
      %v343 = vmul.f32 %v299, %v245
      %v344 = vmul.f32 %v302, %v245
      %v345 = vmul.f32 %v305, %v245
      %v346 = vmul.f32 %v308, %v245
      %v347 = vmul.f32 %v311, %v245
      %v348 = vmul.f32 %v314, %v245
      %v349 = vmul.f32 %v317, %v245
      %v350 = vmul.f32 %v320, %v245
      %v351 = vmul.f32 %v323, %v245
      %v352 = vmul.f32 %v326, %v245
      %v353 = vmul.f32 %v329, %v245
      %v354 = vmul.f32 %v332, %v245
      %v355 = vmul.f32 %v335, %v245
      %v356 = vmul.f32 %v338, %v245
      %v357 = vmul.f32 %v341, %v245
      %v358 = vadd.f32 %v342, 1e-05
      %v359 = vadd.f32 %v343, 1e-05
      %v360 = vadd.f32 %v344, 1e-05
      %v361 = vadd.f32 %v345, 1e-05
      %v362 = vadd.f32 %v346, 1e-05
      %v363 = vadd.f32 %v347, 1e-05
      %v364 = vadd.f32 %v348, 1e-05
      %v365 = vadd.f32 %v349, 1e-05
      %v366 = vadd.f32 %v350, 1e-05
      %v367 = vadd.f32 %v351, 1e-05
      %v368 = vadd.f32 %v352, 1e-05
      %v369 = vadd.f32 %v353, 1e-05
      %v370 = vadd.f32 %v354, 1e-05
      %v371 = vadd.f32 %v355, 1e-05
      %v372 = vadd.f32 %v356, 1e-05
      %v373 = vadd.f32 %v357, 1e-05
      %v374 = vrsqrt.pop %v358
      %v375 = vmul.f32 %v374, %v358
      %v376 = vmul.f32 %v375, %v374
      %v377 = vmul.f32 0.5, %v376
      %v378 = vsub.f32 1.5, %v377
      %v379 = vmul.f32 %v374, %v378
      %vm380 = vweird.f32 %v358
      %vm381 = vweird.f32 %v374
      %vm382 = vmor %vm380, %vm381
      %v383 = vsel %vm382, %v374, %v379
      %v384 = vrsqrt.pop %v359
      %v385 = vmul.f32 %v384, %v359
      %v386 = vmul.f32 %v385, %v384
      %v387 = vmul.f32 0.5, %v386
      %v388 = vsub.f32 1.5, %v387
      %v389 = vmul.f32 %v384, %v388
      %vm390 = vweird.f32 %v359
      %vm391 = vweird.f32 %v384
      %vm392 = vmor %vm390, %vm391
      %v393 = vsel %vm392, %v384, %v389
      %v394 = vrsqrt.pop %v360
      %v395 = vmul.f32 %v394, %v360
      %v396 = vmul.f32 %v395, %v394
      %v397 = vmul.f32 0.5, %v396
      %v398 = vsub.f32 1.5, %v397
      %v399 = vmul.f32 %v394, %v398
      %vm400 = vweird.f32 %v360
      %vm401 = vweird.f32 %v394
      %vm402 = vmor %vm400, %vm401
      %v403 = vsel %vm402, %v394, %v399
      %v404 = vrsqrt.pop %v361
      %v405 = vmul.f32 %v404, %v361
      %v406 = vmul.f32 %v405, %v404
      %v407 = vmul.f32 0.5, %v406
      %v408 = vsub.f32 1.5, %v407
      %v409 = vmul.f32 %v404, %v408
      %vm410 = vweird.f32 %v361
      %vm411 = vweird.f32 %v404
      %vm412 = vmor %vm410, %vm411
      %v413 = vsel %vm412, %v404, %v409
      %v414 = vrsqrt.pop %v362
      %v415 = vmul.f32 %v414, %v362
      %v416 = vmul.f32 %v415, %v414
      %v417 = vmul.f32 0.5, %v416
      %v418 = vsub.f32 1.5, %v417
      %v419 = vmul.f32 %v414, %v418
      %vm420 = vweird.f32 %v362
      %vm421 = vweird.f32 %v414
      %vm422 = vmor %vm420, %vm421
      %v423 = vsel %vm422, %v414, %v419
      %v424 = vrsqrt.pop %v363
      %v425 = vmul.f32 %v424, %v363
      %v426 = vmul.f32 %v425, %v424
      %v427 = vmul.f32 0.5, %v426
      %v428 = vsub.f32 1.5, %v427
      %v429 = vmul.f32 %v424, %v428
      %vm430 = vweird.f32 %v363
      %vm431 = vweird.f32 %v424
      %vm432 = vmor %vm430, %vm431
      %v433 = vsel %vm432, %v424, %v429
      %v434 = vrsqrt.pop %v364
      %v435 = vmul.f32 %v434, %v364
      %v436 = vmul.f32 %v435, %v434
      %v437 = vmul.f32 0.5, %v436
      %v438 = vsub.f32 1.5, %v437
      %v439 = vmul.f32 %v434, %v438
      %vm440 = vweird.f32 %v364
      %vm441 = vweird.f32 %v434
      %vm442 = vmor %vm440, %vm441
      %v443 = vsel %vm442, %v434, %v439
      %v444 = vrsqrt.pop %v365
      %v445 = vmul.f32 %v444, %v365
      %v446 = vmul.f32 %v445, %v444
      %v447 = vmul.f32 0.5, %v446
      %v448 = vsub.f32 1.5, %v447
      %v449 = vmul.f32 %v444, %v448
      %vm450 = vweird.f32 %v365
      %vm451 = vweird.f32 %v444
      %vm452 = vmor %vm450, %vm451
      %v453 = vsel %vm452, %v444, %v449
      %v454 = vrsqrt.pop %v366
      %v455 = vmul.f32 %v454, %v366
      %v456 = vmul.f32 %v455, %v454
      %v457 = vmul.f32 0.5, %v456
      %v458 = vsub.f32 1.5, %v457
      %v459 = vmul.f32 %v454, %v458
      %vm460 = vweird.f32 %v366
      %vm461 = vweird.f32 %v454
      %vm462 = vmor %vm460, %vm461
      %v463 = vsel %vm462, %v454, %v459
      %v464 = vrsqrt.pop %v367
      %v465 = vmul.f32 %v464, %v367
      %v466 = vmul.f32 %v465, %v464
      %v467 = vmul.f32 0.5, %v466
      %v468 = vsub.f32 1.5, %v467
      %v469 = vmul.f32 %v464, %v468
      %vm470 = vweird.f32 %v367
      %vm471 = vweird.f32 %v464
      %vm472 = vmor %vm470, %vm471
      %v473 = vsel %vm472, %v464, %v469
      %v474 = vrsqrt.pop %v368
      %v475 = vmul.f32 %v474, %v368
      %v476 = vmul.f32 %v475, %v474
      %v477 = vmul.f32 0.5, %v476
      %v478 = vsub.f32 1.5, %v477
      %v479 = vmul.f32 %v474, %v478
      %vm480 = vweird.f32 %v368
      %vm481 = vweird.f32 %v474
      %vm482 = vmor %vm480, %vm481
      %v483 = vsel %vm482, %v474, %v479
      %v484 = vrsqrt.pop %v369
      %v485 = vmul.f32 %v484, %v369
      %v486 = vmul.f32 %v485, %v484
      %v487 = vmul.f32 0.5, %v486
      %v488 = vsub.f32 1.5, %v487
      %v489 = vmul.f32 %v484, %v488
      %vm490 = vweird.f32 %v369
      %vm491 = vweird.f32 %v484
      %vm492 = vmor %vm490, %vm491
      %v493 = vsel %vm492, %v484, %v489
      %v494 = vrsqrt.pop %v370
      %v495 = vmul.f32 %v494, %v370
      %v496 = vmul.f32 %v495, %v494
      %v497 = vmul.f32 0.5, %v496
      %v498 = vsub.f32 1.5, %v497
      %v499 = vmul.f32 %v494, %v498
      %vm500 = vweird.f32 %v370
      %vm501 = vweird.f32 %v494
      %vm502 = vmor %vm500, %vm501
      %v503 = vsel %vm502, %v494, %v499
      %v504 = vrsqrt.pop %v371
      %v505 = vmul.f32 %v504, %v371
      %v506 = vmul.f32 %v505, %v504
      %v507 = vmul.f32 0.5, %v506
      %v508 = vsub.f32 1.5, %v507
      %v509 = vmul.f32 %v504, %v508
      %vm510 = vweird.f32 %v371
      %vm511 = vweird.f32 %v504
      %vm512 = vmor %vm510, %vm511
      %v513 = vsel %vm512, %v504, %v509
      %v514 = vrsqrt.pop %v372
      %v515 = vmul.f32 %v514, %v372
      %v516 = vmul.f32 %v515, %v514
      %v517 = vmul.f32 0.5, %v516
      %v518 = vsub.f32 1.5, %v517
      %v519 = vmul.f32 %v514, %v518
      %vm520 = vweird.f32 %v372
      %vm521 = vweird.f32 %v514
      %vm522 = vmor %vm520, %vm521
      %v523 = vsel %vm522, %v514, %v519
      %v524 = vrsqrt.pop %v373
      %v525 = vmul.f32 %v524, %v373
      %v526 = vmul.f32 %v525, %v524
      %v527 = vmul.f32 0.5, %v526
      %v528 = vsub.f32 1.5, %v527
      %v529 = vmul.f32 %v524, %v528
      %vm530 = vweird.f32 %v373
      %vm531 = vweird.f32 %v524
      %vm532 = vmor %vm530, %vm531
      %v533 = vsel %vm532, %v524, %v529
      %v534 = vmul.f32 %v262, %v383
      %v535 = vmul.f32 %v263, %v393
      %v536 = vmul.f32 %v264, %v403
      %v537 = vmul.f32 %v265, %v413
      %v538 = vmul.f32 %v266, %v423
      %v539 = vmul.f32 %v267, %v433
      %v540 = vmul.f32 %v268, %v443
      %v541 = vmul.f32 %v269, %v453
      %v542 = vmul.f32 %v270, %v463
      %v543 = vmul.f32 %v271, %v473
      %v544 = vmul.f32 %v272, %v483
      %v545 = vmul.f32 %v273, %v493
      %v546 = vmul.f32 %v274, %v503
      %v547 = vmul.f32 %v275, %v513
      %v548 = vmul.f32 %v276, %v523
      %v549 = vmul.f32 %v277, %v533
      %v550 = vld [vmem:[%s1] sm:$0x1]
      %v552 = vperm.slane %v550, 0
      %v554 = vmul.f32 %v534, %v552
      %v555 = vmul.f32 %v535, %v552
      %v556 = vmul.f32 %v536, %v552
      %v557 = vmul.f32 %v537, %v552
      %v558 = vmul.f32 %v538, %v552
      %v559 = vmul.f32 %v539, %v552
      %v560 = vmul.f32 %v540, %v552
      %v561 = vmul.f32 %v541, %v552
      %v562 = vmul.f32 %v542, %v552
      %v563 = vmul.f32 %v543, %v552
      %v564 = vmul.f32 %v544, %v552
      %v565 = vmul.f32 %v545, %v552
      %v566 = vmul.f32 %v546, %v552
      %v567 = vmul.f32 %v547, %v552
      %v568 = vmul.f32 %v548, %v552
      %v569 = vmul.f32 %v549, %v552
      %v570 = vld [vmem:[%s2] sm:$0x1]
      %v572 = vperm.slane %v570, 0
      %v574 = vadd.f32 %v554, %v572
      %v575 = vadd.f32 %v555, %v572
      %v576 = vadd.f32 %v556, %v572
      %v577 = vadd.f32 %v557, %v572
      %v578 = vadd.f32 %v558, %v572
      %v579 = vadd.f32 %v559, %v572
      %v580 = vadd.f32 %v560, %v572
      %v581 = vadd.f32 %v561, %v572
      %v582 = vadd.f32 %v562, %v572
      %v583 = vadd.f32 %v563, %v572
      %v584 = vadd.f32 %v564, %v572
      %v585 = vadd.f32 %v565, %v572
      %v586 = vadd.f32 %v566, %v572
      %v587 = vadd.f32 %v567, %v572
      %v588 = vadd.f32 %v568, %v572
      %v589 = vadd.f32 %v569, %v572
      %590 = vst.msk [vmem:[%s172] sm:$0xff] %vm190, %v574
      %591 = vst.msk [vmem:[%s172 + $0x8] sm:$0xff] %vm190, %v575
      %592 = vst.msk [vmem:[%s172 + $0x10] sm:$0xff] %vm190, %v576
      %593 = vst.msk [vmem:[%s172 + $0x18] sm:$0xff] %vm190, %v577
      %594 = vst.msk [vmem:[%s172 + $0x20] sm:$0xff] %vm190, %v578
      %595 = vst.msk [vmem:[%s172 + $0x28] sm:$0xff] %vm190, %v579
      %596 = vst.msk [vmem:[%s172 + $0x30] sm:$0xff] %vm190, %v580
      %597 = vst.msk [vmem:[%s172 + $0x38] sm:$0xff] %vm190, %v581
      %598 = vst.msk [vmem:[%s172 + $0x40] sm:$0xff] %vm190, %v582
      %599 = vst.msk [vmem:[%s172 + $0x48] sm:$0xff] %vm190, %v583
      %600 = vst.msk [vmem:[%s172 + $0x50] sm:$0xff] %vm190, %v584
      %601 = vst.msk [vmem:[%s172 + $0x58] sm:$0xff] %vm190, %v585
      %602 = vst.msk [vmem:[%s172 + $0x60] sm:$0xff] %vm190, %v586
      %603 = vst.msk [vmem:[%s172 + $0x68] sm:$0xff] %vm190, %v587
      %604 = vst.msk [vmem:[%s172 + $0x70] sm:$0xff] %vm190, %v588
      %605 = vst.msk [vmem:[%s172 + $0x78] sm:$0xff] %vm190, %v589
      %s606 = smul.u32 16, %s14
      %p607 = scmp.lt.s32.totalorder %s606, 63
      %s608 = scalar_select %p607, %s606, 63
      %s609 = smul.addr %s608, 8
      %s610 = scalar_lea.vmem %s3, %s609
      // Predicated region
      $region33: #{afno_block_2d.3} parent=31 // pred_check
        %p611 = pneg %p100
      $region34: #{afno_block_2d.3} parent=31 // pred_check_branch
        %613 = sbr.rel (%p611) target = $region36
      $region35: #{afno_block_2d.3} parent=31 // pred_region
        %s614 = smul.u32 16, %s14
      $region36: #{afno_block_2d.3} parent=31 // pred_fallthru
        _
    $region32: #{afno_block_2d.3} parent=5 // pred_fallthru
      _
    %p615 = scmp.le.s32.totalorder 2, %s9
    // Predicated region
    $region37: #{afno_block_2d.3} parent=5 // pred_check
      %p616 = pneg %p615
    $region38: #{afno_block_2d.3} parent=5 // pred_check_branch
      %618 = sbr.rel (%p616) target = $region40
    $region39: #{afno_block_2d.3} parent=5 // pred_region
      %s619 = ssub.s32 %s9, 2
      // Predicated region
      $region41: #{afno_block_2d.3} parent=39 // pred_check
        %p620 = pneg %p106
      $region42: #{afno_block_2d.3} parent=39 // pred_check_branch
        %622 = sbr.rel (%p620) target = $region44
      $region43: #{afno_block_2d.3} parent=39 // pred_region
        %s623 = smul.u32 16, %s15
        %p624 = scmp.lt.s32.totalorder %s623, 63
        %s625 = scalar_select %p624, %s623, 63
        %s626 = smul.addr %s625, 8
        %s627 = scalar_lea.vmem %s3, %s626
      $region44: #{afno_block_2d.3} parent=39 // pred_fallthru
        _
    $region40: #{afno_block_2d.3} parent=5 // pred_fallthru
      _
  $region6: #{afno_block_2d.3} parent=0 // loop_footer
    %s13 = sadd.s32 1, %s9
  $region7: #{afno_block_2d.3} parent=0 // loop_footer_branch
    %8 = sbr.rel target = $region3
  $region8: #{afno_block_2d.3} parent=0 // loop_exit
    _

// kernel: afno_block_2d.4
$region0: #{afno_block_2d.4}
  #allocation0 [shape = 'u32[]', space=smem, size = 0x4, offset = 0x4, fixed_abs, tag = 'smem constant byte address 0x4 - core index']
  #allocation1 [shape = 'u32[72,128]{1,0:T(1,128)}', space=vmem, size = 0x9000, scoped, tag = 'internal scratch']
  %s0 = inlined_call_operand.vmem [shape: bf16[288,16], index: 0, kind: input, shape index: {}]
  %s1 = inlined_call_operand.vmem [shape: bf16[288,16], index: 1, kind: input, shape index: {}]
  %s2 = inlined_call_operand.vmem [shape: bf16[16,32], index: 2, kind: input, shape index: {}]
  %s3 = inlined_call_operand.vmem [shape: bf16[16,32], index: 3, kind: input, shape index: {}]
  %s4 = inlined_call_operand.vmem [shape: f32[1,32], index: 4, kind: input, shape index: {}]
  %s5 = inlined_call_operand.vmem [shape: bf16[32,32], index: 5, kind: input, shape index: {}]
  %s6 = inlined_call_operand.vmem [shape: f32[1,32], index: 6, kind: input, shape index: {}]
  %s7 = inlined_call_operand.vmem [shape: f32[288,16], index: 7, kind: output, shape index: {0}]
  %s8 = inlined_call_operand.vmem [shape: f32[288,16], index: 8, kind: output, shape index: {1}]
  %9 = xla_tuple %s7, %s8
  %s10 = sld [smem:[#allocation0]]
  $region69: #{afno_block_2d.4} parent=0
    _
  %s12 = ssub.s32 1, %s10
  %s13 = scalar_select 0, %s12, %s10
  loop: start=0, step=1, limit=6
  $region2: #{afno_block_2d.4} parent=0 // loop_pre_header
    _
  $region3: #{afno_block_2d.4} parent=0 // loop_header
    %s15 = sphi 0, %s19
    %p16 = scmp.ge.s32.totalorder %s15, 6
    %s25 = sphi 0, %s27
    %s28 = sphi 0, %s25
    %s29 = sphi 0, %s28
    %s45 = sphi 0, %s29
    %s51 = sphi 0, %s53
    %s54 = sphi 0, %s51
    %s55 = sphi 0, %s54
    %s71 = sphi 0, %s55
    %s75 = sphi 0, %s75
    %s77 = sphi 0, %s75
    %s78 = sphi 0, %s77
    %s92 = sphi 0, %s78
    %s96 = sphi 0, %s96
    %s98 = sphi 0, %s96
    %s99 = sphi 0, %s98
    %s113 = sphi 0, %s99
    %s117 = sphi 0, %s117
    %s119 = sphi 0, %s117
    %s120 = sphi 0, %s119
    %s134 = sphi 0, %s120
    %s138 = sphi 0, %s138
    %s140 = sphi 0, %s138
    %s141 = sphi 0, %s140
    %s155 = sphi 0, %s141
    %s159 = sphi 0, %s159
    %s161 = sphi 0, %s159
    %s162 = sphi 0, %s161
    %s176 = sphi 0, %s162
    %s182 = sphi 0, %s184
    %s185 = sphi 0, %s182
    %s186 = sphi 0, %s185
    %s202 = sphi 0, %s186
    %s208 = sphi 0, %s210
    %s211 = sphi 0, %s208
    %s212 = sphi 0, %s211
    %s228 = sphi 0, %s212
  $region4: #{afno_block_2d.4} parent=0 // loop_header_branch
    %18 = sbr.rel (%p16) target = $region8
  $region5: #{afno_block_2d.4} parent=0 // loop_body
    %s20 = ssub.s32 %s15, 1
    %s21 = ssub.s32 %s15, 2
    %s22 = sadd.s32 %s15, 1
    %s23 = ssub.s32 %s15, %s22
    %p24 = scmp.eq.s32.totalorder %s23, 0
    %s26 = sadd.s32 %s25, 1
    %s27 = scalar_select %p24, %s25, %s26
    %p30 = pneg %p24
    %p31 = scmp.eq.s32.totalorder %s15, 3
    %p32 = por %p30, %p31
    %p33 = scmp.ne.s32.totalorder %s25, %s28
    %p34 = scmp.eq.s32.totalorder %s15, 0
    %p35 = por %p33, %p34
    %p36 = scmp.ne.s32.totalorder %s25, %s28
    %p37 = scmp.eq.s32.totalorder %s20, 3
    %p38 = por %p36, %p37
    %p39 = scmp.ne.s32.totalorder %s28, %s29
    %p40 = scmp.eq.s32.totalorder %s20, 0
    %p41 = por %p39, %p40
    %p42 = scmp.ne.s32.totalorder %s28, %s29
    %p43 = scmp.eq.s32.totalorder %s21, 3
    %p44 = por %p42, %p43
    %p46 = scmp.ne.s32.totalorder %s29, %s45
    %p47 = scmp.eq.s32.totalorder %s21, 0
    %p48 = por %p46, %p47
    %s49 = ssub.s32 %s15, %s22
    %p50 = scmp.eq.s32.totalorder %s49, 0
    %s52 = sadd.s32 %s51, 1
    %s53 = scalar_select %p50, %s51, %s52
    %p56 = pneg %p50
    %p57 = scmp.eq.s32.totalorder %s15, 3
    %p58 = por %p56, %p57
    %p59 = scmp.ne.s32.totalorder %s51, %s54
    %p60 = scmp.eq.s32.totalorder %s15, 0
    %p61 = por %p59, %p60
    %p62 = scmp.ne.s32.totalorder %s51, %s54
    %p63 = scmp.eq.s32.totalorder %s20, 3
    %p64 = por %p62, %p63
    %p65 = scmp.ne.s32.totalorder %s54, %s55
    %p66 = scmp.eq.s32.totalorder %s20, 0
    %p67 = por %p65, %p66
    %p68 = scmp.ne.s32.totalorder %s54, %s55
    %p69 = scmp.eq.s32.totalorder %s21, 3
    %p70 = por %p68, %p69
    %p72 = scmp.ne.s32.totalorder %s55, %s71
    %p73 = scmp.eq.s32.totalorder %s21, 0
    %p74 = por %p72, %p73
    %s76 = sadd.s32 %s75, 1
    %p79 = scmp.eq.s32.totalorder %s15, 3
    %p80 = scmp.ne.s32.totalorder %s75, %s77
    %p81 = scmp.eq.s32.totalorder %s15, 0
    %p82 = por %p80, %p81
    %p83 = scmp.ne.s32.totalorder %s75, %s77
    %p84 = scmp.eq.s32.totalorder %s20, 3
    %p85 = por %p83, %p84
    %p86 = scmp.ne.s32.totalorder %s77, %s78
    %p87 = scmp.eq.s32.totalorder %s20, 0
    %p88 = por %p86, %p87
    %p89 = scmp.ne.s32.totalorder %s77, %s78
    %p90 = scmp.eq.s32.totalorder %s21, 3
    %p91 = por %p89, %p90
    %p93 = scmp.ne.s32.totalorder %s78, %s92
    %p94 = scmp.eq.s32.totalorder %s21, 0
    %p95 = por %p93, %p94
    %s97 = sadd.s32 %s96, 1
    %p100 = scmp.eq.s32.totalorder %s15, 3
    %p101 = scmp.ne.s32.totalorder %s96, %s98
    %p102 = scmp.eq.s32.totalorder %s15, 0
    %p103 = por %p101, %p102
    %p104 = scmp.ne.s32.totalorder %s96, %s98
    %p105 = scmp.eq.s32.totalorder %s20, 3
    %p106 = por %p104, %p105
    %p107 = scmp.ne.s32.totalorder %s98, %s99
    %p108 = scmp.eq.s32.totalorder %s20, 0
    %p109 = por %p107, %p108
    %p110 = scmp.ne.s32.totalorder %s98, %s99
    %p111 = scmp.eq.s32.totalorder %s21, 3
    %p112 = por %p110, %p111
    %p114 = scmp.ne.s32.totalorder %s99, %s113
    %p115 = scmp.eq.s32.totalorder %s21, 0
    %p116 = por %p114, %p115
    %s118 = sadd.s32 %s117, 1
    %p121 = scmp.eq.s32.totalorder %s15, 3
    %p122 = scmp.ne.s32.totalorder %s117, %s119
    %p123 = scmp.eq.s32.totalorder %s15, 0
    %p124 = por %p122, %p123
    %p125 = scmp.ne.s32.totalorder %s117, %s119
    %p126 = scmp.eq.s32.totalorder %s20, 3
    %p127 = por %p125, %p126
    %p128 = scmp.ne.s32.totalorder %s119, %s120
    %p129 = scmp.eq.s32.totalorder %s20, 0
    %p130 = por %p128, %p129
    %p131 = scmp.ne.s32.totalorder %s119, %s120
    %p132 = scmp.eq.s32.totalorder %s21, 3
    %p133 = por %p131, %p132
    %p135 = scmp.ne.s32.totalorder %s120, %s134
    %p136 = scmp.eq.s32.totalorder %s21, 0
    %p137 = por %p135, %p136
    %s139 = sadd.s32 %s138, 1
    %p142 = scmp.eq.s32.totalorder %s15, 3
    %p143 = scmp.ne.s32.totalorder %s138, %s140
    %p144 = scmp.eq.s32.totalorder %s15, 0
    %p145 = por %p143, %p144
    %p146 = scmp.ne.s32.totalorder %s138, %s140
    %p147 = scmp.eq.s32.totalorder %s20, 3
    %p148 = por %p146, %p147
    %p149 = scmp.ne.s32.totalorder %s140, %s141
    %p150 = scmp.eq.s32.totalorder %s20, 0
    %p151 = por %p149, %p150
    %p152 = scmp.ne.s32.totalorder %s140, %s141
    %p153 = scmp.eq.s32.totalorder %s21, 3
    %p154 = por %p152, %p153
    %p156 = scmp.ne.s32.totalorder %s141, %s155
    %p157 = scmp.eq.s32.totalorder %s21, 0
    %p158 = por %p156, %p157
    %s160 = sadd.s32 %s159, 1
    %p163 = scmp.eq.s32.totalorder %s15, 3
    %p164 = scmp.ne.s32.totalorder %s159, %s161
    %p165 = scmp.eq.s32.totalorder %s15, 0
    %p166 = por %p164, %p165
    %p167 = scmp.ne.s32.totalorder %s159, %s161
    %p168 = scmp.eq.s32.totalorder %s20, 3
    %p169 = por %p167, %p168
    %p170 = scmp.ne.s32.totalorder %s161, %s162
    %p171 = scmp.eq.s32.totalorder %s20, 0
    %p172 = por %p170, %p171
    %p173 = scmp.ne.s32.totalorder %s161, %s162
    %p174 = scmp.eq.s32.totalorder %s21, 3
    %p175 = por %p173, %p174
    %p177 = scmp.ne.s32.totalorder %s162, %s176
    %p178 = scmp.eq.s32.totalorder %s21, 0
    %p179 = por %p177, %p178
    %s180 = ssub.s32 %s15, %s22
    %p181 = scmp.eq.s32.totalorder %s180, 0
    %s183 = sadd.s32 %s182, 1
    %s184 = scalar_select %p181, %s182, %s183
    %p187 = pneg %p181
    %p188 = scmp.eq.s32.totalorder %s15, 3
    %p189 = por %p187, %p188
    %p190 = scmp.ne.s32.totalorder %s182, %s185
    %p191 = scmp.eq.s32.totalorder %s15, 0
    %p192 = por %p190, %p191
    %p193 = scmp.ne.s32.totalorder %s182, %s185
    %p194 = scmp.eq.s32.totalorder %s20, 3
    %p195 = por %p193, %p194
    %p196 = scmp.ne.s32.totalorder %s185, %s186
    %p197 = scmp.eq.s32.totalorder %s20, 0
    %p198 = por %p196, %p197
    %p199 = scmp.ne.s32.totalorder %s185, %s186
    %p200 = scmp.eq.s32.totalorder %s21, 3
    %p201 = por %p199, %p200
    %p203 = scmp.ne.s32.totalorder %s186, %s202
    %p204 = scmp.eq.s32.totalorder %s21, 0
    %p205 = por %p203, %p204
    %s206 = ssub.s32 %s15, %s22
    %p207 = scmp.eq.s32.totalorder %s206, 0
    %s209 = sadd.s32 %s208, 1
    %s210 = scalar_select %p207, %s208, %s209
    %p213 = pneg %p207
    %p214 = scmp.eq.s32.totalorder %s15, 3
    %p215 = por %p213, %p214
    %p216 = scmp.ne.s32.totalorder %s208, %s211
    %p217 = scmp.eq.s32.totalorder %s15, 0
    %p218 = por %p216, %p217
    %p219 = scmp.ne.s32.totalorder %s208, %s211
    %p220 = scmp.eq.s32.totalorder %s20, 3
    %p221 = por %p219, %p220
    %p222 = scmp.ne.s32.totalorder %s211, %s212
    %p223 = scmp.eq.s32.totalorder %s20, 0
    %p224 = por %p222, %p223
    %p225 = scmp.ne.s32.totalorder %s211, %s212
    %p226 = scmp.eq.s32.totalorder %s21, 3
    %p227 = por %p225, %p226
    %p229 = scmp.ne.s32.totalorder %s212, %s228
    %p230 = scmp.eq.s32.totalorder %s21, 0
    %p231 = por %p229, %p230
    %p232 = scmp.le.s32.totalorder 1, %s15
    %p233 = scmp.lt.s32.totalorder %s15, 5
    %p234 = pnand %p232, %p233
    %p235 = pneg %p234
    // Predicated region
    $region9: #{afno_block_2d.4} parent=5 // pred_check
      _
    $region10: #{afno_block_2d.4} parent=5 // pred_check_branch
      %237 = sbr.rel (%p234) target = $region12
    $region11: #{afno_block_2d.4} parent=5 // pred_region
      %s238 = ssub.s32 %s15, 1
      // Predicated region
      $region13: #{afno_block_2d.4} parent=11 // pred_check
        %p239 = pneg %p88
      $region14: #{afno_block_2d.4} parent=11 // pred_check_branch
        %241 = sbr.rel (%p239) target = $region16
      $region15: #{afno_block_2d.4} parent=11 // pred_region
        _
      $region16: #{afno_block_2d.4} parent=11 // pred_fallthru
        _
      // Predicated region
      $region17: #{afno_block_2d.4} parent=11 // pred_check
        %p242 = pneg %p109
      $region18: #{afno_block_2d.4} parent=11 // pred_check_branch
        %244 = sbr.rel (%p242) target = $region20
      $region19: #{afno_block_2d.4} parent=11 // pred_region
        _
      $region20: #{afno_block_2d.4} parent=11 // pred_fallthru
        _
      // Predicated region
      $region21: #{afno_block_2d.4} parent=11 // pred_check
        %p245 = pneg %p130
      $region22: #{afno_block_2d.4} parent=11 // pred_check_branch
        %247 = sbr.rel (%p245) target = $region24
      $region23: #{afno_block_2d.4} parent=11 // pred_region
        _
      $region24: #{afno_block_2d.4} parent=11 // pred_fallthru
        _
      // Predicated region
      $region25: #{afno_block_2d.4} parent=11 // pred_check
        %p248 = pneg %p151
      $region26: #{afno_block_2d.4} parent=11 // pred_check_branch
        %250 = sbr.rel (%p248) target = $region28
      $region27: #{afno_block_2d.4} parent=11 // pred_region
        _
      $region28: #{afno_block_2d.4} parent=11 // pred_fallthru
        _
      // Predicated region
      $region29: #{afno_block_2d.4} parent=11 // pred_check
        %p251 = pneg %p172
      $region30: #{afno_block_2d.4} parent=11 // pred_check_branch
        %253 = sbr.rel (%p251) target = $region32
      $region31: #{afno_block_2d.4} parent=11 // pred_region
        _
      $region32: #{afno_block_2d.4} parent=11 // pred_fallthru
        _
    $region12: #{afno_block_2d.4} parent=5 // pred_fallthru
      _
    %p254 = scmp.lt.s32.totalorder %s15, 4
    // Predicated region
    $region33: #{afno_block_2d.4} parent=5 // pred_check
      %p255 = pneg %p254
    $region34: #{afno_block_2d.4} parent=5 // pred_check_branch
      %257 = sbr.rel (%p255) target = $region36
    $region35: #{afno_block_2d.4} parent=5 // pred_region
      // Predicated region
      $region37: #{afno_block_2d.4} parent=35 // pred_check
        %p258 = pneg %p35
      $region38: #{afno_block_2d.4} parent=35 // pred_check_branch
        %260 = sbr.rel (%p258) target = $region40
      $region39: #{afno_block_2d.4} parent=35 // pred_region
        %s261 = smul.u32 9, %s15
        %p262 = scmp.lt.s32.totalorder %s261, 35
        %s263 = scalar_select %p262, %s261, 35
        %s264 = smul.addr %s263, 4
        %s265 = scalar_lea.vmem %s0, %s264
        %s266 = smul.u32 9, %s15
      $region40: #{afno_block_2d.4} parent=35 // pred_fallthru
        _
      // Predicated region
      $region41: #{afno_block_2d.4} parent=35 // pred_check
        %p267 = pneg %p61
      $region42: #{afno_block_2d.4} parent=35 // pred_check_branch
        %269 = sbr.rel (%p267) target = $region44
      $region43: #{afno_block_2d.4} parent=35 // pred_region
        %s270 = smul.u32 9, %s15
        %p271 = scmp.lt.s32.totalorder %s270, 35
        %s272 = scalar_select %p271, %s270, 35
        %s273 = smul.addr %s272, 4
        %s274 = scalar_lea.vmem %s1, %s273
        %s275 = smul.u32 9, %s15
      $region44: #{afno_block_2d.4} parent=35 // pred_fallthru
        _
    $region36: #{afno_block_2d.4} parent=5 // pred_fallthru
      _
    %p276 = scmp.le.s32.totalorder 1, %s15
    %p277 = scmp.lt.s32.totalorder %s15, 5
    %p278 = pnand %p276, %p277
    %p279 = pneg %p278
    // Predicated region
    $region45: #{afno_block_2d.4} parent=5 // pred_check
      _
    $region46: #{afno_block_2d.4} parent=5 // pred_check_branch
      %281 = sbr.rel (%p278) target = $region48
    $region47: #{afno_block_2d.4} parent=5 // pred_region
      %s282 = ssub.s32 %s15, 1
      %s283 = smul.u32 9, %s20
      %p284 = scmp.lt.s32.totalorder %s283, 35
      %s285 = scalar_select %p284, %s283, 35
      %s286 = smul.addr %s285, 4
      %s287 = scalar_lea.vmem %s0, %s286
      %p288 = pneg %p41
      %p289 = pneg %p38
      %s290 = smul.u32 9, %s20
      %p291 = scmp.lt.s32.totalorder %s290, 35
      %s292 = scalar_select %p291, %s290, 35
      %s293 = smul.addr %s292, 4
      %s294 = scalar_lea.vmem %s1, %s293
      %p295 = pneg %p67
      %p296 = pneg %p64
      %p297 = pneg %p88
      %p298 = pneg %p85
      %p299 = pneg %p109
      %p300 = pneg %p106
      %p301 = pneg %p130
      %p302 = pneg %p127
      %p303 = pneg %p151
      %p304 = pneg %p148
      %p305 = pneg %p172
      %p306 = pneg %p169
      %p307 = pneg %p198
      %p308 = pneg %p195
      %s309 = smul.u32 9, %s20
      %p310 = scmp.lt.s32.totalorder %s309, 35
      %s311 = scalar_select %p310, %s309, 35
      %s312 = smul.addr %s311, 8
      %s313 = scalar_lea.vmem %s7, %s312
      %p314 = pneg %p224
      %p315 = pneg %p221
      %s316 = smul.u32 9, %s20
      %p317 = scmp.lt.s32.totalorder %s316, 35
      %s318 = scalar_select %p317, %s316, 35
      %s319 = smul.addr %s318, 8
      %s320 = scalar_lea.vmem %s8, %s319
      %s321 = smul.u32 9, %s20
      %p322 = scmp.lt.s32.totalorder %s321, 35
      %s323 = scalar_select %p322, %s321, 35
      %s324 = smul.addr %s323, 4
      %s325 = scalar_lea.vmem %s0, %s324
      %s326 = smul.u32 9, %s20
      %s327 = smul.u32 9, %s20
      %p328 = scmp.lt.s32.totalorder %s327, 35
      %s329 = scalar_select %p328, %s327, 35
      %s330 = smul.addr %s329, 4
      %s331 = scalar_lea.vmem %s1, %s330
      %s332 = smul.u32 9, %s20
      %s333 = smul.u32 9, %s20
      %p334 = scmp.lt.s32.totalorder %s333, 35
      %s335 = scalar_select %p334, %s333, 35
      %s336 = smul.addr %s335, 8
      %s337 = scalar_lea.vmem %s7, %s336
      %s338 = smul.u32 9, %s20
      %s339 = smul.u32 9, %s20
      %p340 = scmp.lt.s32.totalorder %s339, 35
      %s341 = scalar_select %p340, %s339, 35
      %s342 = smul.addr %s341, 8
      %s343 = scalar_lea.vmem %s8, %s342
      %s344 = smul.u32 9, %s20
      %v346 = vld [vmem:[%s325] sm:$0xf]
      %v347 = vld [vmem:[%s325 + $0x4] sm:$0xf]
      %v348 = vld [vmem:[%s325 + $0x8] sm:$0xf]
      %v349 = vld [vmem:[%s325 + $0xc] sm:$0xf]
      %v350 = vld [vmem:[%s325 + $0x10] sm:$0xf]
      %v351 = vld [vmem:[%s325 + $0x14] sm:$0xf]
      %v352 = vld [vmem:[%s325 + $0x18] sm:$0xf]
      %v353 = vld [vmem:[%s325 + $0x1c] sm:$0xf]
      %v354 = vld [vmem:[%s325 + $0x20] sm:$0xf]
      %v355 = vld [vmem:[%s331] sm:$0xf]
      %v356 = vld [vmem:[%s331 + $0x4] sm:$0xf]
      %v357 = vld [vmem:[%s331 + $0x8] sm:$0xf]
      %v358 = vld [vmem:[%s331 + $0xc] sm:$0xf]
      %v359 = vld [vmem:[%s331 + $0x10] sm:$0xf]
      %v360 = vld [vmem:[%s331 + $0x14] sm:$0xf]
      %v361 = vld [vmem:[%s331 + $0x18] sm:$0xf]
      %v362 = vld [vmem:[%s331 + $0x1c] sm:$0xf]
      %v363 = vld [vmem:[%s331 + $0x20] sm:$0xf]
      %v364 = vld [vmem:[%s2] sm:$0xf]
      %v365 = vld [vmem:[%s2 + $0x4] sm:$0xf]
      %v366 = vld [vmem:[%s3] sm:$0xf]
      %v367 = vld [vmem:[%s3 + $0x4] sm:$0xf]
      %v377 = vunpack.c.l.b16 %v355
      %v378 = vunpack.c.l.b16 %v356
      %v379 = vunpack.c.l.b16 %v357
      %v380 = vunpack.c.l.b16 %v358
      %v381 = vunpack.c.l.b16 %v359
      %v382 = vunpack.c.l.b16 %v360
      %v383 = vunpack.c.l.b16 %v361
      %v384 = vunpack.c.l.b16 %v362
      %v385 = vunpack.c.l.b16 %v363
      %v386 = vpack.c.b16 %v378, %v377
      %v387 = vpack.c.b16 %v380, %v379
      %v388 = vpack.c.b16 %v382, %v381
      %v389 = vpack.c.b16 %v384, %v383
      %v390 = vpack.c.b16 %v385, %v385
      %v393 = vunpack.c.l.b16 %v366
      %v394 = vunpack.c.l.b16 %v367
      %v395 = vpack.c.b16 %v394, %v393
      %vm397 = vcmask 130048
      %v399 = vsel %vm397, %v386, 0
      %v402 = vsel %vm397, %v387, 0
      %v405 = vsel %vm397, %v388, 0
      %v408 = vsel %vm397, %v389, 0
      %v411 = vsel %vm397, %v390, 0
      %413 = vmatpush.bf16.msra.mxu0 0
      %414 = vmatpush.bf16.msra.mxu0 0
      %415 = vmatpush.bf16.msra.mxu0 0
      %416 = vmatpush.bf16.msra.mxu0 0
      %417 = vmatpush.bf16.msra.mxu0 0
      %418 = vmatpush.bf16.msra.mxu0 0
      %419 = vmatpush.bf16.msra.mxu0 0
      %420 = vmatpush.bf16.msra.mxu0 %v395
      %421 = vmatmul.bf16.gmra.mxu0 %v399
      %v422 = vpop.f32.mrf.mxu0
      %v423 = vadd.f32 0.0, %v422
      %v424 = vpop.f32.mrf.mxu0
      %v425 = vadd.f32 0.0, %v424
      %426 = vmatmul.bf16.gmra.mxu0 %v402
      %v427 = vpop.f32.mrf.mxu0
      %v428 = vadd.f32 0.0, %v427
      %v429 = vpop.f32.mrf.mxu0
      %v430 = vadd.f32 0.0, %v429
      %431 = vmatmul.bf16.gmra.mxu0 %v405
      %v432 = vpop.f32.mrf.mxu0
      %v433 = vadd.f32 0.0, %v432
      %v434 = vpop.f32.mrf.mxu0
      %v435 = vadd.f32 0.0, %v434
      %436 = vmatmul.bf16.gmra.mxu0 %v408
      %v437 = vpop.f32.mrf.mxu0
      %v438 = vadd.f32 0.0, %v437
      %v439 = vpop.f32.mrf.mxu0
      %v440 = vadd.f32 0.0, %v439
      %441 = vmatmul.bf16.gmra.mxu0 %v411
      %v442 = vpop.f32.mrf.mxu0
      %v443 = vadd.f32 0.0, %v442
      %v444 = vpop.f32.mrf.mxu0
      %445 = vdwg.mxu0
      %v455 = vunpack.c.l.b16 %v346
      %v456 = vunpack.c.l.b16 %v347
      %v457 = vunpack.c.l.b16 %v348
      %v458 = vunpack.c.l.b16 %v349
      %v459 = vunpack.c.l.b16 %v350
      %v460 = vunpack.c.l.b16 %v351
      %v461 = vunpack.c.l.b16 %v352
      %v462 = vunpack.c.l.b16 %v353
      %v463 = vunpack.c.l.b16 %v354
      %v464 = vpack.c.b16 %v456, %v455
      %v465 = vpack.c.b16 %v458, %v457
      %v466 = vpack.c.b16 %v460, %v459
      %v467 = vpack.c.b16 %v462, %v461
      %v468 = vpack.c.b16 %v463, %v463
      %v471 = vunpack.c.l.b16 %v364
      %v472 = vunpack.c.l.b16 %v365
      %v473 = vpack.c.b16 %v472, %v471
      %v476 = vsel %vm397, %v464, 0
      %v479 = vsel %vm397, %v465, 0
      %v482 = vsel %vm397, %v466, 0
      %v485 = vsel %vm397, %v467, 0
      %v488 = vsel %vm397, %v468, 0
      %490 = vmatpush.bf16.msra.mxu0 0
      %491 = vmatpush.bf16.msra.mxu0 0
      %492 = vmatpush.bf16.msra.mxu0 0
      %493 = vmatpush.bf16.msra.mxu0 0
      %494 = vmatpush.bf16.msra.mxu0 0
      %495 = vmatpush.bf16.msra.mxu0 0
      %496 = vmatpush.bf16.msra.mxu0 0
      %497 = vmatpush.bf16.msra.mxu0 %v473
      %498 = vmatmul.bf16.gmra.mxu0 %v476
      %v499 = vpop.f32.mrf.mxu0
      %v500 = vadd.f32 %v423, %v499
      %v501 = vpop.f32.mrf.mxu0
      %v502 = vadd.f32 %v425, %v501
      %503 = vmatmul.bf16.gmra.mxu0 %v479
      %v504 = vpop.f32.mrf.mxu0
      %v505 = vadd.f32 %v428, %v504
      %v506 = vpop.f32.mrf.mxu0
      %v507 = vadd.f32 %v430, %v506
      %508 = vmatmul.bf16.gmra.mxu0 %v482
      %v509 = vpop.f32.mrf.mxu0
      %v510 = vadd.f32 %v433, %v509
      %v511 = vpop.f32.mrf.mxu0
      %v512 = vadd.f32 %v435, %v511
      %513 = vmatmul.bf16.gmra.mxu0 %v485
      %v514 = vpop.f32.mrf.mxu0
      %v515 = vadd.f32 %v438, %v514
      %v516 = vpop.f32.mrf.mxu0
      %v517 = vadd.f32 %v440, %v516
      %518 = vmatmul.bf16.gmra.mxu0 %v488
      %v519 = vpop.f32.mrf.mxu0
      %v520 = vadd.f32 %v443, %v519
      %v521 = vpop.f32.mrf.mxu0
      %522 = vdwg.mxu0
      %v523 = vld [vmem:[%s4] sm:$0x1]
      %v525 = vperm.slane %v523, 0
      %v527 = vadd.f32 %v500, %v525
      %v528 = vadd.f32 %v502, %v525
      %v529 = vadd.f32 %v505, %v525
      %v530 = vadd.f32 %v507, %v525
      %v531 = vadd.f32 %v510, %v525
      %v532 = vadd.f32 %v512, %v525
      %v533 = vadd.f32 %v515, %v525
      %v534 = vadd.f32 %v517, %v525
      %v535 = vadd.f32 %v520, %v525
      %v536 = vmax.f32 %v527, 0.0
      %v537 = vmax.f32 %v528, 0.0
      %v538 = vmax.f32 %v529, 0.0
      %v539 = vmax.f32 %v530, 0.0
      %v540 = vmax.f32 %v531, 0.0
      %v541 = vmax.f32 %v532, 0.0
      %v542 = vmax.f32 %v533, 0.0
      %v543 = vmax.f32 %v534, 0.0
      %v544 = vmax.f32 %v535, 0.0
      %v545 = vpack.c.bf16 %v537, %v536
      %v546 = vpack.c.bf16 %v539, %v538
      %v547 = vpack.c.bf16 %v541, %v540
      %v548 = vpack.c.bf16 %v543, %v542
      %v549 = vpack.c.bf16 %v544, %v544
      %v550 = vld [vmem:[%s5] sm:$0xf]
      %v551 = vld [vmem:[%s5 + $0x4] sm:$0xf]
      %v552 = vld [vmem:[%s5 + $0x8] sm:$0xf]
      %v553 = vld [vmem:[%s5 + $0xc] sm:$0xf]
      %v554 = vld [vmem:[%s6] sm:$0x1]
      %v556 = vperm.slane %v554, 0
      %v562 = vunpack.c.l.b16 %v550
      %v563 = vunpack.c.l.b16 %v551
      %v564 = vunpack.c.l.b16 %v552
      %v565 = vunpack.c.l.b16 %v553
      %v566 = vpack.c.b16 %v563, %v562
      %v567 = vpack.c.b16 %v565, %v564
      %vm570 = vcmask 261120
      %v572 = vsel %vm570, %v545, 0
      %v575 = vsel %vm570, %v546, 0
      %v578 = vsel %vm570, %v547, 0
      %v581 = vsel %vm570, %v548, 0
      %v584 = vsel %vm570, %v549, 0
      %586 = vmatpush.bf16.msra.mxu0 0
      %587 = vmatpush.bf16.msra.mxu0 0
      %588 = vmatpush.bf16.msra.mxu0 0
      %589 = vmatpush.bf16.msra.mxu0 0
      %590 = vmatpush.bf16.msra.mxu0 0
      %591 = vmatpush.bf16.msra.mxu0 0
      %592 = vmatpush.bf16.msra.mxu0 %v567
      %593 = vmatpush.bf16.msra.mxu0 %v566
      %594 = vmatmul.bf16.gmra.mxu0 %v572
      %v595 = vpop.f32.mrf.mxu0
      %v596 = vadd.f32 %v556, %v595
      %v597 = vpop.f32.mrf.mxu0
      %v598 = vadd.f32 %v556, %v597
      %599 = vmatmul.bf16.gmra.mxu0 %v575
      %v600 = vpop.f32.mrf.mxu0
      %v601 = vadd.f32 %v556, %v600
      %v602 = vpop.f32.mrf.mxu0
      %v603 = vadd.f32 %v556, %v602
      %604 = vmatmul.bf16.gmra.mxu0 %v578
      %v605 = vpop.f32.mrf.mxu0
      %v606 = vadd.f32 %v556, %v605
      %v607 = vpop.f32.mrf.mxu0
      %v608 = vadd.f32 %v556, %v607
      %609 = vmatmul.bf16.gmra.mxu0 %v581
      %v610 = vpop.f32.mrf.mxu0
      %v611 = vadd.f32 %v556, %v610
      %v612 = vpop.f32.mrf.mxu0
      %v613 = vadd.f32 %v556, %v612
      %614 = vmatmul.bf16.gmra.mxu0 %v584
      %v615 = vpop.f32.mrf.mxu0
      %v616 = vadd.f32 %v556, %v615
      %v617 = vpop.f32.mrf.mxu0
      %618 = vdwg.mxu0
      %v619 = vmax.f32 %v596, -0.01
      %v620 = vmax.f32 %v598, -0.01
      %v621 = vmax.f32 %v601, -0.01
      %v622 = vmax.f32 %v603, -0.01
      %v623 = vmax.f32 %v606, -0.01
      %v624 = vmax.f32 %v608, -0.01
      %v625 = vmax.f32 %v611, -0.01
      %v626 = vmax.f32 %v613, -0.01
      %v627 = vmax.f32 %v616, -0.01
      %v628 = vmin.f32 %v619, 0.01
      %v629 = vmin.f32 %v620, 0.01
      %v630 = vmin.f32 %v621, 0.01
      %v631 = vmin.f32 %v622, 0.01
      %v632 = vmin.f32 %v623, 0.01
      %v633 = vmin.f32 %v624, 0.01
      %v634 = vmin.f32 %v625, 0.01
      %v635 = vmin.f32 %v626, 0.01
      %v636 = vmin.f32 %v627, 0.01
      %v637 = vsub.f32 %v596, %v628
      %v638 = vsub.f32 %v598, %v629
      %v639 = vsub.f32 %v601, %v630
      %v640 = vsub.f32 %v603, %v631
      %v641 = vsub.f32 %v606, %v632
      %v642 = vsub.f32 %v608, %v633
      %v643 = vsub.f32 %v611, %v634
      %v644 = vsub.f32 %v613, %v635
      %v645 = vsub.f32 %v616, %v636
      %646 = vst.msk [vmem:[%s337] sm:$0xff] %vm397, %v637
      %647 = vst.msk [vmem:[%s337 + $0x8] sm:$0xff] %vm397, %v638
      %648 = vst.msk [vmem:[%s337 + $0x10] sm:$0xff] %vm397, %v639
      %649 = vst.msk [vmem:[%s337 + $0x18] sm:$0xff] %vm397, %v640
      %650 = vst.msk [vmem:[%s337 + $0x20] sm:$0xff] %vm397, %v641
      %651 = vst.msk [vmem:[%s337 + $0x28] sm:$0xff] %vm397, %v642
      %652 = vst.msk [vmem:[%s337 + $0x30] sm:$0xff] %vm397, %v643
      %653 = vst.msk [vmem:[%s337 + $0x38] sm:$0xff] %vm397, %v644
      %654 = vst.msk [vmem:[%s337 + $0x40] sm:$0xff] %vm397, %v645
      %664 = vrot.lane.b32.xlu0 %v637, 112
      %v665 = vpop.permute.xlu0 %664
      %666 = vrot.lane.b32.xlu0 %v638, 112
      %v667 = vpop.permute.xlu0 %666
      %668 = vrot.lane.b32.xlu0 %v639, 112
      %v669 = vpop.permute.xlu0 %668
      %670 = vrot.lane.b32.xlu0 %v640, 112
      %v671 = vpop.permute.xlu0 %670
      %672 = vrot.lane.b32.xlu0 %v641, 112
      %v673 = vpop.permute.xlu0 %672
      %674 = vrot.lane.b32.xlu0 %v642, 112
      %v675 = vpop.permute.xlu0 %674
      %676 = vrot.lane.b32.xlu0 %v643, 112
      %v677 = vpop.permute.xlu0 %676
      %678 = vrot.lane.b32.xlu0 %v644, 112
      %v679 = vpop.permute.xlu0 %678
      %680 = vrot.lane.b32.xlu0 %v645, 112
      %v681 = vpop.permute.xlu0 %680
      %691 = vst.msk [vmem:[%s343] sm:$0xff] %vm397, %v665
      %692 = vst.msk [vmem:[%s343 + $0x8] sm:$0xff] %vm397, %v667
      %693 = vst.msk [vmem:[%s343 + $0x10] sm:$0xff] %vm397, %v669
      %694 = vst.msk [vmem:[%s343 + $0x18] sm:$0xff] %vm397, %v671
      %695 = vst.msk [vmem:[%s343 + $0x20] sm:$0xff] %vm397, %v673
      %696 = vst.msk [vmem:[%s343 + $0x28] sm:$0xff] %vm397, %v675
      %697 = vst.msk [vmem:[%s343 + $0x30] sm:$0xff] %vm397, %v677
      %698 = vst.msk [vmem:[%s343 + $0x38] sm:$0xff] %vm397, %v679
      %699 = vst.msk [vmem:[%s343 + $0x40] sm:$0xff] %vm397, %v681
      %s700 = smul.u32 9, %s20
      %p701 = scmp.lt.s32.totalorder %s700, 35
      %s702 = scalar_select %p701, %s700, 35
      %s703 = smul.addr %s702, 8
      %s704 = scalar_lea.vmem %s7, %s703
      %s705 = smul.u32 9, %s20
      %p706 = scmp.lt.s32.totalorder %s705, 35
      %s707 = scalar_select %p706, %s705, 35
      %s708 = smul.addr %s707, 8
      %s709 = scalar_lea.vmem %s8, %s708
      // Predicated region
      $region49: #{afno_block_2d.4} parent=47 // pred_check
        %p710 = pneg %p195
      $region50: #{afno_block_2d.4} parent=47 // pred_check_branch
        %712 = sbr.rel (%p710) target = $region52
      $region51: #{afno_block_2d.4} parent=47 // pred_region
        %s713 = smul.u32 9, %s20
      $region52: #{afno_block_2d.4} parent=47 // pred_fallthru
        _
      // Predicated region
      $region53: #{afno_block_2d.4} parent=47 // pred_check
        %p714 = pneg %p221
      $region54: #{afno_block_2d.4} parent=47 // pred_check_branch
        %716 = sbr.rel (%p714) target = $region56
      $region55: #{afno_block_2d.4} parent=47 // pred_region
        %s717 = smul.u32 9, %s20
      $region56: #{afno_block_2d.4} parent=47 // pred_fallthru
        _
    $region48: #{afno_block_2d.4} parent=5 // pred_fallthru
      _
    %p718 = scmp.le.s32.totalorder 2, %s15
    // Predicated region
    $region57: #{afno_block_2d.4} parent=5 // pred_check
      %p719 = pneg %p718
    $region58: #{afno_block_2d.4} parent=5 // pred_check_branch
      %721 = sbr.rel (%p719) target = $region60
    $region59: #{afno_block_2d.4} parent=5 // pred_region
      %s722 = ssub.s32 %s15, 2
      // Predicated region
      $region61: #{afno_block_2d.4} parent=59 // pred_check
        %p723 = pneg %p201
      $region62: #{afno_block_2d.4} parent=59 // pred_check_branch
        %725 = sbr.rel (%p723) target = $region64
      $region63: #{afno_block_2d.4} parent=59 // pred_region
        %s726 = smul.u32 9, %s21
        %p727 = scmp.lt.s32.totalorder %s726, 35
        %s728 = scalar_select %p727, %s726, 35
        %s729 = smul.addr %s728, 8
        %s730 = scalar_lea.vmem %s7, %s729
      $region64: #{afno_block_2d.4} parent=59 // pred_fallthru
        _
      // Predicated region
      $region65: #{afno_block_2d.4} parent=59 // pred_check
        %p731 = pneg %p227
      $region66: #{afno_block_2d.4} parent=59 // pred_check_branch
        %733 = sbr.rel (%p731) target = $region68
      $region67: #{afno_block_2d.4} parent=59 // pred_region
        %s734 = smul.u32 9, %s21
        %p735 = scmp.lt.s32.totalorder %s734, 35
        %s736 = scalar_select %p735, %s734, 35
        %s737 = smul.addr %s736, 8
        %s738 = scalar_lea.vmem %s8, %s737
      $region68: #{afno_block_2d.4} parent=59 // pred_fallthru
        _
    $region60: #{afno_block_2d.4} parent=5 // pred_fallthru
      _
  $region6: #{afno_block_2d.4} parent=0 // loop_footer
    %s19 = sadd.s32 1, %s15
  $region7: #{afno_block_2d.4} parent=0 // loop_footer_branch
    %14 = sbr.rel target = $region3
  $region8: #{afno_block_2d.4} parent=0 // loop_exit
    _

// kernel: reverse.1
$region0: #{reverse.1}
  #allocation0 [shape = 's32[1]{0}', space=sflag, size = 0x4, scoped, tag = 'scoped memory for reverse.1']
  %s0 = inlined_call_operand.vmem [shape: f32[2,16,16,7], index: 0, kind: input, shape index: {}]
  %s1 = inlined_call_operand.vmem [shape: f32[2,16,16,7], index: 1, kind: output, shape index: {}]
  %s2 = scalar_lea.vmem %s0, 96
  %v3 = vld [vmem:[%s2] sm:$0xff]
  %4 = vst [vmem:[%s1] sm:$0xff] %v3
  %s5 = scalar_lea.vmem %s0, 208
  %v6 = vld [vmem:[%s5] sm:$0xff]
  %s7 = scalar_lea.vmem %s1, 112
  %8 = vst [vmem:[%s7] sm:$0xff] %v6
  %s9 = scalar_lea.vmem %s0, 80
  %v10 = vld [vmem:[%s9] sm:$0xff]
  %s11 = scalar_lea.vmem %s1, 16
  %12 = vst [vmem:[%s11] sm:$0xff] %v10
  %s13 = scalar_lea.vmem %s0, 192
  %v14 = vld [vmem:[%s13] sm:$0xff]
  %s15 = scalar_lea.vmem %s1, 128
  %16 = vst [vmem:[%s15] sm:$0xff] %v14
  %s17 = scalar_lea.vmem %s0, 64
  %v18 = vld [vmem:[%s17] sm:$0xff]
  %s19 = scalar_lea.vmem %s1, 32
  %20 = vst [vmem:[%s19] sm:$0xff] %v18
  %s21 = scalar_lea.vmem %s0, 176
  %v22 = vld [vmem:[%s21] sm:$0xff]
  %s23 = scalar_lea.vmem %s1, 144
  %24 = vst [vmem:[%s23] sm:$0xff] %v22
  %s25 = scalar_lea.vmem %s0, 48
  %v26 = vld [vmem:[%s25] sm:$0xff]
  %s27 = scalar_lea.vmem %s1, 48
  %28 = vst [vmem:[%s27] sm:$0xff] %v26
  %s29 = scalar_lea.vmem %s0, 160
  %v30 = vld [vmem:[%s29] sm:$0xff]
  %s31 = scalar_lea.vmem %s1, 160
  %32 = vst [vmem:[%s31] sm:$0xff] %v30
  %s33 = scalar_lea.vmem %s0, 32
  %v34 = vld [vmem:[%s33] sm:$0xff]
  %s35 = scalar_lea.vmem %s1, 64
  %36 = vst [vmem:[%s35] sm:$0xff] %v34
  %s37 = scalar_lea.vmem %s0, 144
  %v38 = vld [vmem:[%s37] sm:$0xff]
  %s39 = scalar_lea.vmem %s1, 176
  %40 = vst [vmem:[%s39] sm:$0xff] %v38
  %s41 = scalar_lea.vmem %s0, 16
  %v42 = vld [vmem:[%s41] sm:$0xff]
  %s43 = scalar_lea.vmem %s1, 80
  %44 = vst [vmem:[%s43] sm:$0xff] %v42
  %s45 = scalar_lea.vmem %s0, 128
  %v46 = vld [vmem:[%s45] sm:$0xff]
  %s47 = scalar_lea.vmem %s1, 192
  %48 = vst [vmem:[%s47] sm:$0xff] %v46
  %v49 = vld [vmem:[%s0] sm:$0xff]
  %s50 = scalar_lea.vmem %s1, 96
  %51 = vst [vmem:[%s50] sm:$0xff] %v49
  %s52 = scalar_lea.vmem %s0, 112
  %v53 = vld [vmem:[%s52] sm:$0xff]
  %s54 = scalar_lea.vmem %s1, 208
  %55 = vst [vmem:[%s54] sm:$0xff] %v53
  %s56 = scalar_lea.vmem %s0, 104
  %v57 = vld [vmem:[%s56] sm:$0xff]
  %s58 = scalar_lea.vmem %s1, 8
  %59 = vst [vmem:[%s58] sm:$0xff] %v57
  %s60 = scalar_lea.vmem %s0, 216
  %v61 = vld [vmem:[%s60] sm:$0xff]
  %s62 = scalar_lea.vmem %s1, 120
  %63 = vst [vmem:[%s62] sm:$0xff] %v61
  %s64 = scalar_lea.vmem %s0, 88
  %v65 = vld [vmem:[%s64] sm:$0xff]
  %s66 = scalar_lea.vmem %s1, 24
  %67 = vst [vmem:[%s66] sm:$0xff] %v65
  %s68 = scalar_lea.vmem %s0, 200
  %v69 = vld [vmem:[%s68] sm:$0xff]
  %s70 = scalar_lea.vmem %s1, 136
  %71 = vst [vmem:[%s70] sm:$0xff] %v69
  %s72 = scalar_lea.vmem %s0, 72
  %v73 = vld [vmem:[%s72] sm:$0xff]
  %s74 = scalar_lea.vmem %s1, 40
  %75 = vst [vmem:[%s74] sm:$0xff] %v73
  %s76 = scalar_lea.vmem %s0, 184
  %v77 = vld [vmem:[%s76] sm:$0xff]
  %s78 = scalar_lea.vmem %s1, 152
  %79 = vst [vmem:[%s78] sm:$0xff] %v77
  %s80 = scalar_lea.vmem %s0, 56
  %v81 = vld [vmem:[%s80] sm:$0xff]
  %s82 = scalar_lea.vmem %s1, 56
  %83 = vst [vmem:[%s82] sm:$0xff] %v81
  %s84 = scalar_lea.vmem %s0, 168
  %v85 = vld [vmem:[%s84] sm:$0xff]
  %s86 = scalar_lea.vmem %s1, 168
  %87 = vst [vmem:[%s86] sm:$0xff] %v85
  %s88 = scalar_lea.vmem %s0, 40
  %v89 = vld [vmem:[%s88] sm:$0xff]
  %s90 = scalar_lea.vmem %s1, 72
  %91 = vst [vmem:[%s90] sm:$0xff] %v89
  %s92 = scalar_lea.vmem %s0, 152
  %v93 = vld [vmem:[%s92] sm:$0xff]
  %s94 = scalar_lea.vmem %s1, 184
  %95 = vst [vmem:[%s94] sm:$0xff] %v93
  %s96 = scalar_lea.vmem %s0, 24
  %v97 = vld [vmem:[%s96] sm:$0xff]
  %s98 = scalar_lea.vmem %s1, 88
  %99 = vst [vmem:[%s98] sm:$0xff] %v97
  %s100 = scalar_lea.vmem %s0, 136
  %v101 = vld [vmem:[%s100] sm:$0xff]
  %s102 = scalar_lea.vmem %s1, 200
  %103 = vst [vmem:[%s102] sm:$0xff] %v101
  %s104 = scalar_lea.vmem %s0, 8
  %v105 = vld [vmem:[%s104] sm:$0xff]
  %s106 = scalar_lea.vmem %s1, 104
  %107 = vst [vmem:[%s106] sm:$0xff] %v105
  %s108 = scalar_lea.vmem %s0, 120
  %v109 = vld [vmem:[%s108] sm:$0xff]
  %s110 = scalar_lea.vmem %s1, 216
  %111 = vst [vmem:[%s110] sm:$0xff] %v109

// kernel: afno_block_2d.5
$region0: #{afno_block_2d.5}
  #allocation0 [shape = 'u32[]', space=smem, size = 0x4, offset = 0x4, fixed_abs, tag = 'smem constant byte address 0x4 - core index']
  #allocation1 [shape = 'u32[72,128]{1,0:T(1,128)}', space=vmem, size = 0x9000, scoped, tag = 'internal scratch']
  %s0 = inlined_call_operand.vmem [shape: f32[512,16], index: 0, kind: input, shape index: {}]
  %s1 = inlined_call_operand.vmem [shape: f32[512,16], index: 1, kind: input, shape index: {}]
  %s2 = inlined_call_operand.vmem [shape: f32[512,16], index: 2, kind: input, shape index: {}]
  %s3 = inlined_call_operand.vmem [shape: f32[1,16], index: 3, kind: input, shape index: {}]
  %s4 = inlined_call_operand.vmem [shape: f32[1,16], index: 4, kind: input, shape index: {}]
  %s5 = inlined_call_operand.vmem [shape: f32[1,16], index: 5, kind: input, shape index: {}]
  %s6 = inlined_call_operand.vmem [shape: f32[1,16], index: 6, kind: input, shape index: {}]
  %s7 = inlined_call_operand.vmem [shape: bf16[16,64], index: 7, kind: input, shape index: {}]
  %s8 = inlined_call_operand.vmem [shape: f32[1,64], index: 8, kind: input, shape index: {}]
  %s9 = inlined_call_operand.vmem [shape: bf16[64,16], index: 9, kind: input, shape index: {}]
  %s10 = inlined_call_operand.vmem [shape: f32[1,16], index: 10, kind: input, shape index: {}]
  %s11 = inlined_call_operand.vmem [shape: f32[512,16], index: 11, kind: output, shape index: {}]
  %s12 = sld [smem:[#allocation0]]
  $region77: #{afno_block_2d.5} parent=0
    _
  %s14 = ssub.s32 1, %s12
  %s15 = scalar_select 0, %s14, %s12
  loop: start=0, step=1, limit=6
  $region2: #{afno_block_2d.5} parent=0 // loop_pre_header
    _
  $region3: #{afno_block_2d.5} parent=0 // loop_header
    %s17 = sphi 0, %s21
    %p18 = scmp.ge.s32.totalorder %s17, 6
    %s27 = sphi 0, %s29
    %s30 = sphi 0, %s27
    %s31 = sphi 0, %s30
    %s47 = sphi 0, %s31
    %s53 = sphi 0, %s55
    %s56 = sphi 0, %s53
    %s57 = sphi 0, %s56
    %s73 = sphi 0, %s57
    %s79 = sphi 0, %s81
    %s82 = sphi 0, %s79
    %s83 = sphi 0, %s82
    %s99 = sphi 0, %s83
    %s103 = sphi 0, %s103
    %s105 = sphi 0, %s103
    %s106 = sphi 0, %s105
    %s120 = sphi 0, %s106
    %s124 = sphi 0, %s124
    %s126 = sphi 0, %s124
    %s127 = sphi 0, %s126
    %s141 = sphi 0, %s127
    %s145 = sphi 0, %s145
    %s147 = sphi 0, %s145
    %s148 = sphi 0, %s147
    %s162 = sphi 0, %s148
    %s166 = sphi 0, %s166
    %s168 = sphi 0, %s166
    %s169 = sphi 0, %s168
    %s183 = sphi 0, %s169
    %s187 = sphi 0, %s187
    %s189 = sphi 0, %s187
    %s190 = sphi 0, %s189
    %s204 = sphi 0, %s190
    %s208 = sphi 0, %s208
    %s210 = sphi 0, %s208
    %s211 = sphi 0, %s210
    %s225 = sphi 0, %s211
    %s229 = sphi 0, %s229
    %s231 = sphi 0, %s229
    %s232 = sphi 0, %s231
    %s246 = sphi 0, %s232
    %s250 = sphi 0, %s250
    %s252 = sphi 0, %s250
    %s253 = sphi 0, %s252
    %s267 = sphi 0, %s253
    %s273 = sphi 0, %s275
    %s276 = sphi 0, %s273
    %s277 = sphi 0, %s276
    %s293 = sphi 0, %s277
  $region4: #{afno_block_2d.5} parent=0 // loop_header_branch
    %20 = sbr.rel (%p18) target = $region8
  $region5: #{afno_block_2d.5} parent=0 // loop_body
    %s22 = ssub.s32 %s17, 1
    %s23 = ssub.s32 %s17, 2
    %s24 = sadd.s32 %s17, 1
    %s25 = ssub.s32 %s17, %s24
    %p26 = scmp.eq.s32.totalorder %s25, 0
    %s28 = sadd.s32 %s27, 1
    %s29 = scalar_select %p26, %s27, %s28
    %p32 = pneg %p26
    %p33 = scmp.eq.s32.totalorder %s17, 3
    %p34 = por %p32, %p33
    %p35 = scmp.ne.s32.totalorder %s27, %s30
    %p36 = scmp.eq.s32.totalorder %s17, 0
    %p37 = por %p35, %p36
    %p38 = scmp.ne.s32.totalorder %s27, %s30
    %p39 = scmp.eq.s32.totalorder %s22, 3
    %p40 = por %p38, %p39
    %p41 = scmp.ne.s32.totalorder %s30, %s31
    %p42 = scmp.eq.s32.totalorder %s22, 0
    %p43 = por %p41, %p42
    %p44 = scmp.ne.s32.totalorder %s30, %s31
    %p45 = scmp.eq.s32.totalorder %s23, 3
    %p46 = por %p44, %p45
    %p48 = scmp.ne.s32.totalorder %s31, %s47
    %p49 = scmp.eq.s32.totalorder %s23, 0
    %p50 = por %p48, %p49
    %s51 = ssub.s32 %s17, %s24
    %p52 = scmp.eq.s32.totalorder %s51, 0
    %s54 = sadd.s32 %s53, 1
    %s55 = scalar_select %p52, %s53, %s54
    %p58 = pneg %p52
    %p59 = scmp.eq.s32.totalorder %s17, 3
    %p60 = por %p58, %p59
    %p61 = scmp.ne.s32.totalorder %s53, %s56
    %p62 = scmp.eq.s32.totalorder %s17, 0
    %p63 = por %p61, %p62
    %p64 = scmp.ne.s32.totalorder %s53, %s56
    %p65 = scmp.eq.s32.totalorder %s22, 3
    %p66 = por %p64, %p65
    %p67 = scmp.ne.s32.totalorder %s56, %s57
    %p68 = scmp.eq.s32.totalorder %s22, 0
    %p69 = por %p67, %p68
    %p70 = scmp.ne.s32.totalorder %s56, %s57
    %p71 = scmp.eq.s32.totalorder %s23, 3
    %p72 = por %p70, %p71
    %p74 = scmp.ne.s32.totalorder %s57, %s73
    %p75 = scmp.eq.s32.totalorder %s23, 0
    %p76 = por %p74, %p75
    %s77 = ssub.s32 %s17, %s24
    %p78 = scmp.eq.s32.totalorder %s77, 0
    %s80 = sadd.s32 %s79, 1
    %s81 = scalar_select %p78, %s79, %s80
    %p84 = pneg %p78
    %p85 = scmp.eq.s32.totalorder %s17, 3
    %p86 = por %p84, %p85
    %p87 = scmp.ne.s32.totalorder %s79, %s82
    %p88 = scmp.eq.s32.totalorder %s17, 0
    %p89 = por %p87, %p88
    %p90 = scmp.ne.s32.totalorder %s79, %s82
    %p91 = scmp.eq.s32.totalorder %s22, 3
    %p92 = por %p90, %p91
    %p93 = scmp.ne.s32.totalorder %s82, %s83
    %p94 = scmp.eq.s32.totalorder %s22, 0
    %p95 = por %p93, %p94
    %p96 = scmp.ne.s32.totalorder %s82, %s83
    %p97 = scmp.eq.s32.totalorder %s23, 3
    %p98 = por %p96, %p97
    %p100 = scmp.ne.s32.totalorder %s83, %s99
    %p101 = scmp.eq.s32.totalorder %s23, 0
    %p102 = por %p100, %p101
    %s104 = sadd.s32 %s103, 1
    %p107 = scmp.eq.s32.totalorder %s17, 3
    %p108 = scmp.ne.s32.totalorder %s103, %s105
    %p109 = scmp.eq.s32.totalorder %s17, 0
    %p110 = por %p108, %p109
    %p111 = scmp.ne.s32.totalorder %s103, %s105
    %p112 = scmp.eq.s32.totalorder %s22, 3
    %p113 = por %p111, %p112
    %p114 = scmp.ne.s32.totalorder %s105, %s106
    %p115 = scmp.eq.s32.totalorder %s22, 0
    %p116 = por %p114, %p115
    %p117 = scmp.ne.s32.totalorder %s105, %s106
    %p118 = scmp.eq.s32.totalorder %s23, 3
    %p119 = por %p117, %p118
    %p121 = scmp.ne.s32.totalorder %s106, %s120
    %p122 = scmp.eq.s32.totalorder %s23, 0
    %p123 = por %p121, %p122
    %s125 = sadd.s32 %s124, 1
    %p128 = scmp.eq.s32.totalorder %s17, 3
    %p129 = scmp.ne.s32.totalorder %s124, %s126
    %p130 = scmp.eq.s32.totalorder %s17, 0
    %p131 = por %p129, %p130
    %p132 = scmp.ne.s32.totalorder %s124, %s126
    %p133 = scmp.eq.s32.totalorder %s22, 3
    %p134 = por %p132, %p133
    %p135 = scmp.ne.s32.totalorder %s126, %s127
    %p136 = scmp.eq.s32.totalorder %s22, 0
    %p137 = por %p135, %p136
    %p138 = scmp.ne.s32.totalorder %s126, %s127
    %p139 = scmp.eq.s32.totalorder %s23, 3
    %p140 = por %p138, %p139
    %p142 = scmp.ne.s32.totalorder %s127, %s141
    %p143 = scmp.eq.s32.totalorder %s23, 0
    %p144 = por %p142, %p143
    %s146 = sadd.s32 %s145, 1
    %p149 = scmp.eq.s32.totalorder %s17, 3
    %p150 = scmp.ne.s32.totalorder %s145, %s147
    %p151 = scmp.eq.s32.totalorder %s17, 0
    %p152 = por %p150, %p151
    %p153 = scmp.ne.s32.totalorder %s145, %s147
    %p154 = scmp.eq.s32.totalorder %s22, 3
    %p155 = por %p153, %p154
    %p156 = scmp.ne.s32.totalorder %s147, %s148
    %p157 = scmp.eq.s32.totalorder %s22, 0
    %p158 = por %p156, %p157
    %p159 = scmp.ne.s32.totalorder %s147, %s148
    %p160 = scmp.eq.s32.totalorder %s23, 3
    %p161 = por %p159, %p160
    %p163 = scmp.ne.s32.totalorder %s148, %s162
    %p164 = scmp.eq.s32.totalorder %s23, 0
    %p165 = por %p163, %p164
    %s167 = sadd.s32 %s166, 1
    %p170 = scmp.eq.s32.totalorder %s17, 3
    %p171 = scmp.ne.s32.totalorder %s166, %s168
    %p172 = scmp.eq.s32.totalorder %s17, 0
    %p173 = por %p171, %p172
    %p174 = scmp.ne.s32.totalorder %s166, %s168
    %p175 = scmp.eq.s32.totalorder %s22, 3
    %p176 = por %p174, %p175
    %p177 = scmp.ne.s32.totalorder %s168, %s169
    %p178 = scmp.eq.s32.totalorder %s22, 0
    %p179 = por %p177, %p178
    %p180 = scmp.ne.s32.totalorder %s168, %s169
    %p181 = scmp.eq.s32.totalorder %s23, 3
    %p182 = por %p180, %p181
    %p184 = scmp.ne.s32.totalorder %s169, %s183
    %p185 = scmp.eq.s32.totalorder %s23, 0
    %p186 = por %p184, %p185
    %s188 = sadd.s32 %s187, 1
    %p191 = scmp.eq.s32.totalorder %s17, 3
    %p192 = scmp.ne.s32.totalorder %s187, %s189
    %p193 = scmp.eq.s32.totalorder %s17, 0
    %p194 = por %p192, %p193
    %p195 = scmp.ne.s32.totalorder %s187, %s189
    %p196 = scmp.eq.s32.totalorder %s22, 3
    %p197 = por %p195, %p196
    %p198 = scmp.ne.s32.totalorder %s189, %s190
    %p199 = scmp.eq.s32.totalorder %s22, 0
    %p200 = por %p198, %p199
    %p201 = scmp.ne.s32.totalorder %s189, %s190
    %p202 = scmp.eq.s32.totalorder %s23, 3
    %p203 = por %p201, %p202
    %p205 = scmp.ne.s32.totalorder %s190, %s204
    %p206 = scmp.eq.s32.totalorder %s23, 0
    %p207 = por %p205, %p206
    %s209 = sadd.s32 %s208, 1
    %p212 = scmp.eq.s32.totalorder %s17, 3
    %p213 = scmp.ne.s32.totalorder %s208, %s210
    %p214 = scmp.eq.s32.totalorder %s17, 0
    %p215 = por %p213, %p214
    %p216 = scmp.ne.s32.totalorder %s208, %s210
    %p217 = scmp.eq.s32.totalorder %s22, 3
    %p218 = por %p216, %p217
    %p219 = scmp.ne.s32.totalorder %s210, %s211
    %p220 = scmp.eq.s32.totalorder %s22, 0
    %p221 = por %p219, %p220
    %p222 = scmp.ne.s32.totalorder %s210, %s211
    %p223 = scmp.eq.s32.totalorder %s23, 3
    %p224 = por %p222, %p223
    %p226 = scmp.ne.s32.totalorder %s211, %s225
    %p227 = scmp.eq.s32.totalorder %s23, 0
    %p228 = por %p226, %p227
    %s230 = sadd.s32 %s229, 1
    %p233 = scmp.eq.s32.totalorder %s17, 3
    %p234 = scmp.ne.s32.totalorder %s229, %s231
    %p235 = scmp.eq.s32.totalorder %s17, 0
    %p236 = por %p234, %p235
    %p237 = scmp.ne.s32.totalorder %s229, %s231
    %p238 = scmp.eq.s32.totalorder %s22, 3
    %p239 = por %p237, %p238
    %p240 = scmp.ne.s32.totalorder %s231, %s232
    %p241 = scmp.eq.s32.totalorder %s22, 0
    %p242 = por %p240, %p241
    %p243 = scmp.ne.s32.totalorder %s231, %s232
    %p244 = scmp.eq.s32.totalorder %s23, 3
    %p245 = por %p243, %p244
    %p247 = scmp.ne.s32.totalorder %s232, %s246
    %p248 = scmp.eq.s32.totalorder %s23, 0
    %p249 = por %p247, %p248
    %s251 = sadd.s32 %s250, 1
    %p254 = scmp.eq.s32.totalorder %s17, 3
    %p255 = scmp.ne.s32.totalorder %s250, %s252
    %p256 = scmp.eq.s32.totalorder %s17, 0
    %p257 = por %p255, %p256
    %p258 = scmp.ne.s32.totalorder %s250, %s252
    %p259 = scmp.eq.s32.totalorder %s22, 3
    %p260 = por %p258, %p259
    %p261 = scmp.ne.s32.totalorder %s252, %s253
    %p262 = scmp.eq.s32.totalorder %s22, 0
    %p263 = por %p261, %p262
    %p264 = scmp.ne.s32.totalorder %s252, %s253
    %p265 = scmp.eq.s32.totalorder %s23, 3
    %p266 = por %p264, %p265
    %p268 = scmp.ne.s32.totalorder %s253, %s267
    %p269 = scmp.eq.s32.totalorder %s23, 0
    %p270 = por %p268, %p269
    %s271 = ssub.s32 %s17, %s24
    %p272 = scmp.eq.s32.totalorder %s271, 0
    %s274 = sadd.s32 %s273, 1
    %s275 = scalar_select %p272, %s273, %s274
    %p278 = pneg %p272
    %p279 = scmp.eq.s32.totalorder %s17, 3
    %p280 = por %p278, %p279
    %p281 = scmp.ne.s32.totalorder %s273, %s276
    %p282 = scmp.eq.s32.totalorder %s17, 0
    %p283 = por %p281, %p282
    %p284 = scmp.ne.s32.totalorder %s273, %s276
    %p285 = scmp.eq.s32.totalorder %s22, 3
    %p286 = por %p284, %p285
    %p287 = scmp.ne.s32.totalorder %s276, %s277
    %p288 = scmp.eq.s32.totalorder %s22, 0
    %p289 = por %p287, %p288
    %p290 = scmp.ne.s32.totalorder %s276, %s277
    %p291 = scmp.eq.s32.totalorder %s23, 3
    %p292 = por %p290, %p291
    %p294 = scmp.ne.s32.totalorder %s277, %s293
    %p295 = scmp.eq.s32.totalorder %s23, 0
    %p296 = por %p294, %p295
    %p297 = scmp.le.s32.totalorder 1, %s17
    %p298 = scmp.lt.s32.totalorder %s17, 5
    %p299 = pnand %p297, %p298
    %p300 = pneg %p299
    // Predicated region
    $region9: #{afno_block_2d.5} parent=5 // pred_check
      _
    $region10: #{afno_block_2d.5} parent=5 // pred_check_branch
      %302 = sbr.rel (%p299) target = $region12
    $region11: #{afno_block_2d.5} parent=5 // pred_region
      %s303 = ssub.s32 %s17, 1
      // Predicated region
      $region13: #{afno_block_2d.5} parent=11 // pred_check
        %p304 = pneg %p116
      $region14: #{afno_block_2d.5} parent=11 // pred_check_branch
        %306 = sbr.rel (%p304) target = $region16
      $region15: #{afno_block_2d.5} parent=11 // pred_region
        _
      $region16: #{afno_block_2d.5} parent=11 // pred_fallthru
        _
      // Predicated region
      $region17: #{afno_block_2d.5} parent=11 // pred_check
        %p307 = pneg %p137
      $region18: #{afno_block_2d.5} parent=11 // pred_check_branch
        %309 = sbr.rel (%p307) target = $region20
      $region19: #{afno_block_2d.5} parent=11 // pred_region
        _
      $region20: #{afno_block_2d.5} parent=11 // pred_fallthru
        _
      // Predicated region
      $region21: #{afno_block_2d.5} parent=11 // pred_check
        %p310 = pneg %p158
      $region22: #{afno_block_2d.5} parent=11 // pred_check_branch
        %312 = sbr.rel (%p310) target = $region24
      $region23: #{afno_block_2d.5} parent=11 // pred_region
        _
      $region24: #{afno_block_2d.5} parent=11 // pred_fallthru
        _
      // Predicated region
      $region25: #{afno_block_2d.5} parent=11 // pred_check
        %p313 = pneg %p179
      $region26: #{afno_block_2d.5} parent=11 // pred_check_branch
        %315 = sbr.rel (%p313) target = $region28
      $region27: #{afno_block_2d.5} parent=11 // pred_region
        _
      $region28: #{afno_block_2d.5} parent=11 // pred_fallthru
        _
      // Predicated region
      $region29: #{afno_block_2d.5} parent=11 // pred_check
        %p316 = pneg %p200
      $region30: #{afno_block_2d.5} parent=11 // pred_check_branch
        %318 = sbr.rel (%p316) target = $region32
      $region31: #{afno_block_2d.5} parent=11 // pred_region
        _
      $region32: #{afno_block_2d.5} parent=11 // pred_fallthru
        _
      // Predicated region
      $region33: #{afno_block_2d.5} parent=11 // pred_check
        %p319 = pneg %p221
      $region34: #{afno_block_2d.5} parent=11 // pred_check_branch
        %321 = sbr.rel (%p319) target = $region36
      $region35: #{afno_block_2d.5} parent=11 // pred_region
        _
      $region36: #{afno_block_2d.5} parent=11 // pred_fallthru
        _
      // Predicated region
      $region37: #{afno_block_2d.5} parent=11 // pred_check
        %p322 = pneg %p242
      $region38: #{afno_block_2d.5} parent=11 // pred_check_branch
        %324 = sbr.rel (%p322) target = $region40
      $region39: #{afno_block_2d.5} parent=11 // pred_region
        _
      $region40: #{afno_block_2d.5} parent=11 // pred_fallthru
        _
      // Predicated region
      $region41: #{afno_block_2d.5} parent=11 // pred_check
        %p325 = pneg %p263
      $region42: #{afno_block_2d.5} parent=11 // pred_check_branch
        %327 = sbr.rel (%p325) target = $region44
      $region43: #{afno_block_2d.5} parent=11 // pred_region
        _
      $region44: #{afno_block_2d.5} parent=11 // pred_fallthru
        _
    $region12: #{afno_block_2d.5} parent=5 // pred_fallthru
      _
    %p328 = scmp.lt.s32.totalorder %s17, 4
    // Predicated region
    $region45: #{afno_block_2d.5} parent=5 // pred_check
      %p329 = pneg %p328
    $region46: #{afno_block_2d.5} parent=5 // pred_check_branch
      %331 = sbr.rel (%p329) target = $region48
    $region47: #{afno_block_2d.5} parent=5 // pred_region
      // Predicated region
      $region49: #{afno_block_2d.5} parent=47 // pred_check
        %p332 = pneg %p37
      $region50: #{afno_block_2d.5} parent=47 // pred_check_branch
        %334 = sbr.rel (%p332) target = $region52
      $region51: #{afno_block_2d.5} parent=47 // pred_region
        %s335 = smul.u32 16, %s17
        %p336 = scmp.lt.s32.totalorder %s335, 63
        %s337 = scalar_select %p336, %s335, 63
        %s338 = smul.addr %s337, 8
        %s339 = scalar_lea.vmem %s0, %s338
        %s340 = smul.u32 16, %s17
      $region52: #{afno_block_2d.5} parent=47 // pred_fallthru
        _
      // Predicated region
      $region53: #{afno_block_2d.5} parent=47 // pred_check
        %p341 = pneg %p63
      $region54: #{afno_block_2d.5} parent=47 // pred_check_branch
        %343 = sbr.rel (%p341) target = $region56
      $region55: #{afno_block_2d.5} parent=47 // pred_region
        %s344 = smul.u32 16, %s17
        %p345 = scmp.lt.s32.totalorder %s344, 63
        %s346 = scalar_select %p345, %s344, 63
        %s347 = smul.addr %s346, 8
        %s348 = scalar_lea.vmem %s1, %s347
        %s349 = smul.u32 16, %s17
      $region56: #{afno_block_2d.5} parent=47 // pred_fallthru
        _
      // Predicated region
      $region57: #{afno_block_2d.5} parent=47 // pred_check
        %p350 = pneg %p89
      $region58: #{afno_block_2d.5} parent=47 // pred_check_branch
        %352 = sbr.rel (%p350) target = $region60
      $region59: #{afno_block_2d.5} parent=47 // pred_region
        %s353 = smul.u32 16, %s17
        %p354 = scmp.lt.s32.totalorder %s353, 63
        %s355 = scalar_select %p354, %s353, 63
        %s356 = smul.addr %s355, 8
        %s357 = scalar_lea.vmem %s2, %s356
        %s358 = smul.u32 16, %s17
      $region60: #{afno_block_2d.5} parent=47 // pred_fallthru
        _
    $region48: #{afno_block_2d.5} parent=5 // pred_fallthru
      _
    %p359 = scmp.le.s32.totalorder 1, %s17
    %p360 = scmp.lt.s32.totalorder %s17, 5
    %p361 = pnand %p359, %p360
    %p362 = pneg %p361
    // Predicated region
    $region61: #{afno_block_2d.5} parent=5 // pred_check
      _
    $region62: #{afno_block_2d.5} parent=5 // pred_check_branch
      %364 = sbr.rel (%p361) target = $region64
    $region63: #{afno_block_2d.5} parent=5 // pred_region
      %s365 = ssub.s32 %s17, 1
      %s366 = smul.u32 16, %s22
      %p367 = scmp.lt.s32.totalorder %s366, 63
      %s368 = scalar_select %p367, %s366, 63
      %s369 = smul.addr %s368, 8
      %s370 = scalar_lea.vmem %s0, %s369
      %p371 = pneg %p43
      %p372 = pneg %p40
      %s373 = smul.u32 16, %s22
      %p374 = scmp.lt.s32.totalorder %s373, 63
      %s375 = scalar_select %p374, %s373, 63
      %s376 = smul.addr %s375, 8
      %s377 = scalar_lea.vmem %s1, %s376
      %p378 = pneg %p69
      %p379 = pneg %p66
      %s380 = smul.u32 16, %s22
      %p381 = scmp.lt.s32.totalorder %s380, 63
      %s382 = scalar_select %p381, %s380, 63
      %s383 = smul.addr %s382, 8
      %s384 = scalar_lea.vmem %s2, %s383
      %p385 = pneg %p95
      %p386 = pneg %p92
      %p387 = pneg %p116
      %p388 = pneg %p113
      %p389 = pneg %p137
      %p390 = pneg %p134
      %p391 = pneg %p158
      %p392 = pneg %p155
      %p393 = pneg %p179
      %p394 = pneg %p176
      %p395 = pneg %p200
      %p396 = pneg %p197
      %p397 = pneg %p221
      %p398 = pneg %p218
      %p399 = pneg %p242
      %p400 = pneg %p239
      %p401 = pneg %p263
      %p402 = pneg %p260
      %p403 = pneg %p289
      %p404 = pneg %p286
      %s405 = smul.u32 16, %s22
      %p406 = scmp.lt.s32.totalorder %s405, 63
      %s407 = scalar_select %p406, %s405, 63
      %s408 = smul.addr %s407, 8
      %s409 = scalar_lea.vmem %s11, %s408
      %s410 = smul.u32 16, %s22
      %p411 = scmp.lt.s32.totalorder %s410, 63
      %s412 = scalar_select %p411, %s410, 63
      %s413 = smul.addr %s412, 8
      %s414 = scalar_lea.vmem %s0, %s413
      %s415 = smul.u32 16, %s22
      %s416 = smul.u32 16, %s22
      %p417 = scmp.lt.s32.totalorder %s416, 63
      %s418 = scalar_select %p417, %s416, 63
      %s419 = smul.addr %s418, 8
      %s420 = scalar_lea.vmem %s1, %s419
      %s421 = smul.u32 16, %s22
      %s422 = smul.u32 16, %s22
      %p423 = scmp.lt.s32.totalorder %s422, 63
      %s424 = scalar_select %p423, %s422, 63
      %s425 = smul.addr %s424, 8
      %s426 = scalar_lea.vmem %s2, %s425
      %s427 = smul.u32 16, %s22
      %s428 = smul.u32 16, %s22
      %p429 = scmp.lt.s32.totalorder %s428, 63
      %s430 = scalar_select %p429, %s428, 63
      %s431 = smul.addr %s430, 8
      %s432 = scalar_lea.vmem %s11, %s431
      %s433 = smul.u32 16, %s22
      %v435 = vld [vmem:[%s3] sm:$0x1]
      %v436 = vld [vmem:[%s414] sm:$0xff]
      %v437 = vld [vmem:[%s414 + $0x8] sm:$0xff]
      %v438 = vld [vmem:[%s414 + $0x10] sm:$0xff]
      %v439 = vld [vmem:[%s414 + $0x18] sm:$0xff]
      %v440 = vld [vmem:[%s414 + $0x20] sm:$0xff]
      %v441 = vld [vmem:[%s414 + $0x28] sm:$0xff]
      %v442 = vld [vmem:[%s414 + $0x30] sm:$0xff]
      %v443 = vld [vmem:[%s414 + $0x38] sm:$0xff]
      %v444 = vld [vmem:[%s414 + $0x40] sm:$0xff]
      %v445 = vld [vmem:[%s414 + $0x48] sm:$0xff]
      %v446 = vld [vmem:[%s414 + $0x50] sm:$0xff]
      %v447 = vld [vmem:[%s414 + $0x58] sm:$0xff]
      %v448 = vld [vmem:[%s414 + $0x60] sm:$0xff]
      %v449 = vld [vmem:[%s414 + $0x68] sm:$0xff]
      %v450 = vld [vmem:[%s414 + $0x70] sm:$0xff]
      %v451 = vld [vmem:[%s414 + $0x78] sm:$0xff]
      %v452 = vld [vmem:[%s420] sm:$0xff]
      %v453 = vld [vmem:[%s420 + $0x8] sm:$0xff]
      %v454 = vld [vmem:[%s420 + $0x10] sm:$0xff]
      %v455 = vld [vmem:[%s420 + $0x18] sm:$0xff]
      %v456 = vld [vmem:[%s420 + $0x20] sm:$0xff]
      %v457 = vld [vmem:[%s420 + $0x28] sm:$0xff]
      %v458 = vld [vmem:[%s420 + $0x30] sm:$0xff]
      %v459 = vld [vmem:[%s420 + $0x38] sm:$0xff]
      %v460 = vld [vmem:[%s420 + $0x40] sm:$0xff]
      %v461 = vld [vmem:[%s420 + $0x48] sm:$0xff]
      %v462 = vld [vmem:[%s420 + $0x50] sm:$0xff]
      %v463 = vld [vmem:[%s420 + $0x58] sm:$0xff]
      %v464 = vld [vmem:[%s420 + $0x60] sm:$0xff]
      %v465 = vld [vmem:[%s420 + $0x68] sm:$0xff]
      %v466 = vld [vmem:[%s420 + $0x70] sm:$0xff]
      %v467 = vld [vmem:[%s420 + $0x78] sm:$0xff]
      %v468 = vadd.f32 %v436, %v452
      %v469 = vadd.f32 %v437, %v453
      %v470 = vadd.f32 %v438, %v454
      %v471 = vadd.f32 %v439, %v455
      %v472 = vadd.f32 %v440, %v456
      %v473 = vadd.f32 %v441, %v457
      %v474 = vadd.f32 %v442, %v458
      %v475 = vadd.f32 %v443, %v459
      %v476 = vadd.f32 %v444, %v460
      %v477 = vadd.f32 %v445, %v461
      %v478 = vadd.f32 %v446, %v462
      %v479 = vadd.f32 %v447, %v463
      %v480 = vadd.f32 %v448, %v464
      %v481 = vadd.f32 %v449, %v465
      %v482 = vadd.f32 %v450, %v466
      %v483 = vadd.f32 %v451, %v467
      %v485 = vperm.slane %v435, 0
      %v487 = vmul.f32 %v485, %v468
      %v488 = vmul.f32 %v485, %v469
      %v489 = vmul.f32 %v485, %v470
      %v490 = vmul.f32 %v485, %v471
      %v491 = vmul.f32 %v485, %v472
      %v492 = vmul.f32 %v485, %v473
      %v493 = vmul.f32 %v485, %v474
      %v494 = vmul.f32 %v485, %v475
      %v495 = vmul.f32 %v485, %v476
      %v496 = vmul.f32 %v485, %v477
      %v497 = vmul.f32 %v485, %v478
      %v498 = vmul.f32 %v485, %v479
      %v499 = vmul.f32 %v485, %v480
      %v500 = vmul.f32 %v485, %v481
      %v501 = vmul.f32 %v485, %v482
      %v502 = vmul.f32 %v485, %v483
      %v503 = vld [vmem:[%s426] sm:$0xff]
      %v504 = vld [vmem:[%s426 + $0x8] sm:$0xff]
      %v505 = vld [vmem:[%s426 + $0x10] sm:$0xff]
      %v506 = vld [vmem:[%s426 + $0x18] sm:$0xff]
      %v507 = vld [vmem:[%s426 + $0x20] sm:$0xff]
      %v508 = vld [vmem:[%s426 + $0x28] sm:$0xff]
      %v509 = vld [vmem:[%s426 + $0x30] sm:$0xff]
      %v510 = vld [vmem:[%s426 + $0x38] sm:$0xff]
      %v511 = vld [vmem:[%s426 + $0x40] sm:$0xff]
      %v512 = vld [vmem:[%s426 + $0x48] sm:$0xff]
      %v513 = vld [vmem:[%s426 + $0x50] sm:$0xff]
      %v514 = vld [vmem:[%s426 + $0x58] sm:$0xff]
      %v515 = vld [vmem:[%s426 + $0x60] sm:$0xff]
      %v516 = vld [vmem:[%s426 + $0x68] sm:$0xff]
      %v517 = vld [vmem:[%s426 + $0x70] sm:$0xff]
      %v518 = vld [vmem:[%s426 + $0x78] sm:$0xff]
      %v519 = vadd.f32 %v487, %v503
      %v520 = vadd.f32 %v488, %v504
      %v521 = vadd.f32 %v489, %v505
      %v522 = vadd.f32 %v490, %v506
      %v523 = vadd.f32 %v491, %v507
      %v524 = vadd.f32 %v492, %v508
      %v525 = vadd.f32 %v493, %v509
      %v526 = vadd.f32 %v494, %v510
      %v527 = vadd.f32 %v495, %v511
      %v528 = vadd.f32 %v496, %v512
      %v529 = vadd.f32 %v497, %v513
      %v530 = vadd.f32 %v498, %v514
      %v531 = vadd.f32 %v499, %v515
      %v532 = vadd.f32 %v500, %v516
      %v533 = vadd.f32 %v501, %v517
      %v534 = vadd.f32 %v502, %v518
      %vm535 = vcmask 130048
      %v536 = vsel %vm535, %v519, 0.0
      %537 = vadd.xlane.f32.xlu0 %v536
      %v538 = vpop.xlane.xlu0 %537
      %v539 = vsel %vm535, %v520, 0.0
      %540 = vadd.xlane.f32.xlu0 %v539
      %v541 = vpop.xlane.xlu0 %540
      %v542 = vsel %vm535, %v521, 0.0
      %543 = vadd.xlane.f32.xlu0 %v542
      %v544 = vpop.xlane.xlu0 %543
      %v545 = vsel %vm535, %v522, 0.0
      %546 = vadd.xlane.f32.xlu0 %v545
      %v547 = vpop.xlane.xlu0 %546
      %v548 = vsel %vm535, %v523, 0.0
      %549 = vadd.xlane.f32.xlu0 %v548
      %v550 = vpop.xlane.xlu0 %549
      %v551 = vsel %vm535, %v524, 0.0
      %552 = vadd.xlane.f32.xlu0 %v551
      %v553 = vpop.xlane.xlu0 %552
      %v554 = vsel %vm535, %v525, 0.0
      %555 = vadd.xlane.f32.xlu0 %v554
      %v556 = vpop.xlane.xlu0 %555
      %v557 = vsel %vm535, %v526, 0.0
      %558 = vadd.xlane.f32.xlu0 %v557
      %v559 = vpop.xlane.xlu0 %558
      %v560 = vsel %vm535, %v527, 0.0
      %561 = vadd.xlane.f32.xlu0 %v560
      %v562 = vpop.xlane.xlu0 %561
      %v563 = vsel %vm535, %v528, 0.0
      %564 = vadd.xlane.f32.xlu0 %v563
      %v565 = vpop.xlane.xlu0 %564
      %v566 = vsel %vm535, %v529, 0.0
      %567 = vadd.xlane.f32.xlu0 %v566
      %v568 = vpop.xlane.xlu0 %567
      %v569 = vsel %vm535, %v530, 0.0
      %570 = vadd.xlane.f32.xlu0 %v569
      %v571 = vpop.xlane.xlu0 %570
      %v572 = vsel %vm535, %v531, 0.0
      %573 = vadd.xlane.f32.xlu0 %v572
      %v574 = vpop.xlane.xlu0 %573
      %v575 = vsel %vm535, %v532, 0.0
      %576 = vadd.xlane.f32.xlu0 %v575
      %v577 = vpop.xlane.xlu0 %576
      %v578 = vsel %vm535, %v533, 0.0
      %579 = vadd.xlane.f32.xlu0 %v578
      %v580 = vpop.xlane.xlu0 %579
      %v581 = vsel %vm535, %v534, 0.0
      %582 = vadd.xlane.f32.xlu0 %v581
      %v583 = vpop.xlane.xlu0 %582
      %v584 = vrcp.pop 16.0
      %v585 = vmul.f32 16.0, %v584
      %v586 = vsub.f32 1.0, %v585
      %v587 = vmul.f32 %v584, %v586
      %v588 = vadd.f32 %v584, %v587
      %vm589 = vweird.f32 %v584
      %v590 = vsel %vm589, %v584, %v588
      %v591 = vmul.f32 %v538, %v590
      %v592 = vmul.f32 %v541, %v590
      %v593 = vmul.f32 %v544, %v590
      %v594 = vmul.f32 %v547, %v590
      %v595 = vmul.f32 %v550, %v590
      %v596 = vmul.f32 %v553, %v590
      %v597 = vmul.f32 %v556, %v590
      %v598 = vmul.f32 %v559, %v590
      %v599 = vmul.f32 %v562, %v590
      %v600 = vmul.f32 %v565, %v590
      %v601 = vmul.f32 %v568, %v590
      %v602 = vmul.f32 %v571, %v590
      %v603 = vmul.f32 %v574, %v590
      %v604 = vmul.f32 %v577, %v590
      %v605 = vmul.f32 %v580, %v590
      %v606 = vmul.f32 %v583, %v590
      %v607 = vsub.f32 %v519, %v591
      %v608 = vsub.f32 %v520, %v592
      %v609 = vsub.f32 %v521, %v593
      %v610 = vsub.f32 %v522, %v594
      %v611 = vsub.f32 %v523, %v595
      %v612 = vsub.f32 %v524, %v596
      %v613 = vsub.f32 %v525, %v597
      %v614 = vsub.f32 %v526, %v598
      %v615 = vsub.f32 %v527, %v599
      %v616 = vsub.f32 %v528, %v600
      %v617 = vsub.f32 %v529, %v601
      %v618 = vsub.f32 %v530, %v602
      %v619 = vsub.f32 %v531, %v603
      %v620 = vsub.f32 %v532, %v604
      %v621 = vsub.f32 %v533, %v605
      %v622 = vsub.f32 %v534, %v606
      %v623 = vmul.f32 %v607, %v607
      %v624 = vmul.f32 %v608, %v608
      %v625 = vmul.f32 %v609, %v609
      %v626 = vmul.f32 %v610, %v610
      %v627 = vmul.f32 %v611, %v611
      %v628 = vmul.f32 %v612, %v612
      %v629 = vmul.f32 %v613, %v613
      %v630 = vmul.f32 %v614, %v614
      %v631 = vmul.f32 %v615, %v615
      %v632 = vmul.f32 %v616, %v616
      %v633 = vmul.f32 %v617, %v617
      %v634 = vmul.f32 %v618, %v618
      %v635 = vmul.f32 %v619, %v619
      %v636 = vmul.f32 %v620, %v620
      %v637 = vmul.f32 %v621, %v621
      %v638 = vmul.f32 %v622, %v622
      %v639 = vsel %vm535, %v623, 0.0
      %640 = vadd.xlane.f32.xlu0 %v639
      %v641 = vpop.xlane.xlu0 %640
      %v642 = vsel %vm535, %v624, 0.0
      %643 = vadd.xlane.f32.xlu0 %v642
      %v644 = vpop.xlane.xlu0 %643
      %v645 = vsel %vm535, %v625, 0.0
      %646 = vadd.xlane.f32.xlu0 %v645
      %v647 = vpop.xlane.xlu0 %646
      %v648 = vsel %vm535, %v626, 0.0
      %649 = vadd.xlane.f32.xlu0 %v648
      %v650 = vpop.xlane.xlu0 %649
      %v651 = vsel %vm535, %v627, 0.0
      %652 = vadd.xlane.f32.xlu0 %v651
      %v653 = vpop.xlane.xlu0 %652
      %v654 = vsel %vm535, %v628, 0.0
      %655 = vadd.xlane.f32.xlu0 %v654
      %v656 = vpop.xlane.xlu0 %655
      %v657 = vsel %vm535, %v629, 0.0
      %658 = vadd.xlane.f32.xlu0 %v657
      %v659 = vpop.xlane.xlu0 %658
      %v660 = vsel %vm535, %v630, 0.0
      %661 = vadd.xlane.f32.xlu0 %v660
      %v662 = vpop.xlane.xlu0 %661
      %v663 = vsel %vm535, %v631, 0.0
      %664 = vadd.xlane.f32.xlu0 %v663
      %v665 = vpop.xlane.xlu0 %664
      %v666 = vsel %vm535, %v632, 0.0
      %667 = vadd.xlane.f32.xlu0 %v666
      %v668 = vpop.xlane.xlu0 %667
      %v669 = vsel %vm535, %v633, 0.0
      %670 = vadd.xlane.f32.xlu0 %v669
      %v671 = vpop.xlane.xlu0 %670
      %v672 = vsel %vm535, %v634, 0.0
      %673 = vadd.xlane.f32.xlu0 %v672
      %v674 = vpop.xlane.xlu0 %673
      %v675 = vsel %vm535, %v635, 0.0
      %676 = vadd.xlane.f32.xlu0 %v675
      %v677 = vpop.xlane.xlu0 %676
      %v678 = vsel %vm535, %v636, 0.0
      %679 = vadd.xlane.f32.xlu0 %v678
      %v680 = vpop.xlane.xlu0 %679
      %v681 = vsel %vm535, %v637, 0.0
      %682 = vadd.xlane.f32.xlu0 %v681
      %v683 = vpop.xlane.xlu0 %682
      %v684 = vsel %vm535, %v638, 0.0
      %685 = vadd.xlane.f32.xlu0 %v684
      %v686 = vpop.xlane.xlu0 %685
      %v687 = vmul.f32 %v641, %v590
      %v688 = vmul.f32 %v644, %v590
      %v689 = vmul.f32 %v647, %v590
      %v690 = vmul.f32 %v650, %v590
      %v691 = vmul.f32 %v653, %v590
      %v692 = vmul.f32 %v656, %v590
      %v693 = vmul.f32 %v659, %v590
      %v694 = vmul.f32 %v662, %v590
      %v695 = vmul.f32 %v665, %v590
      %v696 = vmul.f32 %v668, %v590
      %v697 = vmul.f32 %v671, %v590
      %v698 = vmul.f32 %v674, %v590
      %v699 = vmul.f32 %v677, %v590
      %v700 = vmul.f32 %v680, %v590
      %v701 = vmul.f32 %v683, %v590
      %v702 = vmul.f32 %v686, %v590
      %v703 = vadd.f32 %v687, 1e-05
      %v704 = vadd.f32 %v688, 1e-05
      %v705 = vadd.f32 %v689, 1e-05
      %v706 = vadd.f32 %v690, 1e-05
      %v707 = vadd.f32 %v691, 1e-05
      %v708 = vadd.f32 %v692, 1e-05
      %v709 = vadd.f32 %v693, 1e-05
      %v710 = vadd.f32 %v694, 1e-05
      %v711 = vadd.f32 %v695, 1e-05
      %v712 = vadd.f32 %v696, 1e-05
      %v713 = vadd.f32 %v697, 1e-05
      %v714 = vadd.f32 %v698, 1e-05
      %v715 = vadd.f32 %v699, 1e-05
      %v716 = vadd.f32 %v700, 1e-05
      %v717 = vadd.f32 %v701, 1e-05
      %v718 = vadd.f32 %v702, 1e-05
      %v719 = vrsqrt.pop %v703
      %v720 = vmul.f32 %v719, %v703
      %v721 = vmul.f32 %v720, %v719
      %v722 = vmul.f32 0.5, %v721
      %v723 = vsub.f32 1.5, %v722
      %v724 = vmul.f32 %v719, %v723
      %vm725 = vweird.f32 %v703
      %vm726 = vweird.f32 %v719
      %vm727 = vmor %vm725, %vm726
      %v728 = vsel %vm727, %v719, %v724
      %v729 = vrsqrt.pop %v704
      %v730 = vmul.f32 %v729, %v704
      %v731 = vmul.f32 %v730, %v729
      %v732 = vmul.f32 0.5, %v731
      %v733 = vsub.f32 1.5, %v732
      %v734 = vmul.f32 %v729, %v733
      %vm735 = vweird.f32 %v704
      %vm736 = vweird.f32 %v729
      %vm737 = vmor %vm735, %vm736
      %v738 = vsel %vm737, %v729, %v734
      %v739 = vrsqrt.pop %v705
      %v740 = vmul.f32 %v739, %v705
      %v741 = vmul.f32 %v740, %v739
      %v742 = vmul.f32 0.5, %v741
      %v743 = vsub.f32 1.5, %v742
      %v744 = vmul.f32 %v739, %v743
      %vm745 = vweird.f32 %v705
      %vm746 = vweird.f32 %v739
      %vm747 = vmor %vm745, %vm746
      %v748 = vsel %vm747, %v739, %v744
      %v749 = vrsqrt.pop %v706
      %v750 = vmul.f32 %v749, %v706
      %v751 = vmul.f32 %v750, %v749
      %v752 = vmul.f32 0.5, %v751
      %v753 = vsub.f32 1.5, %v752
      %v754 = vmul.f32 %v749, %v753
      %vm755 = vweird.f32 %v706
      %vm756 = vweird.f32 %v749
      %vm757 = vmor %vm755, %vm756
      %v758 = vsel %vm757, %v749, %v754
      %v759 = vrsqrt.pop %v707
      %v760 = vmul.f32 %v759, %v707
      %v761 = vmul.f32 %v760, %v759
      %v762 = vmul.f32 0.5, %v761
      %v763 = vsub.f32 1.5, %v762
      %v764 = vmul.f32 %v759, %v763
      %vm765 = vweird.f32 %v707
      %vm766 = vweird.f32 %v759
      %vm767 = vmor %vm765, %vm766
      %v768 = vsel %vm767, %v759, %v764
      %v769 = vrsqrt.pop %v708
      %v770 = vmul.f32 %v769, %v708
      %v771 = vmul.f32 %v770, %v769
      %v772 = vmul.f32 0.5, %v771
      %v773 = vsub.f32 1.5, %v772
      %v774 = vmul.f32 %v769, %v773
      %vm775 = vweird.f32 %v708
      %vm776 = vweird.f32 %v769
      %vm777 = vmor %vm775, %vm776
      %v778 = vsel %vm777, %v769, %v774
      %v779 = vrsqrt.pop %v709
      %v780 = vmul.f32 %v779, %v709
      %v781 = vmul.f32 %v780, %v779
      %v782 = vmul.f32 0.5, %v781
      %v783 = vsub.f32 1.5, %v782
      %v784 = vmul.f32 %v779, %v783
      %vm785 = vweird.f32 %v709
      %vm786 = vweird.f32 %v779
      %vm787 = vmor %vm785, %vm786
      %v788 = vsel %vm787, %v779, %v784
      %v789 = vrsqrt.pop %v710
      %v790 = vmul.f32 %v789, %v710
      %v791 = vmul.f32 %v790, %v789
      %v792 = vmul.f32 0.5, %v791
      %v793 = vsub.f32 1.5, %v792
      %v794 = vmul.f32 %v789, %v793
      %vm795 = vweird.f32 %v710
      %vm796 = vweird.f32 %v789
      %vm797 = vmor %vm795, %vm796
      %v798 = vsel %vm797, %v789, %v794
      %v799 = vrsqrt.pop %v711
      %v800 = vmul.f32 %v799, %v711
      %v801 = vmul.f32 %v800, %v799
      %v802 = vmul.f32 0.5, %v801
      %v803 = vsub.f32 1.5, %v802
      %v804 = vmul.f32 %v799, %v803
      %vm805 = vweird.f32 %v711
      %vm806 = vweird.f32 %v799
      %vm807 = vmor %vm805, %vm806
      %v808 = vsel %vm807, %v799, %v804
      %v809 = vrsqrt.pop %v712
      %v810 = vmul.f32 %v809, %v712
      %v811 = vmul.f32 %v810, %v809
      %v812 = vmul.f32 0.5, %v811
      %v813 = vsub.f32 1.5, %v812
      %v814 = vmul.f32 %v809, %v813
      %vm815 = vweird.f32 %v712
      %vm816 = vweird.f32 %v809
      %vm817 = vmor %vm815, %vm816
      %v818 = vsel %vm817, %v809, %v814
      %v819 = vrsqrt.pop %v713
      %v820 = vmul.f32 %v819, %v713
      %v821 = vmul.f32 %v820, %v819
      %v822 = vmul.f32 0.5, %v821
      %v823 = vsub.f32 1.5, %v822
      %v824 = vmul.f32 %v819, %v823
      %vm825 = vweird.f32 %v713
      %vm826 = vweird.f32 %v819
      %vm827 = vmor %vm825, %vm826
      %v828 = vsel %vm827, %v819, %v824
      %v829 = vrsqrt.pop %v714
      %v830 = vmul.f32 %v829, %v714
      %v831 = vmul.f32 %v830, %v829
      %v832 = vmul.f32 0.5, %v831
      %v833 = vsub.f32 1.5, %v832
      %v834 = vmul.f32 %v829, %v833
      %vm835 = vweird.f32 %v714
      %vm836 = vweird.f32 %v829
      %vm837 = vmor %vm835, %vm836
      %v838 = vsel %vm837, %v829, %v834
      %v839 = vrsqrt.pop %v715
      %v840 = vmul.f32 %v839, %v715
      %v841 = vmul.f32 %v840, %v839
      %v842 = vmul.f32 0.5, %v841
      %v843 = vsub.f32 1.5, %v842
      %v844 = vmul.f32 %v839, %v843
      %vm845 = vweird.f32 %v715
      %vm846 = vweird.f32 %v839
      %vm847 = vmor %vm845, %vm846
      %v848 = vsel %vm847, %v839, %v844
      %v849 = vrsqrt.pop %v716
      %v850 = vmul.f32 %v849, %v716
      %v851 = vmul.f32 %v850, %v849
      %v852 = vmul.f32 0.5, %v851
      %v853 = vsub.f32 1.5, %v852
      %v854 = vmul.f32 %v849, %v853
      %vm855 = vweird.f32 %v716
      %vm856 = vweird.f32 %v849
      %vm857 = vmor %vm855, %vm856
      %v858 = vsel %vm857, %v849, %v854
      %v859 = vrsqrt.pop %v717
      %v860 = vmul.f32 %v859, %v717
      %v861 = vmul.f32 %v860, %v859
      %v862 = vmul.f32 0.5, %v861
      %v863 = vsub.f32 1.5, %v862
      %v864 = vmul.f32 %v859, %v863
      %vm865 = vweird.f32 %v717
      %vm866 = vweird.f32 %v859
      %vm867 = vmor %vm865, %vm866
      %v868 = vsel %vm867, %v859, %v864
      %v869 = vrsqrt.pop %v718
      %v870 = vmul.f32 %v869, %v718
      %v871 = vmul.f32 %v870, %v869
      %v872 = vmul.f32 0.5, %v871
      %v873 = vsub.f32 1.5, %v872
      %v874 = vmul.f32 %v869, %v873
      %vm875 = vweird.f32 %v718
      %vm876 = vweird.f32 %v869
      %vm877 = vmor %vm875, %vm876
      %v878 = vsel %vm877, %v869, %v874
      %v879 = vmul.f32 %v607, %v728
      %v880 = vmul.f32 %v608, %v738
      %v881 = vmul.f32 %v609, %v748
      %v882 = vmul.f32 %v610, %v758
      %v883 = vmul.f32 %v611, %v768
      %v884 = vmul.f32 %v612, %v778
      %v885 = vmul.f32 %v613, %v788
      %v886 = vmul.f32 %v614, %v798
      %v887 = vmul.f32 %v615, %v808
      %v888 = vmul.f32 %v616, %v818
      %v889 = vmul.f32 %v617, %v828
      %v890 = vmul.f32 %v618, %v838
      %v891 = vmul.f32 %v619, %v848
      %v892 = vmul.f32 %v620, %v858
      %v893 = vmul.f32 %v621, %v868
      %v894 = vmul.f32 %v622, %v878
      %v895 = vld [vmem:[%s5] sm:$0x1]
      %v897 = vperm.slane %v895, 0
      %v899 = vmul.f32 %v879, %v897
      %v900 = vmul.f32 %v880, %v897
      %v901 = vmul.f32 %v881, %v897
      %v902 = vmul.f32 %v882, %v897
      %v903 = vmul.f32 %v883, %v897
      %v904 = vmul.f32 %v884, %v897
      %v905 = vmul.f32 %v885, %v897
      %v906 = vmul.f32 %v886, %v897
      %v907 = vmul.f32 %v887, %v897
      %v908 = vmul.f32 %v888, %v897
      %v909 = vmul.f32 %v889, %v897
      %v910 = vmul.f32 %v890, %v897
      %v911 = vmul.f32 %v891, %v897
      %v912 = vmul.f32 %v892, %v897
      %v913 = vmul.f32 %v893, %v897
      %v914 = vmul.f32 %v894, %v897
      %v915 = vld [vmem:[%s6] sm:$0x1]
      %v917 = vperm.slane %v915, 0
      %v919 = vadd.f32 %v899, %v917
      %v920 = vadd.f32 %v900, %v917
      %v921 = vadd.f32 %v901, %v917
      %v922 = vadd.f32 %v902, %v917
      %v923 = vadd.f32 %v903, %v917
      %v924 = vadd.f32 %v904, %v917
      %v925 = vadd.f32 %v905, %v917
      %v926 = vadd.f32 %v906, %v917
      %v927 = vadd.f32 %v907, %v917
      %v928 = vadd.f32 %v908, %v917
      %v929 = vadd.f32 %v909, %v917
      %v930 = vadd.f32 %v910, %v917
      %v931 = vadd.f32 %v911, %v917
      %v932 = vadd.f32 %v912, %v917
      %v933 = vadd.f32 %v913, %v917
      %v934 = vadd.f32 %v914, %v917
      %v935 = vpack.c.bf16 %v920, %v919
      %v936 = vpack.c.bf16 %v922, %v921
      %v937 = vpack.c.bf16 %v924, %v923
      %v938 = vpack.c.bf16 %v926, %v925
      %v939 = vpack.c.bf16 %v928, %v927
      %v940 = vpack.c.bf16 %v930, %v929
      %v941 = vpack.c.bf16 %v932, %v931
      %v942 = vpack.c.bf16 %v934, %v933
      %v943 = vld [vmem:[%s7] sm:$0xf]
      %v944 = vld [vmem:[%s7 + $0x4] sm:$0xf]
      %v945 = vld [vmem:[%s8] sm:$0x1]
      %v947 = vperm.slane %v945, 0
      %v951 = vunpack.c.l.b16 %v943
      %v952 = vunpack.c.l.b16 %v944
      %v953 = vpack.c.b16 %v952, %v951
      %v956 = vsel %vm535, %v935, 0
      %v959 = vsel %vm535, %v936, 0
      %v962 = vsel %vm535, %v937, 0
      %v965 = vsel %vm535, %v938, 0
      %v968 = vsel %vm535, %v939, 0
      %v971 = vsel %vm535, %v940, 0
      %v974 = vsel %vm535, %v941, 0
      %v977 = vsel %vm535, %v942, 0
      %979 = vmatpush.bf16.msra.mxu0 0
      %980 = vmatpush.bf16.msra.mxu0 0
      %981 = vmatpush.bf16.msra.mxu0 0
      %982 = vmatpush.bf16.msra.mxu0 0
      %983 = vmatpush.bf16.msra.mxu0 0
      %984 = vmatpush.bf16.msra.mxu0 0
      %985 = vmatpush.bf16.msra.mxu0 0
      %986 = vmatpush.bf16.msra.mxu0 %v953
      %987 = vmatmul.bf16.gmra.mxu0 %v956
      %v988 = vpop.f32.mrf.mxu0
      %v989 = vadd.f32 %v947, %v988
      %v990 = vpop.f32.mrf.mxu0
      %v991 = vadd.f32 %v947, %v990
      %992 = vmatmul.bf16.gmra.mxu0 %v959
      %v993 = vpop.f32.mrf.mxu0
      %v994 = vadd.f32 %v947, %v993
      %v995 = vpop.f32.mrf.mxu0
      %v996 = vadd.f32 %v947, %v995
      %997 = vmatmul.bf16.gmra.mxu0 %v962
      %v998 = vpop.f32.mrf.mxu0
      %v999 = vadd.f32 %v947, %v998
      %v1000 = vpop.f32.mrf.mxu0
      %v1001 = vadd.f32 %v947, %v1000
      %1002 = vmatmul.bf16.gmra.mxu0 %v965
      %v1003 = vpop.f32.mrf.mxu0
      %v1004 = vadd.f32 %v947, %v1003
      %v1005 = vpop.f32.mrf.mxu0
      %v1006 = vadd.f32 %v947, %v1005
      %1007 = vmatmul.bf16.gmra.mxu0 %v968
      %v1008 = vpop.f32.mrf.mxu0
      %v1009 = vadd.f32 %v947, %v1008
      %v1010 = vpop.f32.mrf.mxu0
      %v1011 = vadd.f32 %v947, %v1010
      %1012 = vmatmul.bf16.gmra.mxu0 %v971
      %v1013 = vpop.f32.mrf.mxu0
      %v1014 = vadd.f32 %v947, %v1013
      %v1015 = vpop.f32.mrf.mxu0
      %v1016 = vadd.f32 %v947, %v1015
      %1017 = vmatmul.bf16.gmra.mxu0 %v974
      %v1018 = vpop.f32.mrf.mxu0
      %v1019 = vadd.f32 %v947, %v1018
      %v1020 = vpop.f32.mrf.mxu0
      %v1021 = vadd.f32 %v947, %v1020
      %1022 = vmatmul.bf16.gmra.mxu0 %v977
      %v1023 = vpop.f32.mrf.mxu0
      %v1024 = vadd.f32 %v947, %v1023
      %v1025 = vpop.f32.mrf.mxu0
      %v1026 = vadd.f32 %v947, %v1025
      %1027 = vdwg.mxu0
      %v1028 = vmul.f32 %v989, 0.5
      %v1029 = vmul.f32 %v991, 0.5
      %v1030 = vmul.f32 %v994, 0.5
      %v1031 = vmul.f32 %v996, 0.5
      %v1032 = vmul.f32 %v999, 0.5
      %v1033 = vmul.f32 %v1001, 0.5
      %v1034 = vmul.f32 %v1004, 0.5
      %v1035 = vmul.f32 %v1006, 0.5
      %v1036 = vmul.f32 %v1009, 0.5
      %v1037 = vmul.f32 %v1011, 0.5
      %v1038 = vmul.f32 %v1014, 0.5
      %v1039 = vmul.f32 %v1016, 0.5
      %v1040 = vmul.f32 %v1019, 0.5
      %v1041 = vmul.f32 %v1021, 0.5
      %v1042 = vmul.f32 %v1024, 0.5
      %v1043 = vmul.f32 %v1026, 0.5
      %v1044 = vmul.f32 %v989, 0.70710677
      %v1045 = vmul.f32 %v991, 0.70710677
      %v1046 = vmul.f32 %v994, 0.70710677
      %v1047 = vmul.f32 %v996, 0.70710677
      %v1048 = vmul.f32 %v999, 0.70710677
      %v1049 = vmul.f32 %v1001, 0.70710677
      %v1050 = vmul.f32 %v1004, 0.70710677
      %v1051 = vmul.f32 %v1006, 0.70710677
      %v1052 = vmul.f32 %v1009, 0.70710677
      %v1053 = vmul.f32 %v1011, 0.70710677
      %v1054 = vmul.f32 %v1014, 0.70710677
      %v1055 = vmul.f32 %v1016, 0.70710677
      %v1056 = vmul.f32 %v1019, 0.70710677
      %v1057 = vmul.f32 %v1021, 0.70710677
      %v1058 = vmul.f32 %v1024, 0.70710677
      %v1059 = vmul.f32 %v1026, 0.70710677
      %v1060 = vmul.f32 %v1044, %v1044
      %v1061 = vmin.f32 16.0, %v1060
      %v1062 = vmul.f32 %v1061, 2.1237322e-06
      %v1063 = vadd.f32 %v1062, 0.00028619796
      %v1064 = vmul.f32 %v1061, %v1063
      %v1065 = vadd.f32 %v1064, 0.0036580483
      %v1066 = vmul.f32 %v1061, %v1065
      %v1067 = vadd.f32 %v1066, 0.05243302
      %v1068 = vmul.f32 %v1061, %v1067
      %v1069 = vadd.f32 %v1068, 0.18741608
      %v1070 = vmul.f32 %v1061, %v1069
      %v1071 = vadd.f32 %v1070, 1.1283791
      %v1072 = vmul.f32 %v1044, %v1071
      %v1073 = vmul.f32 %v1061, 3.8918573e-05
      %v1074 = vadd.f32 %v1073, 0.001143296
      %v1075 = vmul.f32 %v1061, %v1074
      %v1076 = vadd.f32 %v1075, 0.014752088
      %v1077 = vmul.f32 %v1061, %v1076
      %v1078 = vadd.f32 %v1077, 0.112945676
      %v1079 = vmul.f32 %v1061, %v1078
      %v1080 = vadd.f32 %v1079, 0.4994258
      %v1081 = vmul.f32 %v1061, %v1080
      %v1082 = vadd.f32 %v1081, 1.0
      %v1083 = vrcp.pop %v1082
      %v1084 = vmul.f32 %v1082, %v1083
      %v1085 = vsub.f32 1.0, %v1084
      %v1086 = vmul.f32 %v1083, %v1085
      %v1087 = vadd.f32 %v1083, %v1086
      %vm1088 = vweird.f32 %v1082
      %vm1089 = vweird.f32 %v1083
      %vm1090 = vmor %vm1088, %vm1089
      %v1091 = vsel %vm1090, %v1083, %v1087
      %v1092 = vand.u32 2147483647, %v1082
      %vm1093 = vcmp.eq.f32.partialorder %v1092, 8.507059e+37
      %v1094 = vand.u32 %v1082, 2147483648
      %v1095 = vor.u32 1.1754944e-38, %v1094
      %v1096 = vsel %vm1093, %v1095, %v1091
      %v1097 = vmul.f32 %v1072, %v1096
      %v1098 = vmin.f32 %v1097, 1.0
      %v1099 = vmax.f32 %v1098, -1.0
      %v1100 = vmul.f32 %v1045, %v1045
      %v1101 = vmin.f32 16.0, %v1100
      %v1102 = vmul.f32 %v1101, 2.1237322e-06
      %v1103 = vadd.f32 %v1102, 0.00028619796
      %v1104 = vmul.f32 %v1101, %v1103
      %v1105 = vadd.f32 %v1104, 0.0036580483
      %v1106 = vmul.f32 %v1101, %v1105
      %v1107 = vadd.f32 %v1106, 0.05243302
      %v1108 = vmul.f32 %v1101, %v1107
      %v1109 = vadd.f32 %v1108, 0.18741608
      %v1110 = vmul.f32 %v1101, %v1109
      %v1111 = vadd.f32 %v1110, 1.1283791
      %v1112 = vmul.f32 %v1045, %v1111
      %v1113 = vmul.f32 %v1101, 3.8918573e-05
      %v1114 = vadd.f32 %v1113, 0.001143296
      %v1115 = vmul.f32 %v1101, %v1114
      %v1116 = vadd.f32 %v1115, 0.014752088
      %v1117 = vmul.f32 %v1101, %v1116
      %v1118 = vadd.f32 %v1117, 0.112945676
      %v1119 = vmul.f32 %v1101, %v1118
      %v1120 = vadd.f32 %v1119, 0.4994258
      %v1121 = vmul.f32 %v1101, %v1120
      %v1122 = vadd.f32 %v1121, 1.0
      %v1123 = vrcp.pop %v1122
      %v1124 = vmul.f32 %v1122, %v1123
      %v1125 = vsub.f32 1.0, %v1124
      %v1126 = vmul.f32 %v1123, %v1125
      %v1127 = vadd.f32 %v1123, %v1126
      %vm1128 = vweird.f32 %v1122
      %vm1129 = vweird.f32 %v1123
      %vm1130 = vmor %vm1128, %vm1129
      %v1131 = vsel %vm1130, %v1123, %v1127
      %v1132 = vand.u32 2147483647, %v1122
      %vm1133 = vcmp.eq.f32.partialorder %v1132, 8.507059e+37
      %v1134 = vand.u32 %v1122, 2147483648
      %v1135 = vor.u32 1.1754944e-38, %v1134
      %v1136 = vsel %vm1133, %v1135, %v1131
      %v1137 = vmul.f32 %v1112, %v1136
      %v1138 = vmin.f32 %v1137, 1.0
      %v1139 = vmax.f32 %v1138, -1.0
      %v1140 = vmul.f32 %v1046, %v1046
      %v1141 = vmin.f32 16.0, %v1140
      %v1142 = vmul.f32 %v1141, 2.1237322e-06
      %v1143 = vadd.f32 %v1142, 0.00028619796
      %v1144 = vmul.f32 %v1141, %v1143
      %v1145 = vadd.f32 %v1144, 0.0036580483
      %v1146 = vmul.f32 %v1141, %v1145
      %v1147 = vadd.f32 %v1146, 0.05243302
      %v1148 = vmul.f32 %v1141, %v1147
      %v1149 = vadd.f32 %v1148, 0.18741608
      %v1150 = vmul.f32 %v1141, %v1149
      %v1151 = vadd.f32 %v1150, 1.1283791
      %v1152 = vmul.f32 %v1046, %v1151
      %v1153 = vmul.f32 %v1141, 3.8918573e-05
      %v1154 = vadd.f32 %v1153, 0.001143296
      %v1155 = vmul.f32 %v1141, %v1154
      %v1156 = vadd.f32 %v1155, 0.014752088
      %v1157 = vmul.f32 %v1141, %v1156
      %v1158 = vadd.f32 %v1157, 0.112945676
      %v1159 = vmul.f32 %v1141, %v1158
      %v1160 = vadd.f32 %v1159, 0.4994258
      %v1161 = vmul.f32 %v1141, %v1160
      %v1162 = vadd.f32 %v1161, 1.0
      %v1163 = vrcp.pop %v1162
      %v1164 = vmul.f32 %v1162, %v1163
      %v1165 = vsub.f32 1.0, %v1164
      %v1166 = vmul.f32 %v1163, %v1165
      %v1167 = vadd.f32 %v1163, %v1166
      %vm1168 = vweird.f32 %v1162
      %vm1169 = vweird.f32 %v1163
      %vm1170 = vmor %vm1168, %vm1169
      %v1171 = vsel %vm1170, %v1163, %v1167
      %v1172 = vand.u32 2147483647, %v1162
      %vm1173 = vcmp.eq.f32.partialorder %v1172, 8.507059e+37
      %v1174 = vand.u32 %v1162, 2147483648
      %v1175 = vor.u32 1.1754944e-38, %v1174
      %v1176 = vsel %vm1173, %v1175, %v1171
      %v1177 = vmul.f32 %v1152, %v1176
      %v1178 = vmin.f32 %v1177, 1.0
      %v1179 = vmax.f32 %v1178, -1.0
      %v1180 = vmul.f32 %v1047, %v1047
      %v1181 = vmin.f32 16.0, %v1180
      %v1182 = vmul.f32 %v1181, 2.1237322e-06
      %v1183 = vadd.f32 %v1182, 0.00028619796
      %v1184 = vmul.f32 %v1181, %v1183
      %v1185 = vadd.f32 %v1184, 0.0036580483
      %v1186 = vmul.f32 %v1181, %v1185
      %v1187 = vadd.f32 %v1186, 0.05243302
      %v1188 = vmul.f32 %v1181, %v1187
      %v1189 = vadd.f32 %v1188, 0.18741608
      %v1190 = vmul.f32 %v1181, %v1189
      %v1191 = vadd.f32 %v1190, 1.1283791
      %v1192 = vmul.f32 %v1047, %v1191
      %v1193 = vmul.f32 %v1181, 3.8918573e-05
      %v1194 = vadd.f32 %v1193, 0.001143296
      %v1195 = vmul.f32 %v1181, %v1194
      %v1196 = vadd.f32 %v1195, 0.014752088
      %v1197 = vmul.f32 %v1181, %v1196
      %v1198 = vadd.f32 %v1197, 0.112945676
      %v1199 = vmul.f32 %v1181, %v1198
      %v1200 = vadd.f32 %v1199, 0.4994258
      %v1201 = vmul.f32 %v1181, %v1200
      %v1202 = vadd.f32 %v1201, 1.0
      %v1203 = vrcp.pop %v1202
      %v1204 = vmul.f32 %v1202, %v1203
      %v1205 = vsub.f32 1.0, %v1204
      %v1206 = vmul.f32 %v1203, %v1205
      %v1207 = vadd.f32 %v1203, %v1206
      %vm1208 = vweird.f32 %v1202
      %vm1209 = vweird.f32 %v1203
      %vm1210 = vmor %vm1208, %vm1209
      %v1211 = vsel %vm1210, %v1203, %v1207
      %v1212 = vand.u32 2147483647, %v1202
      %vm1213 = vcmp.eq.f32.partialorder %v1212, 8.507059e+37
      %v1214 = vand.u32 %v1202, 2147483648
      %v1215 = vor.u32 1.1754944e-38, %v1214
      %v1216 = vsel %vm1213, %v1215, %v1211
      %v1217 = vmul.f32 %v1192, %v1216
      %v1218 = vmin.f32 %v1217, 1.0
      %v1219 = vmax.f32 %v1218, -1.0
      %v1220 = vmul.f32 %v1048, %v1048
      %v1221 = vmin.f32 16.0, %v1220
      %v1222 = vmul.f32 %v1221, 2.1237322e-06
      %v1223 = vadd.f32 %v1222, 0.00028619796
      %v1224 = vmul.f32 %v1221, %v1223
      %v1225 = vadd.f32 %v1224, 0.0036580483
      %v1226 = vmul.f32 %v1221, %v1225
      %v1227 = vadd.f32 %v1226, 0.05243302
      %v1228 = vmul.f32 %v1221, %v1227
      %v1229 = vadd.f32 %v1228, 0.18741608
      %v1230 = vmul.f32 %v1221, %v1229
      %v1231 = vadd.f32 %v1230, 1.1283791
      %v1232 = vmul.f32 %v1048, %v1231
      %v1233 = vmul.f32 %v1221, 3.8918573e-05
      %v1234 = vadd.f32 %v1233, 0.001143296
      %v1235 = vmul.f32 %v1221, %v1234
      %v1236 = vadd.f32 %v1235, 0.014752088
      %v1237 = vmul.f32 %v1221, %v1236
      %v1238 = vadd.f32 %v1237, 0.112945676
      %v1239 = vmul.f32 %v1221, %v1238
      %v1240 = vadd.f32 %v1239, 0.4994258
      %v1241 = vmul.f32 %v1221, %v1240
      %v1242 = vadd.f32 %v1241, 1.0
      %v1243 = vrcp.pop %v1242
      %v1244 = vmul.f32 %v1242, %v1243
      %v1245 = vsub.f32 1.0, %v1244
      %v1246 = vmul.f32 %v1243, %v1245
      %v1247 = vadd.f32 %v1243, %v1246
      %vm1248 = vweird.f32 %v1242
      %vm1249 = vweird.f32 %v1243
      %vm1250 = vmor %vm1248, %vm1249
      %v1251 = vsel %vm1250, %v1243, %v1247
      %v1252 = vand.u32 2147483647, %v1242
      %vm1253 = vcmp.eq.f32.partialorder %v1252, 8.507059e+37
      %v1254 = vand.u32 %v1242, 2147483648
      %v1255 = vor.u32 1.1754944e-38, %v1254
      %v1256 = vsel %vm1253, %v1255, %v1251
      %v1257 = vmul.f32 %v1232, %v1256
      %v1258 = vmin.f32 %v1257, 1.0
      %v1259 = vmax.f32 %v1258, -1.0
      %v1260 = vmul.f32 %v1049, %v1049
      %v1261 = vmin.f32 16.0, %v1260
      %v1262 = vmul.f32 %v1261, 2.1237322e-06
      %v1263 = vadd.f32 %v1262, 0.00028619796
      %v1264 = vmul.f32 %v1261, %v1263
      %v1265 = vadd.f32 %v1264, 0.0036580483
      %v1266 = vmul.f32 %v1261, %v1265
      %v1267 = vadd.f32 %v1266, 0.05243302
      %v1268 = vmul.f32 %v1261, %v1267
      %v1269 = vadd.f32 %v1268, 0.18741608
      %v1270 = vmul.f32 %v1261, %v1269
      %v1271 = vadd.f32 %v1270, 1.1283791
      %v1272 = vmul.f32 %v1049, %v1271
      %v1273 = vmul.f32 %v1261, 3.8918573e-05
      %v1274 = vadd.f32 %v1273, 0.001143296
      %v1275 = vmul.f32 %v1261, %v1274
      %v1276 = vadd.f32 %v1275, 0.014752088
      %v1277 = vmul.f32 %v1261, %v1276
      %v1278 = vadd.f32 %v1277, 0.112945676
      %v1279 = vmul.f32 %v1261, %v1278
      %v1280 = vadd.f32 %v1279, 0.4994258
      %v1281 = vmul.f32 %v1261, %v1280
      %v1282 = vadd.f32 %v1281, 1.0
      %v1283 = vrcp.pop %v1282
      %v1284 = vmul.f32 %v1282, %v1283
      %v1285 = vsub.f32 1.0, %v1284
      %v1286 = vmul.f32 %v1283, %v1285
      %v1287 = vadd.f32 %v1283, %v1286
      %vm1288 = vweird.f32 %v1282
      %vm1289 = vweird.f32 %v1283
      %vm1290 = vmor %vm1288, %vm1289
      %v1291 = vsel %vm1290, %v1283, %v1287
      %v1292 = vand.u32 2147483647, %v1282
      %vm1293 = vcmp.eq.f32.partialorder %v1292, 8.507059e+37
      %v1294 = vand.u32 %v1282, 2147483648
      %v1295 = vor.u32 1.1754944e-38, %v1294
      %v1296 = vsel %vm1293, %v1295, %v1291
      %v1297 = vmul.f32 %v1272, %v1296
      %v1298 = vmin.f32 %v1297, 1.0
      %v1299 = vmax.f32 %v1298, -1.0
      %v1300 = vmul.f32 %v1050, %v1050
      %v1301 = vmin.f32 16.0, %v1300
      %v1302 = vmul.f32 %v1301, 2.1237322e-06
      %v1303 = vadd.f32 %v1302, 0.00028619796
      %v1304 = vmul.f32 %v1301, %v1303
      %v1305 = vadd.f32 %v1304, 0.0036580483
      %v1306 = vmul.f32 %v1301, %v1305
      %v1307 = vadd.f32 %v1306, 0.05243302
      %v1308 = vmul.f32 %v1301, %v1307
      %v1309 = vadd.f32 %v1308, 0.18741608
      %v1310 = vmul.f32 %v1301, %v1309
      %v1311 = vadd.f32 %v1310, 1.1283791
      %v1312 = vmul.f32 %v1050, %v1311
      %v1313 = vmul.f32 %v1301, 3.8918573e-05
      %v1314 = vadd.f32 %v1313, 0.001143296
      %v1315 = vmul.f32 %v1301, %v1314
      %v1316 = vadd.f32 %v1315, 0.014752088
      %v1317 = vmul.f32 %v1301, %v1316
      %v1318 = vadd.f32 %v1317, 0.112945676
      %v1319 = vmul.f32 %v1301, %v1318
      %v1320 = vadd.f32 %v1319, 0.4994258
      %v1321 = vmul.f32 %v1301, %v1320
      %v1322 = vadd.f32 %v1321, 1.0
      %v1323 = vrcp.pop %v1322
      %v1324 = vmul.f32 %v1322, %v1323
      %v1325 = vsub.f32 1.0, %v1324
      %v1326 = vmul.f32 %v1323, %v1325
      %v1327 = vadd.f32 %v1323, %v1326
      %vm1328 = vweird.f32 %v1322
      %vm1329 = vweird.f32 %v1323
      %vm1330 = vmor %vm1328, %vm1329
      %v1331 = vsel %vm1330, %v1323, %v1327
      %v1332 = vand.u32 2147483647, %v1322
      %vm1333 = vcmp.eq.f32.partialorder %v1332, 8.507059e+37
      %v1334 = vand.u32 %v1322, 2147483648
      %v1335 = vor.u32 1.1754944e-38, %v1334
      %v1336 = vsel %vm1333, %v1335, %v1331
      %v1337 = vmul.f32 %v1312, %v1336
      %v1338 = vmin.f32 %v1337, 1.0
      %v1339 = vmax.f32 %v1338, -1.0
      %v1340 = vmul.f32 %v1051, %v1051
      %v1341 = vmin.f32 16.0, %v1340
      %v1342 = vmul.f32 %v1341, 2.1237322e-06
      %v1343 = vadd.f32 %v1342, 0.00028619796
      %v1344 = vmul.f32 %v1341, %v1343
      %v1345 = vadd.f32 %v1344, 0.0036580483
      %v1346 = vmul.f32 %v1341, %v1345
      %v1347 = vadd.f32 %v1346, 0.05243302
      %v1348 = vmul.f32 %v1341, %v1347
      %v1349 = vadd.f32 %v1348, 0.18741608
      %v1350 = vmul.f32 %v1341, %v1349
      %v1351 = vadd.f32 %v1350, 1.1283791
      %v1352 = vmul.f32 %v1051, %v1351
      %v1353 = vmul.f32 %v1341, 3.8918573e-05
      %v1354 = vadd.f32 %v1353, 0.001143296
      %v1355 = vmul.f32 %v1341, %v1354
      %v1356 = vadd.f32 %v1355, 0.014752088
      %v1357 = vmul.f32 %v1341, %v1356
      %v1358 = vadd.f32 %v1357, 0.112945676
      %v1359 = vmul.f32 %v1341, %v1358
      %v1360 = vadd.f32 %v1359, 0.4994258
      %v1361 = vmul.f32 %v1341, %v1360
      %v1362 = vadd.f32 %v1361, 1.0
      %v1363 = vrcp.pop %v1362
      %v1364 = vmul.f32 %v1362, %v1363
      %v1365 = vsub.f32 1.0, %v1364
      %v1366 = vmul.f32 %v1363, %v1365
      %v1367 = vadd.f32 %v1363, %v1366
      %vm1368 = vweird.f32 %v1362
      %vm1369 = vweird.f32 %v1363
      %vm1370 = vmor %vm1368, %vm1369
      %v1371 = vsel %vm1370, %v1363, %v1367
      %v1372 = vand.u32 2147483647, %v1362
      %vm1373 = vcmp.eq.f32.partialorder %v1372, 8.507059e+37
      %v1374 = vand.u32 %v1362, 2147483648
      %v1375 = vor.u32 1.1754944e-38, %v1374
      %v1376 = vsel %vm1373, %v1375, %v1371
      %v1377 = vmul.f32 %v1352, %v1376
      %v1378 = vmin.f32 %v1377, 1.0
      %v1379 = vmax.f32 %v1378, -1.0
      %v1380 = vmul.f32 %v1052, %v1052
      %v1381 = vmin.f32 16.0, %v1380
      %v1382 = vmul.f32 %v1381, 2.1237322e-06
      %v1383 = vadd.f32 %v1382, 0.00028619796
      %v1384 = vmul.f32 %v1381, %v1383
      %v1385 = vadd.f32 %v1384, 0.0036580483
      %v1386 = vmul.f32 %v1381, %v1385
      %v1387 = vadd.f32 %v1386, 0.05243302
      %v1388 = vmul.f32 %v1381, %v1387
      %v1389 = vadd.f32 %v1388, 0.18741608
      %v1390 = vmul.f32 %v1381, %v1389
      %v1391 = vadd.f32 %v1390, 1.1283791
      %v1392 = vmul.f32 %v1052, %v1391
      %v1393 = vmul.f32 %v1381, 3.8918573e-05
      %v1394 = vadd.f32 %v1393, 0.001143296
      %v1395 = vmul.f32 %v1381, %v1394
      %v1396 = vadd.f32 %v1395, 0.014752088
      %v1397 = vmul.f32 %v1381, %v1396
      %v1398 = vadd.f32 %v1397, 0.112945676
      %v1399 = vmul.f32 %v1381, %v1398
      %v1400 = vadd.f32 %v1399, 0.4994258
      %v1401 = vmul.f32 %v1381, %v1400
      %v1402 = vadd.f32 %v1401, 1.0
      %v1403 = vrcp.pop %v1402
      %v1404 = vmul.f32 %v1402, %v1403
      %v1405 = vsub.f32 1.0, %v1404
      %v1406 = vmul.f32 %v1403, %v1405
      %v1407 = vadd.f32 %v1403, %v1406
      %vm1408 = vweird.f32 %v1402
      %vm1409 = vweird.f32 %v1403
      %vm1410 = vmor %vm1408, %vm1409
      %v1411 = vsel %vm1410, %v1403, %v1407
      %v1412 = vand.u32 2147483647, %v1402
      %vm1413 = vcmp.eq.f32.partialorder %v1412, 8.507059e+37
      %v1414 = vand.u32 %v1402, 2147483648
      %v1415 = vor.u32 1.1754944e-38, %v1414
      %v1416 = vsel %vm1413, %v1415, %v1411
      %v1417 = vmul.f32 %v1392, %v1416
      %v1418 = vmin.f32 %v1417, 1.0
      %v1419 = vmax.f32 %v1418, -1.0
      %v1420 = vmul.f32 %v1053, %v1053
      %v1421 = vmin.f32 16.0, %v1420
      %v1422 = vmul.f32 %v1421, 2.1237322e-06
      %v1423 = vadd.f32 %v1422, 0.00028619796
      %v1424 = vmul.f32 %v1421, %v1423
      %v1425 = vadd.f32 %v1424, 0.0036580483
      %v1426 = vmul.f32 %v1421, %v1425
      %v1427 = vadd.f32 %v1426, 0.05243302
      %v1428 = vmul.f32 %v1421, %v1427
      %v1429 = vadd.f32 %v1428, 0.18741608
      %v1430 = vmul.f32 %v1421, %v1429
      %v1431 = vadd.f32 %v1430, 1.1283791
      %v1432 = vmul.f32 %v1053, %v1431
      %v1433 = vmul.f32 %v1421, 3.8918573e-05
      %v1434 = vadd.f32 %v1433, 0.001143296
      %v1435 = vmul.f32 %v1421, %v1434
      %v1436 = vadd.f32 %v1435, 0.014752088
      %v1437 = vmul.f32 %v1421, %v1436
      %v1438 = vadd.f32 %v1437, 0.112945676
      %v1439 = vmul.f32 %v1421, %v1438
      %v1440 = vadd.f32 %v1439, 0.4994258
      %v1441 = vmul.f32 %v1421, %v1440
      %v1442 = vadd.f32 %v1441, 1.0
      %v1443 = vrcp.pop %v1442
      %v1444 = vmul.f32 %v1442, %v1443
      %v1445 = vsub.f32 1.0, %v1444
      %v1446 = vmul.f32 %v1443, %v1445
      %v1447 = vadd.f32 %v1443, %v1446
      %vm1448 = vweird.f32 %v1442
      %vm1449 = vweird.f32 %v1443
      %vm1450 = vmor %vm1448, %vm1449
      %v1451 = vsel %vm1450, %v1443, %v1447
      %v1452 = vand.u32 2147483647, %v1442
      %vm1453 = vcmp.eq.f32.partialorder %v1452, 8.507059e+37
      %v1454 = vand.u32 %v1442, 2147483648
      %v1455 = vor.u32 1.1754944e-38, %v1454
      %v1456 = vsel %vm1453, %v1455, %v1451
      %v1457 = vmul.f32 %v1432, %v1456
      %v1458 = vmin.f32 %v1457, 1.0
      %v1459 = vmax.f32 %v1458, -1.0
      %v1460 = vmul.f32 %v1054, %v1054
      %v1461 = vmin.f32 16.0, %v1460
      %v1462 = vmul.f32 %v1461, 2.1237322e-06
      %v1463 = vadd.f32 %v1462, 0.00028619796
      %v1464 = vmul.f32 %v1461, %v1463
      %v1465 = vadd.f32 %v1464, 0.0036580483
      %v1466 = vmul.f32 %v1461, %v1465
      %v1467 = vadd.f32 %v1466, 0.05243302
      %v1468 = vmul.f32 %v1461, %v1467
      %v1469 = vadd.f32 %v1468, 0.18741608
      %v1470 = vmul.f32 %v1461, %v1469
      %v1471 = vadd.f32 %v1470, 1.1283791
      %v1472 = vmul.f32 %v1054, %v1471
      %v1473 = vmul.f32 %v1461, 3.8918573e-05
      %v1474 = vadd.f32 %v1473, 0.001143296
      %v1475 = vmul.f32 %v1461, %v1474
      %v1476 = vadd.f32 %v1475, 0.014752088
      %v1477 = vmul.f32 %v1461, %v1476
      %v1478 = vadd.f32 %v1477, 0.112945676
      %v1479 = vmul.f32 %v1461, %v1478
      %v1480 = vadd.f32 %v1479, 0.4994258
      %v1481 = vmul.f32 %v1461, %v1480
      %v1482 = vadd.f32 %v1481, 1.0
      %v1483 = vrcp.pop %v1482
      %v1484 = vmul.f32 %v1482, %v1483
      %v1485 = vsub.f32 1.0, %v1484
      %v1486 = vmul.f32 %v1483, %v1485
      %v1487 = vadd.f32 %v1483, %v1486
      %vm1488 = vweird.f32 %v1482
      %vm1489 = vweird.f32 %v1483
      %vm1490 = vmor %vm1488, %vm1489
      %v1491 = vsel %vm1490, %v1483, %v1487
      %v1492 = vand.u32 2147483647, %v1482
      %vm1493 = vcmp.eq.f32.partialorder %v1492, 8.507059e+37
      %v1494 = vand.u32 %v1482, 2147483648
      %v1495 = vor.u32 1.1754944e-38, %v1494
      %v1496 = vsel %vm1493, %v1495, %v1491
      %v1497 = vmul.f32 %v1472, %v1496
      %v1498 = vmin.f32 %v1497, 1.0
      %v1499 = vmax.f32 %v1498, -1.0
      %v1500 = vmul.f32 %v1055, %v1055
      %v1501 = vmin.f32 16.0, %v1500
      %v1502 = vmul.f32 %v1501, 2.1237322e-06
      %v1503 = vadd.f32 %v1502, 0.00028619796
      %v1504 = vmul.f32 %v1501, %v1503
      %v1505 = vadd.f32 %v1504, 0.0036580483
      %v1506 = vmul.f32 %v1501, %v1505
      %v1507 = vadd.f32 %v1506, 0.05243302
      %v1508 = vmul.f32 %v1501, %v1507
      %v1509 = vadd.f32 %v1508, 0.18741608
      %v1510 = vmul.f32 %v1501, %v1509
      %v1511 = vadd.f32 %v1510, 1.1283791
      %v1512 = vmul.f32 %v1055, %v1511
      %v1513 = vmul.f32 %v1501, 3.8918573e-05
      %v1514 = vadd.f32 %v1513, 0.001143296
      %v1515 = vmul.f32 %v1501, %v1514
      %v1516 = vadd.f32 %v1515, 0.014752088
      %v1517 = vmul.f32 %v1501, %v1516
      %v1518 = vadd.f32 %v1517, 0.112945676
      %v1519 = vmul.f32 %v1501, %v1518
      %v1520 = vadd.f32 %v1519, 0.4994258
      %v1521 = vmul.f32 %v1501, %v1520
      %v1522 = vadd.f32 %v1521, 1.0
      %v1523 = vrcp.pop %v1522
      %v1524 = vmul.f32 %v1522, %v1523
      %v1525 = vsub.f32 1.0, %v1524
      %v1526 = vmul.f32 %v1523, %v1525
      %v1527 = vadd.f32 %v1523, %v1526
      %vm1528 = vweird.f32 %v1522
      %vm1529 = vweird.f32 %v1523
      %vm1530 = vmor %vm1528, %vm1529
      %v1531 = vsel %vm1530, %v1523, %v1527
      %v1532 = vand.u32 2147483647, %v1522
      %vm1533 = vcmp.eq.f32.partialorder %v1532, 8.507059e+37
      %v1534 = vand.u32 %v1522, 2147483648
      %v1535 = vor.u32 1.1754944e-38, %v1534
      %v1536 = vsel %vm1533, %v1535, %v1531
      %v1537 = vmul.f32 %v1512, %v1536
      %v1538 = vmin.f32 %v1537, 1.0
      %v1539 = vmax.f32 %v1538, -1.0
      %v1540 = vmul.f32 %v1056, %v1056
      %v1541 = vmin.f32 16.0, %v1540
      %v1542 = vmul.f32 %v1541, 2.1237322e-06
      %v1543 = vadd.f32 %v1542, 0.00028619796
      %v1544 = vmul.f32 %v1541, %v1543
      %v1545 = vadd.f32 %v1544, 0.0036580483
      %v1546 = vmul.f32 %v1541, %v1545
      %v1547 = vadd.f32 %v1546, 0.05243302
      %v1548 = vmul.f32 %v1541, %v1547
      %v1549 = vadd.f32 %v1548, 0.18741608
      %v1550 = vmul.f32 %v1541, %v1549
      %v1551 = vadd.f32 %v1550, 1.1283791
      %v1552 = vmul.f32 %v1056, %v1551
      %v1553 = vmul.f32 %v1541, 3.8918573e-05
      %v1554 = vadd.f32 %v1553, 0.001143296
      %v1555 = vmul.f32 %v1541, %v1554
      %v1556 = vadd.f32 %v1555, 0.014752088
      %v1557 = vmul.f32 %v1541, %v1556
      %v1558 = vadd.f32 %v1557, 0.112945676
      %v1559 = vmul.f32 %v1541, %v1558
      %v1560 = vadd.f32 %v1559, 0.4994258
      %v1561 = vmul.f32 %v1541, %v1560
      %v1562 = vadd.f32 %v1561, 1.0
      %v1563 = vrcp.pop %v1562
      %v1564 = vmul.f32 %v1562, %v1563
      %v1565 = vsub.f32 1.0, %v1564
      %v1566 = vmul.f32 %v1563, %v1565
      %v1567 = vadd.f32 %v1563, %v1566
      %vm1568 = vweird.f32 %v1562
      %vm1569 = vweird.f32 %v1563
      %vm1570 = vmor %vm1568, %vm1569
      %v1571 = vsel %vm1570, %v1563, %v1567
      %v1572 = vand.u32 2147483647, %v1562
      %vm1573 = vcmp.eq.f32.partialorder %v1572, 8.507059e+37
      %v1574 = vand.u32 %v1562, 2147483648
      %v1575 = vor.u32 1.1754944e-38, %v1574
      %v1576 = vsel %vm1573, %v1575, %v1571
      %v1577 = vmul.f32 %v1552, %v1576
      %v1578 = vmin.f32 %v1577, 1.0
      %v1579 = vmax.f32 %v1578, -1.0
      %v1580 = vmul.f32 %v1057, %v1057
      %v1581 = vmin.f32 16.0, %v1580
      %v1582 = vmul.f32 %v1581, 2.1237322e-06
      %v1583 = vadd.f32 %v1582, 0.00028619796
      %v1584 = vmul.f32 %v1581, %v1583
      %v1585 = vadd.f32 %v1584, 0.0036580483
      %v1586 = vmul.f32 %v1581, %v1585
      %v1587 = vadd.f32 %v1586, 0.05243302
      %v1588 = vmul.f32 %v1581, %v1587
      %v1589 = vadd.f32 %v1588, 0.18741608
      %v1590 = vmul.f32 %v1581, %v1589
      %v1591 = vadd.f32 %v1590, 1.1283791
      %v1592 = vmul.f32 %v1057, %v1591
      %v1593 = vmul.f32 %v1581, 3.8918573e-05
      %v1594 = vadd.f32 %v1593, 0.001143296
      %v1595 = vmul.f32 %v1581, %v1594
      %v1596 = vadd.f32 %v1595, 0.014752088
      %v1597 = vmul.f32 %v1581, %v1596
      %v1598 = vadd.f32 %v1597, 0.112945676
      %v1599 = vmul.f32 %v1581, %v1598
      %v1600 = vadd.f32 %v1599, 0.4994258
      %v1601 = vmul.f32 %v1581, %v1600
      %v1602 = vadd.f32 %v1601, 1.0
      %v1603 = vrcp.pop %v1602
      %v1604 = vmul.f32 %v1602, %v1603
      %v1605 = vsub.f32 1.0, %v1604
      %v1606 = vmul.f32 %v1603, %v1605
      %v1607 = vadd.f32 %v1603, %v1606
      %vm1608 = vweird.f32 %v1602
      %vm1609 = vweird.f32 %v1603
      %vm1610 = vmor %vm1608, %vm1609
      %v1611 = vsel %vm1610, %v1603, %v1607
      %v1612 = vand.u32 2147483647, %v1602
      %vm1613 = vcmp.eq.f32.partialorder %v1612, 8.507059e+37
      %v1614 = vand.u32 %v1602, 2147483648
      %v1615 = vor.u32 1.1754944e-38, %v1614
      %v1616 = vsel %vm1613, %v1615, %v1611
      %v1617 = vmul.f32 %v1592, %v1616
      %v1618 = vmin.f32 %v1617, 1.0
      %v1619 = vmax.f32 %v1618, -1.0
      %v1620 = vmul.f32 %v1058, %v1058
      %v1621 = vmin.f32 16.0, %v1620
      %v1622 = vmul.f32 %v1621, 2.1237322e-06
      %v1623 = vadd.f32 %v1622, 0.00028619796
      %v1624 = vmul.f32 %v1621, %v1623
      %v1625 = vadd.f32 %v1624, 0.0036580483
      %v1626 = vmul.f32 %v1621, %v1625
      %v1627 = vadd.f32 %v1626, 0.05243302
      %v1628 = vmul.f32 %v1621, %v1627
      %v1629 = vadd.f32 %v1628, 0.18741608
      %v1630 = vmul.f32 %v1621, %v1629
      %v1631 = vadd.f32 %v1630, 1.1283791
      %v1632 = vmul.f32 %v1058, %v1631
      %v1633 = vmul.f32 %v1621, 3.8918573e-05
      %v1634 = vadd.f32 %v1633, 0.001143296
      %v1635 = vmul.f32 %v1621, %v1634
      %v1636 = vadd.f32 %v1635, 0.014752088
      %v1637 = vmul.f32 %v1621, %v1636
      %v1638 = vadd.f32 %v1637, 0.112945676
      %v1639 = vmul.f32 %v1621, %v1638
      %v1640 = vadd.f32 %v1639, 0.4994258
      %v1641 = vmul.f32 %v1621, %v1640
      %v1642 = vadd.f32 %v1641, 1.0
      %v1643 = vrcp.pop %v1642
      %v1644 = vmul.f32 %v1642, %v1643
      %v1645 = vsub.f32 1.0, %v1644
      %v1646 = vmul.f32 %v1643, %v1645
      %v1647 = vadd.f32 %v1643, %v1646
      %vm1648 = vweird.f32 %v1642
      %vm1649 = vweird.f32 %v1643
      %vm1650 = vmor %vm1648, %vm1649
      %v1651 = vsel %vm1650, %v1643, %v1647
      %v1652 = vand.u32 2147483647, %v1642
      %vm1653 = vcmp.eq.f32.partialorder %v1652, 8.507059e+37
      %v1654 = vand.u32 %v1642, 2147483648
      %v1655 = vor.u32 1.1754944e-38, %v1654
      %v1656 = vsel %vm1653, %v1655, %v1651
      %v1657 = vmul.f32 %v1632, %v1656
      %v1658 = vmin.f32 %v1657, 1.0
      %v1659 = vmax.f32 %v1658, -1.0
      %v1660 = vmul.f32 %v1059, %v1059
      %v1661 = vmin.f32 16.0, %v1660
      %v1662 = vmul.f32 %v1661, 2.1237322e-06
      %v1663 = vadd.f32 %v1662, 0.00028619796
      %v1664 = vmul.f32 %v1661, %v1663
      %v1665 = vadd.f32 %v1664, 0.0036580483
      %v1666 = vmul.f32 %v1661, %v1665
      %v1667 = vadd.f32 %v1666, 0.05243302
      %v1668 = vmul.f32 %v1661, %v1667
      %v1669 = vadd.f32 %v1668, 0.18741608
      %v1670 = vmul.f32 %v1661, %v1669
      %v1671 = vadd.f32 %v1670, 1.1283791
      %v1672 = vmul.f32 %v1059, %v1671
      %v1673 = vmul.f32 %v1661, 3.8918573e-05
      %v1674 = vadd.f32 %v1673, 0.001143296
      %v1675 = vmul.f32 %v1661, %v1674
      %v1676 = vadd.f32 %v1675, 0.014752088
      %v1677 = vmul.f32 %v1661, %v1676
      %v1678 = vadd.f32 %v1677, 0.112945676
      %v1679 = vmul.f32 %v1661, %v1678
      %v1680 = vadd.f32 %v1679, 0.4994258
      %v1681 = vmul.f32 %v1661, %v1680
      %v1682 = vadd.f32 %v1681, 1.0
      %v1683 = vrcp.pop %v1682
      %v1684 = vmul.f32 %v1682, %v1683
      %v1685 = vsub.f32 1.0, %v1684
      %v1686 = vmul.f32 %v1683, %v1685
      %v1687 = vadd.f32 %v1683, %v1686
      %vm1688 = vweird.f32 %v1682
      %vm1689 = vweird.f32 %v1683
      %vm1690 = vmor %vm1688, %vm1689
      %v1691 = vsel %vm1690, %v1683, %v1687
      %v1692 = vand.u32 2147483647, %v1682
      %vm1693 = vcmp.eq.f32.partialorder %v1692, 8.507059e+37
      %v1694 = vand.u32 %v1682, 2147483648
      %v1695 = vor.u32 1.1754944e-38, %v1694
      %v1696 = vsel %vm1693, %v1695, %v1691
      %v1697 = vmul.f32 %v1672, %v1696
      %v1698 = vmin.f32 %v1697, 1.0
      %v1699 = vmax.f32 %v1698, -1.0
      %v1700 = vadd.f32 %v1099, 1.0
      %v1701 = vadd.f32 %v1139, 1.0
      %v1702 = vadd.f32 %v1179, 1.0
      %v1703 = vadd.f32 %v1219, 1.0
      %v1704 = vadd.f32 %v1259, 1.0
      %v1705 = vadd.f32 %v1299, 1.0
      %v1706 = vadd.f32 %v1339, 1.0
      %v1707 = vadd.f32 %v1379, 1.0
      %v1708 = vadd.f32 %v1419, 1.0
      %v1709 = vadd.f32 %v1459, 1.0
      %v1710 = vadd.f32 %v1499, 1.0
      %v1711 = vadd.f32 %v1539, 1.0
      %v1712 = vadd.f32 %v1579, 1.0
      %v1713 = vadd.f32 %v1619, 1.0
      %v1714 = vadd.f32 %v1659, 1.0
      %v1715 = vadd.f32 %v1699, 1.0
      %v1716 = vmul.f32 %v1028, %v1700
      %v1717 = vmul.f32 %v1029, %v1701
      %v1718 = vmul.f32 %v1030, %v1702
      %v1719 = vmul.f32 %v1031, %v1703
      %v1720 = vmul.f32 %v1032, %v1704
      %v1721 = vmul.f32 %v1033, %v1705
      %v1722 = vmul.f32 %v1034, %v1706
      %v1723 = vmul.f32 %v1035, %v1707
      %v1724 = vmul.f32 %v1036, %v1708
      %v1725 = vmul.f32 %v1037, %v1709
      %v1726 = vmul.f32 %v1038, %v1710
      %v1727 = vmul.f32 %v1039, %v1711
      %v1728 = vmul.f32 %v1040, %v1712
      %v1729 = vmul.f32 %v1041, %v1713
      %v1730 = vmul.f32 %v1042, %v1714
      %v1731 = vmul.f32 %v1043, %v1715
      %v1732 = vpack.c.bf16 %v1717, %v1716
      %v1733 = vpack.c.bf16 %v1719, %v1718
      %v1734 = vpack.c.bf16 %v1721, %v1720
      %v1735 = vpack.c.bf16 %v1723, %v1722
      %v1736 = vpack.c.bf16 %v1725, %v1724
      %v1737 = vpack.c.bf16 %v1727, %v1726
      %v1738 = vpack.c.bf16 %v1729, %v1728
      %v1739 = vpack.c.bf16 %v1731, %v1730
      %v1740 = vld [vmem:[%s9] sm:$0xf]
      %v1741 = vld [vmem:[%s9 + $0x4] sm:$0xf]
      %v1742 = vld [vmem:[%s9 + $0x8] sm:$0xf]
      %v1743 = vld [vmem:[%s9 + $0xc] sm:$0xf]
      %v1744 = vld [vmem:[%s9 + $0x10] sm:$0xf]
      %v1745 = vld [vmem:[%s9 + $0x14] sm:$0xf]
      %v1746 = vld [vmem:[%s9 + $0x18] sm:$0xf]
      %v1747 = vld [vmem:[%s9 + $0x1c] sm:$0xf]
      %v1748 = vld [vmem:[%s10] sm:$0x1]
      %v1750 = vperm.slane %v1748, 0
      %v1760 = vunpack.c.l.b16 %v1740
      %v1761 = vunpack.c.l.b16 %v1741
      %v1762 = vunpack.c.l.b16 %v1742
      %v1763 = vunpack.c.l.b16 %v1743
      %v1764 = vunpack.c.l.b16 %v1744
      %v1765 = vunpack.c.l.b16 %v1745
      %v1766 = vunpack.c.l.b16 %v1746
      %v1767 = vunpack.c.l.b16 %v1747
      %v1768 = vpack.c.b16 %v1761, %v1760
      %v1769 = vpack.c.b16 %v1763, %v1762
      %v1770 = vpack.c.b16 %v1765, %v1764
      %v1771 = vpack.c.b16 %v1767, %v1766
      %vm1776 = vcmask 523264
      %v1778 = vsel %vm1776, %v1732, 0
      %v1781 = vsel %vm1776, %v1733, 0
      %v1784 = vsel %vm1776, %v1734, 0
      %v1787 = vsel %vm1776, %v1735, 0
      %v1790 = vsel %vm1776, %v1736, 0
      %v1793 = vsel %vm1776, %v1737, 0
      %v1796 = vsel %vm1776, %v1738, 0
      %v1799 = vsel %vm1776, %v1739, 0
      %1801 = vmatpush.bf16.msra.mxu0 0
      %1802 = vmatpush.bf16.msra.mxu0 0
      %1803 = vmatpush.bf16.msra.mxu0 0
      %1804 = vmatpush.bf16.msra.mxu0 0
      %1805 = vmatpush.bf16.msra.mxu0 %v1771
      %1806 = vmatpush.bf16.msra.mxu0 %v1770
      %1807 = vmatpush.bf16.msra.mxu0 %v1769
      %1808 = vmatpush.bf16.msra.mxu0 %v1768
      %1809 = vmatmul.bf16.gmra.mxu0 %v1778
      %v1810 = vpop.f32.mrf.mxu0
      %v1811 = vadd.f32 %v1750, %v1810
      %v1812 = vpop.f32.mrf.mxu0
      %v1813 = vadd.f32 %v1750, %v1812
      %1814 = vmatmul.bf16.gmra.mxu0 %v1781
      %v1815 = vpop.f32.mrf.mxu0
      %v1816 = vadd.f32 %v1750, %v1815
      %v1817 = vpop.f32.mrf.mxu0
      %v1818 = vadd.f32 %v1750, %v1817
      %1819 = vmatmul.bf16.gmra.mxu0 %v1784
      %v1820 = vpop.f32.mrf.mxu0
      %v1821 = vadd.f32 %v1750, %v1820
      %v1822 = vpop.f32.mrf.mxu0
      %v1823 = vadd.f32 %v1750, %v1822
      %1824 = vmatmul.bf16.gmra.mxu0 %v1787
      %v1825 = vpop.f32.mrf.mxu0
      %v1826 = vadd.f32 %v1750, %v1825
      %v1827 = vpop.f32.mrf.mxu0
      %v1828 = vadd.f32 %v1750, %v1827
      %1829 = vmatmul.bf16.gmra.mxu0 %v1790
      %v1830 = vpop.f32.mrf.mxu0
      %v1831 = vadd.f32 %v1750, %v1830
      %v1832 = vpop.f32.mrf.mxu0
      %v1833 = vadd.f32 %v1750, %v1832
      %1834 = vmatmul.bf16.gmra.mxu0 %v1793
      %v1835 = vpop.f32.mrf.mxu0
      %v1836 = vadd.f32 %v1750, %v1835
      %v1837 = vpop.f32.mrf.mxu0
      %v1838 = vadd.f32 %v1750, %v1837
      %1839 = vmatmul.bf16.gmra.mxu0 %v1796
      %v1840 = vpop.f32.mrf.mxu0
      %v1841 = vadd.f32 %v1750, %v1840
      %v1842 = vpop.f32.mrf.mxu0
      %v1843 = vadd.f32 %v1750, %v1842
      %1844 = vmatmul.bf16.gmra.mxu0 %v1799
      %v1845 = vpop.f32.mrf.mxu0
      %v1846 = vadd.f32 %v1750, %v1845
      %v1847 = vpop.f32.mrf.mxu0
      %v1848 = vadd.f32 %v1750, %v1847
      %1849 = vdwg.mxu0
      %v1850 = vld [vmem:[%s4] sm:$0x1]
      %v1852 = vperm.slane %v1850, 0
      %v1854 = vmul.f32 %v1852, %v1811
      %v1855 = vmul.f32 %v1852, %v1813
      %v1856 = vmul.f32 %v1852, %v1816
      %v1857 = vmul.f32 %v1852, %v1818
      %v1858 = vmul.f32 %v1852, %v1821
      %v1859 = vmul.f32 %v1852, %v1823
      %v1860 = vmul.f32 %v1852, %v1826
      %v1861 = vmul.f32 %v1852, %v1828
      %v1862 = vmul.f32 %v1852, %v1831
      %v1863 = vmul.f32 %v1852, %v1833
      %v1864 = vmul.f32 %v1852, %v1836
      %v1865 = vmul.f32 %v1852, %v1838
      %v1866 = vmul.f32 %v1852, %v1841
      %v1867 = vmul.f32 %v1852, %v1843
      %v1868 = vmul.f32 %v1852, %v1846
      %v1869 = vmul.f32 %v1852, %v1848
      %v1870 = vadd.f32 %v1854, %v519
      %v1871 = vadd.f32 %v1855, %v520
      %v1872 = vadd.f32 %v1856, %v521
      %v1873 = vadd.f32 %v1857, %v522
      %v1874 = vadd.f32 %v1858, %v523
      %v1875 = vadd.f32 %v1859, %v524
      %v1876 = vadd.f32 %v1860, %v525
      %v1877 = vadd.f32 %v1861, %v526
      %v1878 = vadd.f32 %v1862, %v527
      %v1879 = vadd.f32 %v1863, %v528
      %v1880 = vadd.f32 %v1864, %v529
      %v1881 = vadd.f32 %v1865, %v530
      %v1882 = vadd.f32 %v1866, %v531
      %v1883 = vadd.f32 %v1867, %v532
      %v1884 = vadd.f32 %v1868, %v533
      %v1885 = vadd.f32 %v1869, %v534
      %1886 = vst.msk [vmem:[%s432] sm:$0xff] %vm535, %v1870
      %1887 = vst.msk [vmem:[%s432 + $0x8] sm:$0xff] %vm535, %v1871
      %1888 = vst.msk [vmem:[%s432 + $0x10] sm:$0xff] %vm535, %v1872
      %1889 = vst.msk [vmem:[%s432 + $0x18] sm:$0xff] %vm535, %v1873
      %1890 = vst.msk [vmem:[%s432 + $0x20] sm:$0xff] %vm535, %v1874
      %1891 = vst.msk [vmem:[%s432 + $0x28] sm:$0xff] %vm535, %v1875
      %1892 = vst.msk [vmem:[%s432 + $0x30] sm:$0xff] %vm535, %v1876
      %1893 = vst.msk [vmem:[%s432 + $0x38] sm:$0xff] %vm535, %v1877
      %1894 = vst.msk [vmem:[%s432 + $0x40] sm:$0xff] %vm535, %v1878
      %1895 = vst.msk [vmem:[%s432 + $0x48] sm:$0xff] %vm535, %v1879
      %1896 = vst.msk [vmem:[%s432 + $0x50] sm:$0xff] %vm535, %v1880
      %1897 = vst.msk [vmem:[%s432 + $0x58] sm:$0xff] %vm535, %v1881
      %1898 = vst.msk [vmem:[%s432 + $0x60] sm:$0xff] %vm535, %v1882
      %1899 = vst.msk [vmem:[%s432 + $0x68] sm:$0xff] %vm535, %v1883
      %1900 = vst.msk [vmem:[%s432 + $0x70] sm:$0xff] %vm535, %v1884
      %1901 = vst.msk [vmem:[%s432 + $0x78] sm:$0xff] %vm535, %v1885
      %s1902 = smul.u32 16, %s22
      %p1903 = scmp.lt.s32.totalorder %s1902, 63
      %s1904 = scalar_select %p1903, %s1902, 63
      %s1905 = smul.addr %s1904, 8
      %s1906 = scalar_lea.vmem %s11, %s1905
      // Predicated region
      $region65: #{afno_block_2d.5} parent=63 // pred_check
        %p1907 = pneg %p286
      $region66: #{afno_block_2d.5} parent=63 // pred_check_branch
        %1909 = sbr.rel (%p1907) target = $region68
      $region67: #{afno_block_2d.5} parent=63 // pred_region
        %s1910 = smul.u32 16, %s22
      $region68: #{afno_block_2d.5} parent=63 // pred_fallthru
        _
    $region64: #{afno_block_2d.5} parent=5 // pred_fallthru
      _
    %p1911 = scmp.le.s32.totalorder 2, %s17
    // Predicated region
    $region69: #{afno_block_2d.5} parent=5 // pred_check
      %p1912 = pneg %p1911
    $region70: #{afno_block_2d.5} parent=5 // pred_check_branch
      %1914 = sbr.rel (%p1912) target = $region72
    $region71: #{afno_block_2d.5} parent=5 // pred_region
      %s1915 = ssub.s32 %s17, 2
      // Predicated region
      $region73: #{afno_block_2d.5} parent=71 // pred_check
        %p1916 = pneg %p292
      $region74: #{afno_block_2d.5} parent=71 // pred_check_branch
        %1918 = sbr.rel (%p1916) target = $region76
      $region75: #{afno_block_2d.5} parent=71 // pred_region
        %s1919 = smul.u32 16, %s23
        %p1920 = scmp.lt.s32.totalorder %s1919, 63
        %s1921 = scalar_select %p1920, %s1919, 63
        %s1922 = smul.addr %s1921, 8
        %s1923 = scalar_lea.vmem %s11, %s1922
      $region76: #{afno_block_2d.5} parent=71 // pred_fallthru
        _
    $region72: #{afno_block_2d.5} parent=5 // pred_fallthru
      _
  $region6: #{afno_block_2d.5} parent=0 // loop_footer
    %s21 = sadd.s32 1, %s17
  $region7: #{afno_block_2d.5} parent=0 // loop_footer_branch
    %16 = sbr.rel target = $region3
  $region8: #{afno_block_2d.5} parent=0 // loop_exit
    _

</llo_original>
